<compile_context>
chip_gen: v5e
topology: v5e:2x2
jax: 0.10.0
libtpu: 0.0.40
codegen_flags: <defaults>
</compile_context>

<pallas_src>
import jax
import jax.numpy as jnp
from jax.experimental import pallas as pl
from jax.experimental.pallas import tpu as pltpu  # noqa: F401  (TPU backend)

# ----------------------------- small config ---------------------------------
IMAGE_SIZE = 16
PATCH = 4
IN_CH = 3
EMBED = 32
QKV = 8                     # per-head dim
MLP_HID = 64
N_LAYERS = 2
N_HEADS = 4
N_CLASSES = 10
BATCH = 2

N_PATCHES = (IMAGE_SIZE // PATCH) ** 2          # 16
SEQ = N_PATCHES + 1                             # 17 (cls + patches)
SEQ_PAD = 32                                    # padded to bf16/f32 tile-friendly
PATCH_DIM = IN_CH * PATCH * PATCH               # 48
HD = N_HEADS * QKV                              # 32
QKV_TOT = 3 * HD                                # 96
EPS = 1e-5
SCALE = QKV ** (-0.5)
_INV_SQRT2 = 0.7071067811865476
LANES = 128

# -------- packed bf16 weight blob layout (rows; all offsets 16-aligned) -----
PW_ROW = 0                         # patch_w  (48, 32)
WB_LAYER0 = 48
WB_LAYER_STRIDE = 160
QKV_OFF = 0                        # (32, 96)
WO_OFF = 32                        # (32, 32)
W1_OFF = 64                        # (32, 64)
W2_OFF = 96                        # (64, 32)
FC_ROW = WB_LAYER0 + N_LAYERS * WB_LAYER_STRIDE      # 368, (32, 10)
WB_ROWS = FC_ROW + EMBED                             # 400

# -------- packed f32 bias/LN blob layout (rows) ------------------------------
ROW_PATCH_B = 0
ROW_CLS = 1
ROW_LN_G = 2
ROW_LN_B = 3
ROW_FC_B = 4
ROW_POS = 8                       # rows 8 .. 8+SEQ_PAD-1 (zero-padded past SEQ)
FB_LAYER0 = ROW_POS + SEQ_PAD     # 40
FB_LAYER_STRIDE = 8               # [ln1_g, ln1_b, b_qkv, bo, ln2_g, ln2_b, b1, b2]
FB_ROWS = FB_LAYER0 + N_LAYERS * FB_LAYER_STRIDE     # 56


# ------------------------------ kernel helpers -------------------------------
def _layernorm(x, gamma, beta):
    # PyTorch nn.LayerNorm semantics: biased variance, eps inside rsqrt.
    mu = jnp.mean(x, axis=-1, keepdims=True)
    var = jnp.mean((x - mu) ** 2, axis=-1, keepdims=True)
    return (x - mu) * jax.lax.rsqrt(var + EPS) * gamma + beta


def _erf(x):
    # Abramowitz & Stegun 7.1.26 (|err| < 1.5e-7); f32 VPU/EUP ops only.
    a1, a2, a3, a4, a5 = 0.254829592, -0.284496736, 1.421413741, -1.453152027, 1.061405429
    p = 0.3275911
    ax = jnp.abs(x)
    t = 1.0 / (1.0 + p * ax)
    poly = ((((a5 * t + a4) * t + a3) * t + a2) * t + a1) * t
    y = 1.0 - poly * jnp.exp(-(ax * ax))
    return jnp.where(x < 0.0, -y, y)


def _gelu_exact(x):
    # nn.GELU() default = exact erf formulation.
    return 0.5 * x * (1.0 + _erf(x * _INV_SQRT2))


def _mm(x, w):
    """(..., K) @ (K, N) as a plain 2-D MXU dot (leading dims merged), f32 acc."""
    lead = x.shape[:-1]
    y = jnp.dot(x.reshape(-1, x.shape[-1]), w, preferred_element_type=jnp.float32)
    return y.reshape(*lead, w.shape[-1])


def _encoder_layer(x, wb_ref, fb, wbase, fbase, key_bias):
    """One transformer block on the (B, SEQ_PAD, EMBED) f32 slab."""
    # ---- LN1 + fused-QKV multi-head self-attention ----
    xn = _layernorm(x, fb[fbase + 0, 0:EMBED], fb[fbase + 1, 0:EMBED])
    xn_bf = xn.astype(jnp.bfloat16)

    wqkv = wb_ref[wbase + QKV_OFF: wbase + QKV_OFF + EMBED, 0:QKV_TOT]   # (32,96) bf16
    qkv = _mm(xn_bf, wqkv) + fb[fbase + 2, 0:QKV_TOT]                   # (B,S,96) f32

    o_heads = []
    for h in range(N_HEADS):                                             # static, H=4
        q = qkv[:, :, h * QKV:(h + 1) * QKV].astype(jnp.bfloat16)        # (B,S,8)
        k = qkv[:, :, HD + h * QKV: HD + (h + 1) * QKV].astype(jnp.bfloat16)
        v = qkv[:, :, 2 * HD + h * QKV: 2 * HD + (h + 1) * QKV].astype(jnp.bfloat16)
        s = jnp.einsum("bqe,bke->bqk", q, k,
                       preferred_element_type=jnp.float32) * SCALE + key_bias
        s = s - jnp.max(s, axis=-1, keepdims=True)
        e = jnp.exp(s)
        p = e * pl.reciprocal(jnp.sum(e, axis=-1, keepdims=True), approx=True)
        o_heads.append(jnp.einsum("bqk,bke->bqe", p.astype(jnp.bfloat16), v,
                                  preferred_element_type=jnp.float32))   # (B,S,8)
    o = jnp.concatenate(o_heads, axis=-1)                                # (B,S,32)

    wo = wb_ref[wbase + WO_OFF: wbase + WO_OFF + HD, 0:EMBED]            # (32,32) bf16
    attn = _mm(o.astype(jnp.bfloat16), wo) + fb[fbase + 3, 0:EMBED]
    x = x + attn                                                          # residual 1

    # ---- LN2 + MLP ----
    xn2 = _layernorm(x, fb[fbase + 4, 0:EMBED], fb[fbase + 5, 0:EMBED])
    w1 = wb_ref[wbase + W1_OFF: wbase + W1_OFF + EMBED, 0:MLP_HID]       # (32,64) bf16
    h1 = _mm(xn2.astype(jnp.bfloat16), w1) + fb[fbase + 6, 0:MLP_HID]
    h1 = _gelu_exact(h1)
    w2 = wb_ref[wbase + W2_OFF: wbase + W2_OFF + MLP_HID, 0:EMBED]       # (64,32) bf16
    h2 = _mm(h1.astype(jnp.bfloat16), w2) + fb[fbase + 7, 0:EMBED]
    return x + h2                                                         # residual 2


# ------------------------------ the fused kernel ------------------------------
def _vit_kernel(xp_ref, wb_ref, fb_ref, out_ref):
    fb = fb_ref[...]                                   # (56,128) f32 bias/LN blob

    # Key-padding bias: padded key columns (>= SEQ) get -1e30 before softmax.
    kidx = jax.lax.broadcasted_iota(jnp.int32, (1, SEQ_PAD), 1)
    key_bias = jnp.where(kidx >= SEQ, jnp.float32(-1e30), jnp.float32(0.0))

    # ---- patch embedding on the zero-padded (B, SEQ_PAD, PATCH_DIM) slab ----
    patch_w = wb_ref[PW_ROW:PW_ROW + PATCH_DIM, 0:EMBED]                 # (48,32) bf16
    emb = _mm(xp_ref[...].astype(jnp.bfloat16), patch_w) + fb[ROW_PATCH_B, 0:EMBED]

    # ---- cls token into row 0, add positional embeddings (zero-padded) ----
    ridx = jax.lax.broadcasted_iota(jnp.int32, (1, SEQ_PAD, 1), 1)
    x = jnp.where(ridx == 0, fb[ROW_CLS, 0:EMBED], emb)
    x = x + fb[ROW_POS:ROW_POS + SEQ_PAD, 0:EMBED]                       # (B,32,32)

    # ---- encoder layers (statically unrolled, static-slice weight lookup) ----
    for l in range(N_LAYERS):
        x = _encoder_layer(x, wb_ref, fb,
                           WB_LAYER0 + l * WB_LAYER_STRIDE,
                           FB_LAYER0 + l * FB_LAYER_STRIDE,
                           key_bias)

    # ---- final LN on cls token + classifier head ----
    cls_x = x[:, 0, :]                                                   # (B,32)
    xn = _layernorm(cls_x, fb[ROW_LN_G, 0:EMBED], fb[ROW_LN_B, 0:EMBED])
    fc_w = wb_ref[FC_ROW:FC_ROW + EMBED, 0:N_CLASSES]                    # (32,10) bf16
    out_ref[...] = (jnp.dot(xn.astype(jnp.bfloat16), fc_w,
                            preferred_element_type=jnp.float32)
                    + fb[ROW_FC_B, 0:N_CLASSES])


# ------------------------------ parameter init --------------------------------
def init_params(key):
    keys = iter(jax.random.split(key, 40))

    def nrm(shape, scale=0.02):
        return scale * jax.random.normal(next(keys), shape, jnp.float32)

    wb = jnp.zeros((WB_ROWS, LANES), jnp.float32)
    fb = jnp.zeros((FB_ROWS, LANES), jnp.float32)

    # Patch embedder (Conv2d k=stride=P == flattened (K, D) matmul) + bias.
    wb = wb.at[PW_ROW:PW_ROW + PATCH_DIM, 0:EMBED].set(nrm((PATCH_DIM, EMBED)))
    fb = fb.at[ROW_PATCH_B, 0:EMBED].set(nrm((EMBED,)))
    # cls token / positional embeddings (torch.randn init).
    fb = fb.at[ROW_CLS, 0:EMBED].set(jax.random.normal(next(keys), (EMBED,), jnp.float32))
    fb = fb.at[ROW_POS:ROW_POS + SEQ, 0:EMBED].set(
        jax.random.normal(next(keys), (SEQ, EMBED), jnp.float32))

    for l in range(N_LAYERS):
        wbase = WB_LAYER0 + l * WB_LAYER_STRIDE
        fbase = FB_LAYER0 + l * FB_LAYER_STRIDE
        fb = fb.at[fbase + 0, 0:EMBED].set(jnp.ones((EMBED,), jnp.float32))   # ln1_g
        # ln1_b already zero
        wb = wb.at[wbase + QKV_OFF: wbase + QKV_OFF + EMBED, 0:QKV_TOT].set(
            nrm((EMBED, QKV_TOT)))                                            # Wq|Wk|Wv
        fb = fb.at[fbase + 2, 0:QKV_TOT].set(nrm((QKV_TOT,)))                 # b_qkv
        wb = wb.at[wbase + WO_OFF: wbase + WO_OFF + HD, 0:EMBED].set(
            nrm((HD, EMBED)))                                                 # Wo
        fb = fb.at[fbase + 3, 0:EMBED].set(nrm((EMBED,)))                     # bo
        fb = fb.at[fbase + 4, 0:EMBED].set(jnp.ones((EMBED,), jnp.float32))   # ln2_g
        wb = wb.at[wbase + W1_OFF: wbase + W1_OFF + EMBED, 0:MLP_HID].set(
            nrm((EMBED, MLP_HID)))                                            # W1
        fb = fb.at[fbase + 6, 0:MLP_HID].set(nrm((MLP_HID,)))                 # b1
        wb = wb.at[wbase + W2_OFF: wbase + W2_OFF + MLP_HID, 0:EMBED].set(
            nrm((MLP_HID, EMBED)))                                            # W2
        fb = fb.at[fbase + 7, 0:EMBED].set(nrm((EMBED,)))                     # b2

    # Final LN + classifier.
    fb = fb.at[ROW_LN_G, 0:EMBED].set(jnp.ones((EMBED,), jnp.float32))
    wb = wb.at[FC_ROW:FC_ROW + EMBED, 0:N_CLASSES].set(nrm((EMBED, N_CLASSES)))
    fb = fb.at[ROW_FC_B, 0:N_CLASSES].set(nrm((N_CLASSES,)))

    return {"wb": wb.astype(jnp.bfloat16), "fb": fb}


# ------------------------------ forward pass -----------------------------------
@jax.jit
def vit_forward(x_nchw, params):
    B = x_nchw.shape[0]
    # --- patch extraction (layout glue; matches Conv2d(k=P, stride=P)) ---
    gp = IMAGE_SIZE // PATCH
    xp = x_nchw.reshape(B, IN_CH, gp, PATCH, gp, PATCH)
    xp = xp.transpose(0, 2, 4, 1, 3, 5).reshape(B, N_PATCHES, PATCH_DIM)
    # Zero-pad: row 0 is the cls slot, rows SEQ..SEQ_PAD-1 are attention-masked.
    xp = jnp.pad(xp, ((0, 0), (1, SEQ_PAD - 1 - N_PATCHES), (0, 0)))

    # Whole ViT forward in one Pallas kernel; 3 input DMAs, everything in VMEM.
    return pl.pallas_call(
        _vit_kernel,
        out_shape=jax.ShapeDtypeStruct((B, N_CLASSES), jnp.float32),
    )(xp, params["wb"], params["fb"])


# ----------------------------------- main --------------------------------------
if __name__ == "__main__":
    key = jax.random.PRNGKey(0)
    k_x, k_p = jax.random.split(key)
    x = jax.random.normal(k_x, (BATCH, IN_CH, IMAGE_SIZE, IMAGE_SIZE), jnp.float32)
    params = init_params(k_p)

    logits = vit_forward(x, params)
    jax.block_until_ready(logits)
    assert logits.shape == (BATCH, N_CLASSES)
    assert bool(jnp.all(jnp.isfinite(logits)))
    print("KERNEL_OK")
</pallas_src>

<mosaic_0001>
module attributes {stable_mosaic.version = 11 : i64} {
  func.func @_vit_kernel(%arg0: memref<2x32x48xf32, #tpu.memory_space<vmem>>, %arg1: memref<400x128xbf16, #tpu.memory_space<vmem>>, %arg2: memref<56x128xf32, #tpu.memory_space<vmem>>, %arg3: memref<2x10xf32, #tpu.memory_space<vmem>>) attributes {dimension_semantics = [], scalar_prefetch = 0 : i64, scratch_operands = 0 : i64, tpu.core_type = #tpu.core_type<tc>} {
    %c0 = arith.constant 0 : index
    %c0_0 = arith.constant 0 : index
    %0 = vector.load %arg2[%c0, %c0_0] : memref<56x128xf32, #tpu.memory_space<vmem>>, vector<56x128xf32>
    %1 = tpu.iota {dimensions = array<i32: 1>} : vector<1x32xi32>
    %c17_i32 = arith.constant 17 : i32
    %2 = vector.broadcast %c17_i32 : i32 to vector<1x32xi32>
    %3 = arith.cmpi sge, %1, %2 : vector<1x32xi32>
    %cst = arith.constant -1.000000e+30 : f32
    %cst_1 = arith.constant 0.000000e+00 : f32
    %4 = vector.broadcast %cst : f32 to vector<1x32xf32>
    %5 = vector.broadcast %cst_1 : f32 to vector<1x32xf32>
    %6 = arith.select %3, %4, %5 : vector<1x32xi1>, vector<1x32xf32>
    %c0_2 = arith.constant 0 : index
    %c0_3 = arith.constant 0 : index
    %7 = vector.load %arg1[%c0_2, %c0_3] : memref<400x128xbf16, #tpu.memory_space<vmem>>, vector<48x32xbf16>
    %c0_4 = arith.constant 0 : index
    %c0_5 = arith.constant 0 : index
    %c0_6 = arith.constant 0 : index
    %8 = vector.load %arg0[%c0_4, %c0_5, %c0_6] : memref<2x32x48xf32, #tpu.memory_space<vmem>>, vector<2x32x48xf32>
    %9 = arith.truncf %8 : vector<2x32x48xf32> to vector<2x32x48xbf16>
    %10 = vector.shape_cast %9 : vector<2x32x48xbf16> to vector<64x48xbf16>
    %cst_7 = arith.constant dense<0.000000e+00> : vector<64x32xf32>
    %11 = tpu.matmul %10, %7, %cst_7 {dimension_numbers = #tpu.dot_dimension_numbers<[1], [0], [0], [1], [0, 0, 1, 1], [], []>} : vector<64x48xbf16>, vector<48x32xbf16>, vector<64x32xf32> -> vector<64x32xf32>
    %12 = vector.shape_cast %11 : vector<64x32xf32> to vector<2x32x32xf32>
    %13 = vector.extract_strided_slice %0 {offsets = [0, 0], sizes = [1, 32], strides = [1, 1]} : vector<56x128xf32> to vector<1x32xf32>
    %14 = vector.shape_cast %13 : vector<1x32xf32> to vector<32xf32>
    %15 = vector.shape_cast %14 : vector<32xf32> to vector<1x1x32xf32>
    %16 = vector.broadcast %15 : vector<1x1x32xf32> to vector<2x32x32xf32>
    %17 = arith.addf %12, %16 : vector<2x32x32xf32>
    %18 = tpu.iota {dimensions = array<i32: 1>} : vector<1x32x1xi32>
    %c0_i32 = arith.constant 0 : i32
    %19 = vector.broadcast %c0_i32 : i32 to vector<1x32x1xi32>
    %20 = arith.cmpi eq, %18, %19 : vector<1x32x1xi32>
    %21 = vector.extract_strided_slice %0 {offsets = [1, 0], sizes = [1, 32], strides = [1, 1]} : vector<56x128xf32> to vector<1x32xf32>
    %22 = vector.shape_cast %21 : vector<1x32xf32> to vector<32xf32>
    %23 = vector.shape_cast %20 : vector<1x32x1xi1> to vector<1x32x1xi1>
    %24 = vector.broadcast %23 : vector<1x32x1xi1> to vector<2x32x32xi1>
    %25 = vector.shape_cast %22 : vector<32xf32> to vector<1x1x32xf32>
    %26 = vector.broadcast %25 : vector<1x1x32xf32> to vector<2x32x32xf32>
    %27 = arith.select %24, %26, %17 : vector<2x32x32xi1>, vector<2x32x32xf32>
    %28 = vector.extract_strided_slice %0 {offsets = [8, 0], sizes = [32, 32], strides = [1, 1]} : vector<56x128xf32> to vector<32x32xf32>
    %29 = vector.shape_cast %28 : vector<32x32xf32> to vector<1x32x32xf32>
    %30 = vector.broadcast %29 : vector<1x32x32xf32> to vector<2x32x32xf32>
    %31 = arith.addf %27, %30 : vector<2x32x32xf32>
    %32 = vector.extract_strided_slice %0 {offsets = [40, 0], sizes = [1, 32], strides = [1, 1]} : vector<56x128xf32> to vector<1x32xf32>
    %33 = vector.shape_cast %32 : vector<1x32xf32> to vector<32xf32>
    %34 = vector.extract_strided_slice %0 {offsets = [41, 0], sizes = [1, 32], strides = [1, 1]} : vector<56x128xf32> to vector<1x32xf32>
    %35 = vector.shape_cast %34 : vector<1x32xf32> to vector<32xf32>
    %cst_8 = arith.constant dense<0.000000e+00> : vector<2x32xf32>
    %36 = vector.multi_reduction <add>, %31, %cst_8 [2] : vector<2x32x32xf32> to vector<2x32xf32>
    %37 = vector.shape_cast %36 : vector<2x32xf32> to vector<2x32x1xf32>
    %cst_9 = arith.constant 3.200000e+01 : f32
    %38 = vector.broadcast %cst_9 : f32 to vector<2x32x1xf32>
    %39 = arith.divf %37, %38 : vector<2x32x1xf32>
    %40 = vector.broadcast %39 : vector<2x32x1xf32> to vector<2x32x32xf32>
    %41 = arith.subf %31, %40 : vector<2x32x32xf32>
    %42 = arith.mulf %41, %41 : vector<2x32x32xf32>
    %cst_10 = arith.constant dense<0.000000e+00> : vector<2x32xf32>
    %43 = vector.multi_reduction <add>, %42, %cst_10 [2] : vector<2x32x32xf32> to vector<2x32xf32>
    %44 = vector.shape_cast %43 : vector<2x32xf32> to vector<2x32x1xf32>
    %cst_11 = arith.constant 3.200000e+01 : f32
    %45 = vector.broadcast %cst_11 : f32 to vector<2x32x1xf32>
    %46 = arith.divf %44, %45 : vector<2x32x1xf32>
    %47 = vector.broadcast %39 : vector<2x32x1xf32> to vector<2x32x32xf32>
    %48 = arith.subf %31, %47 : vector<2x32x32xf32>
    %cst_12 = arith.constant 9.99999974E-6 : f32
    %49 = vector.broadcast %cst_12 : f32 to vector<2x32x1xf32>
    %50 = arith.addf %46, %49 : vector<2x32x1xf32>
    %51 = math.rsqrt %50 : vector<2x32x1xf32>
    %52 = vector.broadcast %51 : vector<2x32x1xf32> to vector<2x32x32xf32>
    %53 = arith.mulf %48, %52 : vector<2x32x32xf32>
    %54 = vector.shape_cast %33 : vector<32xf32> to vector<1x1x32xf32>
    %55 = vector.broadcast %54 : vector<1x1x32xf32> to vector<2x32x32xf32>
    %56 = arith.mulf %53, %55 : vector<2x32x32xf32>
    %57 = vector.shape_cast %35 : vector<32xf32> to vector<1x1x32xf32>
    %58 = vector.broadcast %57 : vector<1x1x32xf32> to vector<2x32x32xf32>
    %59 = arith.addf %56, %58 : vector<2x32x32xf32>
    %60 = arith.truncf %59 : vector<2x32x32xf32> to vector<2x32x32xbf16>
    %c48 = arith.constant 48 : index
    %c0_13 = arith.constant 0 : index
    %61 = vector.load %arg1[%c48, %c0_13] : memref<400x128xbf16, #tpu.memory_space<vmem>>, vector<32x96xbf16>
    %62 = vector.shape_cast %60 : vector<2x32x32xbf16> to vector<64x32xbf16>
    %cst_14 = arith.constant dense<0.000000e+00> : vector<64x96xf32>
    %63 = tpu.matmul %62, %61, %cst_14 {dimension_numbers = #tpu.dot_dimension_numbers<[1], [0], [0], [1], [0, 0, 1, 1], [], []>} : vector<64x32xbf16>, vector<32x96xbf16>, vector<64x96xf32> -> vector<64x96xf32>
    %64 = vector.shape_cast %63 : vector<64x96xf32> to vector<2x32x96xf32>
    %65 = vector.extract_strided_slice %0 {offsets = [42, 0], sizes = [1, 96], strides = [1, 1]} : vector<56x128xf32> to vector<1x96xf32>
    %66 = vector.shape_cast %65 : vector<1x96xf32> to vector<96xf32>
    %67 = vector.shape_cast %66 : vector<96xf32> to vector<1x1x96xf32>
    %68 = vector.broadcast %67 : vector<1x1x96xf32> to vector<2x32x96xf32>
    %69 = arith.addf %64, %68 : vector<2x32x96xf32>
    %70 = vector.extract_strided_slice %69 {offsets = [0, 0, 0], sizes = [2, 32, 8], strides = [1, 1, 1]} : vector<2x32x96xf32> to vector<2x32x8xf32>
    %71 = arith.truncf %70 : vector<2x32x8xf32> to vector<2x32x8xbf16>
    %72 = vector.extract_strided_slice %69 {offsets = [0, 0, 32], sizes = [2, 32, 8], strides = [1, 1, 1]} : vector<2x32x96xf32> to vector<2x32x8xf32>
    %73 = arith.truncf %72 : vector<2x32x8xf32> to vector<2x32x8xbf16>
    %74 = vector.extract_strided_slice %69 {offsets = [0, 0, 64], sizes = [2, 32, 8], strides = [1, 1, 1]} : vector<2x32x96xf32> to vector<2x32x8xf32>
    %75 = arith.truncf %74 : vector<2x32x8xf32> to vector<2x32x8xbf16>
    "tpu.trace_start"() <{level = 10 : i32, message = "bqe,bke->bqk"}> : () -> ()
    %cst_15 = arith.constant dense<0.000000e+00> : vector<2x32x32xf32>
    %76 = tpu.matmul %71, %73, %cst_15 {dimension_numbers = #tpu.dot_dimension_numbers<[2], [2], [1], [1], [0, 0, 0, 1, 1, 1], [0], [0]>} : vector<2x32x8xbf16>, vector<2x32x8xbf16>, vector<2x32x32xf32> -> vector<2x32x32xf32>
    "tpu.trace_stop"() : () -> ()
    %cst_16 = arith.constant 0.353553385 : f32
    %77 = vector.broadcast %cst_16 : f32 to vector<2x32x32xf32>
    %78 = arith.mulf %76, %77 : vector<2x32x32xf32>
    %79 = vector.shape_cast %6 : vector<1x32xf32> to vector<1x1x32xf32>
    %80 = vector.broadcast %79 : vector<1x1x32xf32> to vector<2x32x32xf32>
    %81 = arith.addf %78, %80 : vector<2x32x32xf32>
    %cst_17 = arith.constant dense<0xFF800000> : vector<2x32xf32>
    %82 = vector.multi_reduction <maximumf>, %81, %cst_17 [2] : vector<2x32x32xf32> to vector<2x32xf32>
    %83 = vector.shape_cast %82 : vector<2x32xf32> to vector<2x32x1xf32>
    %84 = vector.broadcast %83 : vector<2x32x1xf32> to vector<2x32x32xf32>
    %85 = arith.subf %81, %84 : vector<2x32x32xf32>
    %86 = math.exp %85 : vector<2x32x32xf32>
    %cst_18 = arith.constant dense<0.000000e+00> : vector<2x32xf32>
    %87 = vector.multi_reduction <add>, %86, %cst_18 [2] : vector<2x32x32xf32> to vector<2x32xf32>
    %88 = vector.shape_cast %87 : vector<2x32xf32> to vector<2x32x1xf32>
    %89 = tpu.reciprocal %88 {approx = true} : vector<2x32x1xf32> -> vector<2x32x1xf32>
    %90 = vector.broadcast %89 : vector<2x32x1xf32> to vector<2x32x32xf32>
    %91 = arith.mulf %86, %90 : vector<2x32x32xf32>
    %92 = arith.truncf %91 : vector<2x32x32xf32> to vector<2x32x32xbf16>
    "tpu.trace_start"() <{level = 10 : i32, message = "bqk,bke->bqe"}> : () -> ()
    %cst_19 = arith.constant dense<0.000000e+00> : vector<2x32x8xf32>
    %93 = tpu.matmul %92, %75, %cst_19 {dimension_numbers = #tpu.dot_dimension_numbers<[2], [1], [1], [2], [0, 0, 0, 1, 1, 2], [0], [0]>} : vector<2x32x32xbf16>, vector<2x32x8xbf16>, vector<2x32x8xf32> -> vector<2x32x8xf32>
    "tpu.trace_stop"() : () -> ()
    %94 = vector.extract_strided_slice %69 {offsets = [0, 0, 8], sizes = [2, 32, 8], strides = [1, 1, 1]} : vector<2x32x96xf32> to vector<2x32x8xf32>
    %95 = arith.truncf %94 : vector<2x32x8xf32> to vector<2x32x8xbf16>
    %96 = vector.extract_strided_slice %69 {offsets = [0, 0, 40], sizes = [2, 32, 8], strides = [1, 1, 1]} : vector<2x32x96xf32> to vector<2x32x8xf32>
    %97 = arith.truncf %96 : vector<2x32x8xf32> to vector<2x32x8xbf16>
    %98 = vector.extract_strided_slice %69 {offsets = [0, 0, 72], sizes = [2, 32, 8], strides = [1, 1, 1]} : vector<2x32x96xf32> to vector<2x32x8xf32>
    %99 = arith.truncf %98 : vector<2x32x8xf32> to vector<2x32x8xbf16>
    "tpu.trace_start"() <{level = 10 : i32, message = "bqe,bke->bqk"}> : () -> ()
    %cst_20 = arith.constant dense<0.000000e+00> : vector<2x32x32xf32>
    %100 = tpu.matmul %95, %97, %cst_20 {dimension_numbers = #tpu.dot_dimension_numbers<[2], [2], [1], [1], [0, 0, 0, 1, 1, 1], [0], [0]>} : vector<2x32x8xbf16>, vector<2x32x8xbf16>, vector<2x32x32xf32> -> vector<2x32x32xf32>
    "tpu.trace_stop"() : () -> ()
    %cst_21 = arith.constant 0.353553385 : f32
    %101 = vector.broadcast %cst_21 : f32 to vector<2x32x32xf32>
    %102 = arith.mulf %100, %101 : vector<2x32x32xf32>
    %103 = vector.shape_cast %6 : vector<1x32xf32> to vector<1x1x32xf32>
    %104 = vector.broadcast %103 : vector<1x1x32xf32> to vector<2x32x32xf32>
    %105 = arith.addf %102, %104 : vector<2x32x32xf32>
    %cst_22 = arith.constant dense<0xFF800000> : vector<2x32xf32>
    %106 = vector.multi_reduction <maximumf>, %105, %cst_22 [2] : vector<2x32x32xf32> to vector<2x32xf32>
    %107 = vector.shape_cast %106 : vector<2x32xf32> to vector<2x32x1xf32>
    %108 = vector.broadcast %107 : vector<2x32x1xf32> to vector<2x32x32xf32>
    %109 = arith.subf %105, %108 : vector<2x32x32xf32>
    %110 = math.exp %109 : vector<2x32x32xf32>
    %cst_23 = arith.constant dense<0.000000e+00> : vector<2x32xf32>
    %111 = vector.multi_reduction <add>, %110, %cst_23 [2] : vector<2x32x32xf32> to vector<2x32xf32>
    %112 = vector.shape_cast %111 : vector<2x32xf32> to vector<2x32x1xf32>
    %113 = tpu.reciprocal %112 {approx = true} : vector<2x32x1xf32> -> vector<2x32x1xf32>
    %114 = vector.broadcast %113 : vector<2x32x1xf32> to vector<2x32x32xf32>
    %115 = arith.mulf %110, %114 : vector<2x32x32xf32>
    %116 = arith.truncf %115 : vector<2x32x32xf32> to vector<2x32x32xbf16>
    "tpu.trace_start"() <{level = 10 : i32, message = "bqk,bke->bqe"}> : () -> ()
    %cst_24 = arith.constant dense<0.000000e+00> : vector<2x32x8xf32>
    %117 = tpu.matmul %116, %99, %cst_24 {dimension_numbers = #tpu.dot_dimension_numbers<[2], [1], [1], [2], [0, 0, 0, 1, 1, 2], [0], [0]>} : vector<2x32x32xbf16>, vector<2x32x8xbf16>, vector<2x32x8xf32> -> vector<2x32x8xf32>
    "tpu.trace_stop"() : () -> ()
    %118 = vector.extract_strided_slice %69 {offsets = [0, 0, 16], sizes = [2, 32, 8], strides = [1, 1, 1]} : vector<2x32x96xf32> to vector<2x32x8xf32>
    %119 = arith.truncf %118 : vector<2x32x8xf32> to vector<2x32x8xbf16>
    %120 = vector.extract_strided_slice %69 {offsets = [0, 0, 48], sizes = [2, 32, 8], strides = [1, 1, 1]} : vector<2x32x96xf32> to vector<2x32x8xf32>
    %121 = arith.truncf %120 : vector<2x32x8xf32> to vector<2x32x8xbf16>
    %122 = vector.extract_strided_slice %69 {offsets = [0, 0, 80], sizes = [2, 32, 8], strides = [1, 1, 1]} : vector<2x32x96xf32> to vector<2x32x8xf32>
    %123 = arith.truncf %122 : vector<2x32x8xf32> to vector<2x32x8xbf16>
    "tpu.trace_start"() <{level = 10 : i32, message = "bqe,bke->bqk"}> : () -> ()
    %cst_25 = arith.constant dense<0.000000e+00> : vector<2x32x32xf32>
    %124 = tpu.matmul %119, %121, %cst_25 {dimension_numbers = #tpu.dot_dimension_numbers<[2], [2], [1], [1], [0, 0, 0, 1, 1, 1], [0], [0]>} : vector<2x32x8xbf16>, vector<2x32x8xbf16>, vector<2x32x32xf32> -> vector<2x32x32xf32>
    "tpu.trace_stop"() : () -> ()
    %cst_26 = arith.constant 0.353553385 : f32
    %125 = vector.broadcast %cst_26 : f32 to vector<2x32x32xf32>
    %126 = arith.mulf %124, %125 : vector<2x32x32xf32>
    %127 = vector.shape_cast %6 : vector<1x32xf32> to vector<1x1x32xf32>
    %128 = vector.broadcast %127 : vector<1x1x32xf32> to vector<2x32x32xf32>
    %129 = arith.addf %126, %128 : vector<2x32x32xf32>
    %cst_27 = arith.constant dense<0xFF800000> : vector<2x32xf32>
    %130 = vector.multi_reduction <maximumf>, %129, %cst_27 [2] : vector<2x32x32xf32> to vector<2x32xf32>
    %131 = vector.shape_cast %130 : vector<2x32xf32> to vector<2x32x1xf32>
    %132 = vector.broadcast %131 : vector<2x32x1xf32> to vector<2x32x32xf32>
    %133 = arith.subf %129, %132 : vector<2x32x32xf32>
    %134 = math.exp %133 : vector<2x32x32xf32>
    %cst_28 = arith.constant dense<0.000000e+00> : vector<2x32xf32>
    %135 = vector.multi_reduction <add>, %134, %cst_28 [2] : vector<2x32x32xf32> to vector<2x32xf32>
    %136 = vector.shape_cast %135 : vector<2x32xf32> to vector<2x32x1xf32>
    %137 = tpu.reciprocal %136 {approx = true} : vector<2x32x1xf32> -> vector<2x32x1xf32>
    %138 = vector.broadcast %137 : vector<2x32x1xf32> to vector<2x32x32xf32>
    %139 = arith.mulf %134, %138 : vector<2x32x32xf32>
    %140 = arith.truncf %139 : vector<2x32x32xf32> to vector<2x32x32xbf16>
    "tpu.trace_start"() <{level = 10 : i32, message = "bqk,bke->bqe"}> : () -> ()
    %cst_29 = arith.constant dense<0.000000e+00> : vector<2x32x8xf32>
    %141 = tpu.matmul %140, %123, %cst_29 {dimension_numbers = #tpu.dot_dimension_numbers<[2], [1], [1], [2], [0, 0, 0, 1, 1, 2], [0], [0]>} : vector<2x32x32xbf16>, vector<2x32x8xbf16>, vector<2x32x8xf32> -> vector<2x32x8xf32>
    "tpu.trace_stop"() : () -> ()
    %142 = vector.extract_strided_slice %69 {offsets = [0, 0, 24], sizes = [2, 32, 8], strides = [1, 1, 1]} : vector<2x32x96xf32> to vector<2x32x8xf32>
    %143 = arith.truncf %142 : vector<2x32x8xf32> to vector<2x32x8xbf16>
    %144 = vector.extract_strided_slice %69 {offsets = [0, 0, 56], sizes = [2, 32, 8], strides = [1, 1, 1]} : vector<2x32x96xf32> to vector<2x32x8xf32>
    %145 = arith.truncf %144 : vector<2x32x8xf32> to vector<2x32x8xbf16>
    %146 = vector.extract_strided_slice %69 {offsets = [0, 0, 88], sizes = [2, 32, 8], strides = [1, 1, 1]} : vector<2x32x96xf32> to vector<2x32x8xf32>
    %147 = arith.truncf %146 : vector<2x32x8xf32> to vector<2x32x8xbf16>
    "tpu.trace_start"() <{level = 10 : i32, message = "bqe,bke->bqk"}> : () -> ()
    %cst_30 = arith.constant dense<0.000000e+00> : vector<2x32x32xf32>
    %148 = tpu.matmul %143, %145, %cst_30 {dimension_numbers = #tpu.dot_dimension_numbers<[2], [2], [1], [1], [0, 0, 0, 1, 1, 1], [0], [0]>} : vector<2x32x8xbf16>, vector<2x32x8xbf16>, vector<2x32x32xf32> -> vector<2x32x32xf32>
    "tpu.trace_stop"() : () -> ()
    %cst_31 = arith.constant 0.353553385 : f32
    %149 = vector.broadcast %cst_31 : f32 to vector<2x32x32xf32>
    %150 = arith.mulf %148, %149 : vector<2x32x32xf32>
    %151 = vector.shape_cast %6 : vector<1x32xf32> to vector<1x1x32xf32>
    %152 = vector.broadcast %151 : vector<1x1x32xf32> to vector<2x32x32xf32>
    %153 = arith.addf %150, %152 : vector<2x32x32xf32>
    %cst_32 = arith.constant dense<0xFF800000> : vector<2x32xf32>
    %154 = vector.multi_reduction <maximumf>, %153, %cst_32 [2] : vector<2x32x32xf32> to vector<2x32xf32>
    %155 = vector.shape_cast %154 : vector<2x32xf32> to vector<2x32x1xf32>
    %156 = vector.broadcast %155 : vector<2x32x1xf32> to vector<2x32x32xf32>
    %157 = arith.subf %153, %156 : vector<2x32x32xf32>
    %158 = math.exp %157 : vector<2x32x32xf32>
    %cst_33 = arith.constant dense<0.000000e+00> : vector<2x32xf32>
    %159 = vector.multi_reduction <add>, %158, %cst_33 [2] : vector<2x32x32xf32> to vector<2x32xf32>
    %160 = vector.shape_cast %159 : vector<2x32xf32> to vector<2x32x1xf32>
    %161 = tpu.reciprocal %160 {approx = true} : vector<2x32x1xf32> -> vector<2x32x1xf32>
    %162 = vector.broadcast %161 : vector<2x32x1xf32> to vector<2x32x32xf32>
    %163 = arith.mulf %158, %162 : vector<2x32x32xf32>
    %164 = arith.truncf %163 : vector<2x32x32xf32> to vector<2x32x32xbf16>
    "tpu.trace_start"() <{level = 10 : i32, message = "bqk,bke->bqe"}> : () -> ()
    %cst_34 = arith.constant dense<0.000000e+00> : vector<2x32x8xf32>
    %165 = tpu.matmul %164, %147, %cst_34 {dimension_numbers = #tpu.dot_dimension_numbers<[2], [1], [1], [2], [0, 0, 0, 1, 1, 2], [0], [0]>} : vector<2x32x32xbf16>, vector<2x32x8xbf16>, vector<2x32x8xf32> -> vector<2x32x8xf32>
    "tpu.trace_stop"() : () -> ()
    %166 = tpu.concatenate %93, %117, %141, %165 in 2 : vector<2x32x8xf32>, vector<2x32x8xf32>, vector<2x32x8xf32>, vector<2x32x8xf32> -> vector<2x32x32xf32>
    %c80 = arith.constant 80 : index
    %c0_35 = arith.constant 0 : index
    %167 = vector.load %arg1[%c80, %c0_35] : memref<400x128xbf16, #tpu.memory_space<vmem>>, vector<32x32xbf16>
    %168 = arith.truncf %166 : vector<2x32x32xf32> to vector<2x32x32xbf16>
    %169 = vector.shape_cast %168 : vector<2x32x32xbf16> to vector<64x32xbf16>
    %cst_36 = arith.constant dense<0.000000e+00> : vector<64x32xf32>
    %170 = tpu.matmul %169, %167, %cst_36 {dimension_numbers = #tpu.dot_dimension_numbers<[1], [0], [0], [1], [0, 0, 1, 1], [], []>} : vector<64x32xbf16>, vector<32x32xbf16>, vector<64x32xf32> -> vector<64x32xf32>
    %171 = vector.shape_cast %170 : vector<64x32xf32> to vector<2x32x32xf32>
    %172 = vector.extract_strided_slice %0 {offsets = [43, 0], sizes = [1, 32], strides = [1, 1]} : vector<56x128xf32> to vector<1x32xf32>
    %173 = vector.shape_cast %172 : vector<1x32xf32> to vector<32xf32>
    %174 = vector.shape_cast %173 : vector<32xf32> to vector<1x1x32xf32>
    %175 = vector.broadcast %174 : vector<1x1x32xf32> to vector<2x32x32xf32>
    %176 = arith.addf %171, %175 : vector<2x32x32xf32>
    %177 = arith.addf %31, %176 : vector<2x32x32xf32>
    %178 = vector.extract_strided_slice %0 {offsets = [44, 0], sizes = [1, 32], strides = [1, 1]} : vector<56x128xf32> to vector<1x32xf32>
    %179 = vector.shape_cast %178 : vector<1x32xf32> to vector<32xf32>
    %180 = vector.extract_strided_slice %0 {offsets = [45, 0], sizes = [1, 32], strides = [1, 1]} : vector<56x128xf32> to vector<1x32xf32>
    %181 = vector.shape_cast %180 : vector<1x32xf32> to vector<32xf32>
    %cst_37 = arith.constant dense<0.000000e+00> : vector<2x32xf32>
    %182 = vector.multi_reduction <add>, %177, %cst_37 [2] : vector<2x32x32xf32> to vector<2x32xf32>
    %183 = vector.shape_cast %182 : vector<2x32xf32> to vector<2x32x1xf32>
    %cst_38 = arith.constant 3.200000e+01 : f32
    %184 = vector.broadcast %cst_38 : f32 to vector<2x32x1xf32>
    %185 = arith.divf %183, %184 : vector<2x32x1xf32>
    %186 = vector.broadcast %185 : vector<2x32x1xf32> to vector<2x32x32xf32>
    %187 = arith.subf %177, %186 : vector<2x32x32xf32>
    %188 = arith.mulf %187, %187 : vector<2x32x32xf32>
    %cst_39 = arith.constant dense<0.000000e+00> : vector<2x32xf32>
    %189 = vector.multi_reduction <add>, %188, %cst_39 [2] : vector<2x32x32xf32> to vector<2x32xf32>
    %190 = vector.shape_cast %189 : vector<2x32xf32> to vector<2x32x1xf32>
    %cst_40 = arith.constant 3.200000e+01 : f32
    %191 = vector.broadcast %cst_40 : f32 to vector<2x32x1xf32>
    %192 = arith.divf %190, %191 : vector<2x32x1xf32>
    %193 = vector.broadcast %185 : vector<2x32x1xf32> to vector<2x32x32xf32>
    %194 = arith.subf %177, %193 : vector<2x32x32xf32>
    %cst_41 = arith.constant 9.99999974E-6 : f32
    %195 = vector.broadcast %cst_41 : f32 to vector<2x32x1xf32>
    %196 = arith.addf %192, %195 : vector<2x32x1xf32>
    %197 = math.rsqrt %196 : vector<2x32x1xf32>
    %198 = vector.broadcast %197 : vector<2x32x1xf32> to vector<2x32x32xf32>
    %199 = arith.mulf %194, %198 : vector<2x32x32xf32>
    %200 = vector.shape_cast %179 : vector<32xf32> to vector<1x1x32xf32>
    %201 = vector.broadcast %200 : vector<1x1x32xf32> to vector<2x32x32xf32>
    %202 = arith.mulf %199, %201 : vector<2x32x32xf32>
    %203 = vector.shape_cast %181 : vector<32xf32> to vector<1x1x32xf32>
    %204 = vector.broadcast %203 : vector<1x1x32xf32> to vector<2x32x32xf32>
    %205 = arith.addf %202, %204 : vector<2x32x32xf32>
    %c112 = arith.constant 112 : index
    %c0_42 = arith.constant 0 : index
    %206 = vector.load %arg1[%c112, %c0_42] : memref<400x128xbf16, #tpu.memory_space<vmem>>, vector<32x64xbf16>
    %207 = arith.truncf %205 : vector<2x32x32xf32> to vector<2x32x32xbf16>
    %208 = vector.shape_cast %207 : vector<2x32x32xbf16> to vector<64x32xbf16>
    %cst_43 = arith.constant dense<0.000000e+00> : vector<64x64xf32>
    %209 = tpu.matmul %208, %206, %cst_43 {dimension_numbers = #tpu.dot_dimension_numbers<[1], [0], [0], [1], [0, 0, 1, 1], [], []>} : vector<64x32xbf16>, vector<32x64xbf16>, vector<64x64xf32> -> vector<64x64xf32>
    %210 = vector.shape_cast %209 : vector<64x64xf32> to vector<2x32x64xf32>
    %211 = vector.extract_strided_slice %0 {offsets = [46, 0], sizes = [1, 64], strides = [1, 1]} : vector<56x128xf32> to vector<1x64xf32>
    %212 = vector.shape_cast %211 : vector<1x64xf32> to vector<64xf32>
    %213 = vector.shape_cast %212 : vector<64xf32> to vector<1x1x64xf32>
    %214 = vector.broadcast %213 : vector<1x1x64xf32> to vector<2x32x64xf32>
    %215 = arith.addf %210, %214 : vector<2x32x64xf32>
    %cst_44 = arith.constant 5.000000e-01 : f32
    %216 = vector.broadcast %cst_44 : f32 to vector<2x32x64xf32>
    %217 = arith.mulf %216, %215 : vector<2x32x64xf32>
    %cst_45 = arith.constant 0.707106769 : f32
    %218 = vector.broadcast %cst_45 : f32 to vector<2x32x64xf32>
    %219 = arith.mulf %215, %218 : vector<2x32x64xf32>
    %220 = math.absf %219 : vector<2x32x64xf32>
    %cst_46 = arith.constant 0.327591091 : f32
    %221 = vector.broadcast %cst_46 : f32 to vector<2x32x64xf32>
    %222 = arith.mulf %221, %220 : vector<2x32x64xf32>
    %cst_47 = arith.constant 1.000000e+00 : f32
    %223 = vector.broadcast %cst_47 : f32 to vector<2x32x64xf32>
    %224 = arith.addf %223, %222 : vector<2x32x64xf32>
    %cst_48 = arith.constant 1.000000e+00 : f32
    %225 = vector.broadcast %cst_48 : f32 to vector<2x32x64xf32>
    %226 = arith.divf %225, %224 : vector<2x32x64xf32>
    %cst_49 = arith.constant 1.06140542 : f32
    %227 = vector.broadcast %cst_49 : f32 to vector<2x32x64xf32>
    %228 = arith.mulf %227, %226 : vector<2x32x64xf32>
    %cst_50 = arith.constant -1.45315206 : f32
    %229 = vector.broadcast %cst_50 : f32 to vector<2x32x64xf32>
    %230 = arith.addf %228, %229 : vector<2x32x64xf32>
    %231 = arith.mulf %230, %226 : vector<2x32x64xf32>
    %cst_51 = arith.constant 1.42141378 : f32
    %232 = vector.broadcast %cst_51 : f32 to vector<2x32x64xf32>
    %233 = arith.addf %231, %232 : vector<2x32x64xf32>
    %234 = arith.mulf %233, %226 : vector<2x32x64xf32>
    %cst_52 = arith.constant -0.284496725 : f32
    %235 = vector.broadcast %cst_52 : f32 to vector<2x32x64xf32>
    %236 = arith.addf %234, %235 : vector<2x32x64xf32>
    %237 = arith.mulf %236, %226 : vector<2x32x64xf32>
    %cst_53 = arith.constant 0.254829586 : f32
    %238 = vector.broadcast %cst_53 : f32 to vector<2x32x64xf32>
    %239 = arith.addf %237, %238 : vector<2x32x64xf32>
    %240 = arith.mulf %239, %226 : vector<2x32x64xf32>
    %241 = arith.mulf %220, %220 : vector<2x32x64xf32>
    %cst_54 = arith.constant 0.000000e+00 : f32
    %242 = vector.broadcast %cst_54 : f32 to vector<2x32x64xf32>
    %243 = arith.subf %242, %241 : vector<2x32x64xf32>
    %244 = math.exp %243 : vector<2x32x64xf32>
    %245 = arith.mulf %240, %244 : vector<2x32x64xf32>
    %cst_55 = arith.constant 1.000000e+00 : f32
    %246 = vector.broadcast %cst_55 : f32 to vector<2x32x64xf32>
    %247 = arith.subf %246, %245 : vector<2x32x64xf32>
    %cst_56 = arith.constant 0.000000e+00 : f32
    %248 = vector.broadcast %cst_56 : f32 to vector<2x32x64xf32>
    %249 = arith.cmpf olt, %219, %248 : vector<2x32x64xf32>
    %cst_57 = arith.constant 0.000000e+00 : f32
    %250 = vector.broadcast %cst_57 : f32 to vector<2x32x64xf32>
    %251 = arith.subf %250, %247 : vector<2x32x64xf32>
    %252 = arith.select %249, %251, %247 : vector<2x32x64xi1>, vector<2x32x64xf32>
    %cst_58 = arith.constant 1.000000e+00 : f32
    %253 = vector.broadcast %cst_58 : f32 to vector<2x32x64xf32>
    %254 = arith.addf %253, %252 : vector<2x32x64xf32>
    %255 = arith.mulf %217, %254 : vector<2x32x64xf32>
    %c144 = arith.constant 144 : index
    %c0_59 = arith.constant 0 : index
    %256 = vector.load %arg1[%c144, %c0_59] : memref<400x128xbf16, #tpu.memory_space<vmem>>, vector<64x32xbf16>
    %257 = arith.truncf %255 : vector<2x32x64xf32> to vector<2x32x64xbf16>
    %258 = vector.shape_cast %257 : vector<2x32x64xbf16> to vector<64x64xbf16>
    %cst_60 = arith.constant dense<0.000000e+00> : vector<64x32xf32>
    %259 = tpu.matmul %258, %256, %cst_60 {dimension_numbers = #tpu.dot_dimension_numbers<[1], [0], [0], [1], [0, 0, 1, 1], [], []>} : vector<64x64xbf16>, vector<64x32xbf16>, vector<64x32xf32> -> vector<64x32xf32>
    %260 = vector.shape_cast %259 : vector<64x32xf32> to vector<2x32x32xf32>
    %261 = vector.extract_strided_slice %0 {offsets = [47, 0], sizes = [1, 32], strides = [1, 1]} : vector<56x128xf32> to vector<1x32xf32>
    %262 = vector.shape_cast %261 : vector<1x32xf32> to vector<32xf32>
    %263 = vector.shape_cast %262 : vector<32xf32> to vector<1x1x32xf32>
    %264 = vector.broadcast %263 : vector<1x1x32xf32> to vector<2x32x32xf32>
    %265 = arith.addf %260, %264 : vector<2x32x32xf32>
    %266 = arith.addf %177, %265 : vector<2x32x32xf32>
    %267 = vector.extract_strided_slice %0 {offsets = [48, 0], sizes = [1, 32], strides = [1, 1]} : vector<56x128xf32> to vector<1x32xf32>
    %268 = vector.shape_cast %267 : vector<1x32xf32> to vector<32xf32>
    %269 = vector.extract_strided_slice %0 {offsets = [49, 0], sizes = [1, 32], strides = [1, 1]} : vector<56x128xf32> to vector<1x32xf32>
    %270 = vector.shape_cast %269 : vector<1x32xf32> to vector<32xf32>
    %cst_61 = arith.constant dense<0.000000e+00> : vector<2x32xf32>
    %271 = vector.multi_reduction <add>, %266, %cst_61 [2] : vector<2x32x32xf32> to vector<2x32xf32>
    %272 = vector.shape_cast %271 : vector<2x32xf32> to vector<2x32x1xf32>
    %cst_62 = arith.constant 3.200000e+01 : f32
    %273 = vector.broadcast %cst_62 : f32 to vector<2x32x1xf32>
    %274 = arith.divf %272, %273 : vector<2x32x1xf32>
    %275 = vector.broadcast %274 : vector<2x32x1xf32> to vector<2x32x32xf32>
    %276 = arith.subf %266, %275 : vector<2x32x32xf32>
    %277 = arith.mulf %276, %276 : vector<2x32x32xf32>
    %cst_63 = arith.constant dense<0.000000e+00> : vector<2x32xf32>
    %278 = vector.multi_reduction <add>, %277, %cst_63 [2] : vector<2x32x32xf32> to vector<2x32xf32>
    %279 = vector.shape_cast %278 : vector<2x32xf32> to vector<2x32x1xf32>
    %cst_64 = arith.constant 3.200000e+01 : f32
    %280 = vector.broadcast %cst_64 : f32 to vector<2x32x1xf32>
    %281 = arith.divf %279, %280 : vector<2x32x1xf32>
    %282 = vector.broadcast %274 : vector<2x32x1xf32> to vector<2x32x32xf32>
    %283 = arith.subf %266, %282 : vector<2x32x32xf32>
    %cst_65 = arith.constant 9.99999974E-6 : f32
    %284 = vector.broadcast %cst_65 : f32 to vector<2x32x1xf32>
    %285 = arith.addf %281, %284 : vector<2x32x1xf32>
    %286 = math.rsqrt %285 : vector<2x32x1xf32>
    %287 = vector.broadcast %286 : vector<2x32x1xf32> to vector<2x32x32xf32>
    %288 = arith.mulf %283, %287 : vector<2x32x32xf32>
    %289 = vector.shape_cast %268 : vector<32xf32> to vector<1x1x32xf32>
    %290 = vector.broadcast %289 : vector<1x1x32xf32> to vector<2x32x32xf32>
    %291 = arith.mulf %288, %290 : vector<2x32x32xf32>
    %292 = vector.shape_cast %270 : vector<32xf32> to vector<1x1x32xf32>
    %293 = vector.broadcast %292 : vector<1x1x32xf32> to vector<2x32x32xf32>
    %294 = arith.addf %291, %293 : vector<2x32x32xf32>
    %295 = arith.truncf %294 : vector<2x32x32xf32> to vector<2x32x32xbf16>
    %c208 = arith.constant 208 : index
    %c0_66 = arith.constant 0 : index
    %296 = vector.load %arg1[%c208, %c0_66] : memref<400x128xbf16, #tpu.memory_space<vmem>>, vector<32x96xbf16>
    %297 = vector.shape_cast %295 : vector<2x32x32xbf16> to vector<64x32xbf16>
    %cst_67 = arith.constant dense<0.000000e+00> : vector<64x96xf32>
    %298 = tpu.matmul %297, %296, %cst_67 {dimension_numbers = #tpu.dot_dimension_numbers<[1], [0], [0], [1], [0, 0, 1, 1], [], []>} : vector<64x32xbf16>, vector<32x96xbf16>, vector<64x96xf32> -> vector<64x96xf32>
    %299 = vector.shape_cast %298 : vector<64x96xf32> to vector<2x32x96xf32>
    %300 = vector.extract_strided_slice %0 {offsets = [50, 0], sizes = [1, 96], strides = [1, 1]} : vector<56x128xf32> to vector<1x96xf32>
    %301 = vector.shape_cast %300 : vector<1x96xf32> to vector<96xf32>
    %302 = vector.shape_cast %301 : vector<96xf32> to vector<1x1x96xf32>
    %303 = vector.broadcast %302 : vector<1x1x96xf32> to vector<2x32x96xf32>
    %304 = arith.addf %299, %303 : vector<2x32x96xf32>
    %305 = vector.extract_strided_slice %304 {offsets = [0, 0, 0], sizes = [2, 32, 8], strides = [1, 1, 1]} : vector<2x32x96xf32> to vector<2x32x8xf32>
    %306 = arith.truncf %305 : vector<2x32x8xf32> to vector<2x32x8xbf16>
    %307 = vector.extract_strided_slice %304 {offsets = [0, 0, 32], sizes = [2, 32, 8], strides = [1, 1, 1]} : vector<2x32x96xf32> to vector<2x32x8xf32>
    %308 = arith.truncf %307 : vector<2x32x8xf32> to vector<2x32x8xbf16>
    %309 = vector.extract_strided_slice %304 {offsets = [0, 0, 64], sizes = [2, 32, 8], strides = [1, 1, 1]} : vector<2x32x96xf32> to vector<2x32x8xf32>
    %310 = arith.truncf %309 : vector<2x32x8xf32> to vector<2x32x8xbf16>
    "tpu.trace_start"() <{level = 10 : i32, message = "bqe,bke->bqk"}> : () -> ()
    %cst_68 = arith.constant dense<0.000000e+00> : vector<2x32x32xf32>
    %311 = tpu.matmul %306, %308, %cst_68 {dimension_numbers = #tpu.dot_dimension_numbers<[2], [2], [1], [1], [0, 0, 0, 1, 1, 1], [0], [0]>} : vector<2x32x8xbf16>, vector<2x32x8xbf16>, vector<2x32x32xf32> -> vector<2x32x32xf32>
    "tpu.trace_stop"() : () -> ()
    %cst_69 = arith.constant 0.353553385 : f32
    %312 = vector.broadcast %cst_69 : f32 to vector<2x32x32xf32>
    %313 = arith.mulf %311, %312 : vector<2x32x32xf32>
    %314 = vector.shape_cast %6 : vector<1x32xf32> to vector<1x1x32xf32>
    %315 = vector.broadcast %314 : vector<1x1x32xf32> to vector<2x32x32xf32>
    %316 = arith.addf %313, %315 : vector<2x32x32xf32>
    %cst_70 = arith.constant dense<0xFF800000> : vector<2x32xf32>
    %317 = vector.multi_reduction <maximumf>, %316, %cst_70 [2] : vector<2x32x32xf32> to vector<2x32xf32>
    %318 = vector.shape_cast %317 : vector<2x32xf32> to vector<2x32x1xf32>
    %319 = vector.broadcast %318 : vector<2x32x1xf32> to vector<2x32x32xf32>
    %320 = arith.subf %316, %319 : vector<2x32x32xf32>
    %321 = math.exp %320 : vector<2x32x32xf32>
    %cst_71 = arith.constant dense<0.000000e+00> : vector<2x32xf32>
    %322 = vector.multi_reduction <add>, %321, %cst_71 [2] : vector<2x32x32xf32> to vector<2x32xf32>
    %323 = vector.shape_cast %322 : vector<2x32xf32> to vector<2x32x1xf32>
    %324 = tpu.reciprocal %323 {approx = true} : vector<2x32x1xf32> -> vector<2x32x1xf32>
    %325 = vector.broadcast %324 : vector<2x32x1xf32> to vector<2x32x32xf32>
    %326 = arith.mulf %321, %325 : vector<2x32x32xf32>
    %327 = arith.truncf %326 : vector<2x32x32xf32> to vector<2x32x32xbf16>
    "tpu.trace_start"() <{level = 10 : i32, message = "bqk,bke->bqe"}> : () -> ()
    %cst_72 = arith.constant dense<0.000000e+00> : vector<2x32x8xf32>
    %328 = tpu.matmul %327, %310, %cst_72 {dimension_numbers = #tpu.dot_dimension_numbers<[2], [1], [1], [2], [0, 0, 0, 1, 1, 2], [0], [0]>} : vector<2x32x32xbf16>, vector<2x32x8xbf16>, vector<2x32x8xf32> -> vector<2x32x8xf32>
    "tpu.trace_stop"() : () -> ()
    %329 = vector.extract_strided_slice %304 {offsets = [0, 0, 8], sizes = [2, 32, 8], strides = [1, 1, 1]} : vector<2x32x96xf32> to vector<2x32x8xf32>
    %330 = arith.truncf %329 : vector<2x32x8xf32> to vector<2x32x8xbf16>
    %331 = vector.extract_strided_slice %304 {offsets = [0, 0, 40], sizes = [2, 32, 8], strides = [1, 1, 1]} : vector<2x32x96xf32> to vector<2x32x8xf32>
    %332 = arith.truncf %331 : vector<2x32x8xf32> to vector<2x32x8xbf16>
    %333 = vector.extract_strided_slice %304 {offsets = [0, 0, 72], sizes = [2, 32, 8], strides = [1, 1, 1]} : vector<2x32x96xf32> to vector<2x32x8xf32>
    %334 = arith.truncf %333 : vector<2x32x8xf32> to vector<2x32x8xbf16>
    "tpu.trace_start"() <{level = 10 : i32, message = "bqe,bke->bqk"}> : () -> ()
    %cst_73 = arith.constant dense<0.000000e+00> : vector<2x32x32xf32>
    %335 = tpu.matmul %330, %332, %cst_73 {dimension_numbers = #tpu.dot_dimension_numbers<[2], [2], [1], [1], [0, 0, 0, 1, 1, 1], [0], [0]>} : vector<2x32x8xbf16>, vector<2x32x8xbf16>, vector<2x32x32xf32> -> vector<2x32x32xf32>
    "tpu.trace_stop"() : () -> ()
    %cst_74 = arith.constant 0.353553385 : f32
    %336 = vector.broadcast %cst_74 : f32 to vector<2x32x32xf32>
    %337 = arith.mulf %335, %336 : vector<2x32x32xf32>
    %338 = vector.shape_cast %6 : vector<1x32xf32> to vector<1x1x32xf32>
    %339 = vector.broadcast %338 : vector<1x1x32xf32> to vector<2x32x32xf32>
    %340 = arith.addf %337, %339 : vector<2x32x32xf32>
    %cst_75 = arith.constant dense<0xFF800000> : vector<2x32xf32>
    %341 = vector.multi_reduction <maximumf>, %340, %cst_75 [2] : vector<2x32x32xf32> to vector<2x32xf32>
    %342 = vector.shape_cast %341 : vector<2x32xf32> to vector<2x32x1xf32>
    %343 = vector.broadcast %342 : vector<2x32x1xf32> to vector<2x32x32xf32>
    %344 = arith.subf %340, %343 : vector<2x32x32xf32>
    %345 = math.exp %344 : vector<2x32x32xf32>
    %cst_76 = arith.constant dense<0.000000e+00> : vector<2x32xf32>
    %346 = vector.multi_reduction <add>, %345, %cst_76 [2] : vector<2x32x32xf32> to vector<2x32xf32>
    %347 = vector.shape_cast %346 : vector<2x32xf32> to vector<2x32x1xf32>
    %348 = tpu.reciprocal %347 {approx = true} : vector<2x32x1xf32> -> vector<2x32x1xf32>
    %349 = vector.broadcast %348 : vector<2x32x1xf32> to vector<2x32x32xf32>
    %350 = arith.mulf %345, %349 : vector<2x32x32xf32>
    %351 = arith.truncf %350 : vector<2x32x32xf32> to vector<2x32x32xbf16>
    "tpu.trace_start"() <{level = 10 : i32, message = "bqk,bke->bqe"}> : () -> ()
    %cst_77 = arith.constant dense<0.000000e+00> : vector<2x32x8xf32>
    %352 = tpu.matmul %351, %334, %cst_77 {dimension_numbers = #tpu.dot_dimension_numbers<[2], [1], [1], [2], [0, 0, 0, 1, 1, 2], [0], [0]>} : vector<2x32x32xbf16>, vector<2x32x8xbf16>, vector<2x32x8xf32> -> vector<2x32x8xf32>
    "tpu.trace_stop"() : () -> ()
    %353 = vector.extract_strided_slice %304 {offsets = [0, 0, 16], sizes = [2, 32, 8], strides = [1, 1, 1]} : vector<2x32x96xf32> to vector<2x32x8xf32>
    %354 = arith.truncf %353 : vector<2x32x8xf32> to vector<2x32x8xbf16>
    %355 = vector.extract_strided_slice %304 {offsets = [0, 0, 48], sizes = [2, 32, 8], strides = [1, 1, 1]} : vector<2x32x96xf32> to vector<2x32x8xf32>
    %356 = arith.truncf %355 : vector<2x32x8xf32> to vector<2x32x8xbf16>
    %357 = vector.extract_strided_slice %304 {offsets = [0, 0, 80], sizes = [2, 32, 8], strides = [1, 1, 1]} : vector<2x32x96xf32> to vector<2x32x8xf32>
    %358 = arith.truncf %357 : vector<2x32x8xf32> to vector<2x32x8xbf16>
    "tpu.trace_start"() <{level = 10 : i32, message = "bqe,bke->bqk"}> : () -> ()
    %cst_78 = arith.constant dense<0.000000e+00> : vector<2x32x32xf32>
    %359 = tpu.matmul %354, %356, %cst_78 {dimension_numbers = #tpu.dot_dimension_numbers<[2], [2], [1], [1], [0, 0, 0, 1, 1, 1], [0], [0]>} : vector<2x32x8xbf16>, vector<2x32x8xbf16>, vector<2x32x32xf32> -> vector<2x32x32xf32>
    "tpu.trace_stop"() : () -> ()
    %cst_79 = arith.constant 0.353553385 : f32
    %360 = vector.broadcast %cst_79 : f32 to vector<2x32x32xf32>
    %361 = arith.mulf %359, %360 : vector<2x32x32xf32>
    %362 = vector.shape_cast %6 : vector<1x32xf32> to vector<1x1x32xf32>
    %363 = vector.broadcast %362 : vector<1x1x32xf32> to vector<2x32x32xf32>
    %364 = arith.addf %361, %363 : vector<2x32x32xf32>
    %cst_80 = arith.constant dense<0xFF800000> : vector<2x32xf32>
    %365 = vector.multi_reduction <maximumf>, %364, %cst_80 [2] : vector<2x32x32xf32> to vector<2x32xf32>
    %366 = vector.shape_cast %365 : vector<2x32xf32> to vector<2x32x1xf32>
    %367 = vector.broadcast %366 : vector<2x32x1xf32> to vector<2x32x32xf32>
    %368 = arith.subf %364, %367 : vector<2x32x32xf32>
    %369 = math.exp %368 : vector<2x32x32xf32>
    %cst_81 = arith.constant dense<0.000000e+00> : vector<2x32xf32>
    %370 = vector.multi_reduction <add>, %369, %cst_81 [2] : vector<2x32x32xf32> to vector<2x32xf32>
    %371 = vector.shape_cast %370 : vector<2x32xf32> to vector<2x32x1xf32>
    %372 = tpu.reciprocal %371 {approx = true} : vector<2x32x1xf32> -> vector<2x32x1xf32>
    %373 = vector.broadcast %372 : vector<2x32x1xf32> to vector<2x32x32xf32>
    %374 = arith.mulf %369, %373 : vector<2x32x32xf32>
    %375 = arith.truncf %374 : vector<2x32x32xf32> to vector<2x32x32xbf16>
    "tpu.trace_start"() <{level = 10 : i32, message = "bqk,bke->bqe"}> : () -> ()
    %cst_82 = arith.constant dense<0.000000e+00> : vector<2x32x8xf32>
    %376 = tpu.matmul %375, %358, %cst_82 {dimension_numbers = #tpu.dot_dimension_numbers<[2], [1], [1], [2], [0, 0, 0, 1, 1, 2], [0], [0]>} : vector<2x32x32xbf16>, vector<2x32x8xbf16>, vector<2x32x8xf32> -> vector<2x32x8xf32>
    "tpu.trace_stop"() : () -> ()
    %377 = vector.extract_strided_slice %304 {offsets = [0, 0, 24], sizes = [2, 32, 8], strides = [1, 1, 1]} : vector<2x32x96xf32> to vector<2x32x8xf32>
    %378 = arith.truncf %377 : vector<2x32x8xf32> to vector<2x32x8xbf16>
    %379 = vector.extract_strided_slice %304 {offsets = [0, 0, 56], sizes = [2, 32, 8], strides = [1, 1, 1]} : vector<2x32x96xf32> to vector<2x32x8xf32>
    %380 = arith.truncf %379 : vector<2x32x8xf32> to vector<2x32x8xbf16>
    %381 = vector.extract_strided_slice %304 {offsets = [0, 0, 88], sizes = [2, 32, 8], strides = [1, 1, 1]} : vector<2x32x96xf32> to vector<2x32x8xf32>
    %382 = arith.truncf %381 : vector<2x32x8xf32> to vector<2x32x8xbf16>
    "tpu.trace_start"() <{level = 10 : i32, message = "bqe,bke->bqk"}> : () -> ()
    %cst_83 = arith.constant dense<0.000000e+00> : vector<2x32x32xf32>
    %383 = tpu.matmul %378, %380, %cst_83 {dimension_numbers = #tpu.dot_dimension_numbers<[2], [2], [1], [1], [0, 0, 0, 1, 1, 1], [0], [0]>} : vector<2x32x8xbf16>, vector<2x32x8xbf16>, vector<2x32x32xf32> -> vector<2x32x32xf32>
    "tpu.trace_stop"() : () -> ()
    %cst_84 = arith.constant 0.353553385 : f32
    %384 = vector.broadcast %cst_84 : f32 to vector<2x32x32xf32>
    %385 = arith.mulf %383, %384 : vector<2x32x32xf32>
    %386 = vector.shape_cast %6 : vector<1x32xf32> to vector<1x1x32xf32>
    %387 = vector.broadcast %386 : vector<1x1x32xf32> to vector<2x32x32xf32>
    %388 = arith.addf %385, %387 : vector<2x32x32xf32>
    %cst_85 = arith.constant dense<0xFF800000> : vector<2x32xf32>
    %389 = vector.multi_reduction <maximumf>, %388, %cst_85 [2] : vector<2x32x32xf32> to vector<2x32xf32>
    %390 = vector.shape_cast %389 : vector<2x32xf32> to vector<2x32x1xf32>
    %391 = vector.broadcast %390 : vector<2x32x1xf32> to vector<2x32x32xf32>
    %392 = arith.subf %388, %391 : vector<2x32x32xf32>
    %393 = math.exp %392 : vector<2x32x32xf32>
    %cst_86 = arith.constant dense<0.000000e+00> : vector<2x32xf32>
    %394 = vector.multi_reduction <add>, %393, %cst_86 [2] : vector<2x32x32xf32> to vector<2x32xf32>
    %395 = vector.shape_cast %394 : vector<2x32xf32> to vector<2x32x1xf32>
    %396 = tpu.reciprocal %395 {approx = true} : vector<2x32x1xf32> -> vector<2x32x1xf32>
    %397 = vector.broadcast %396 : vector<2x32x1xf32> to vector<2x32x32xf32>
    %398 = arith.mulf %393, %397 : vector<2x32x32xf32>
    %399 = arith.truncf %398 : vector<2x32x32xf32> to vector<2x32x32xbf16>
    "tpu.trace_start"() <{level = 10 : i32, message = "bqk,bke->bqe"}> : () -> ()
    %cst_87 = arith.constant dense<0.000000e+00> : vector<2x32x8xf32>
    %400 = tpu.matmul %399, %382, %cst_87 {dimension_numbers = #tpu.dot_dimension_numbers<[2], [1], [1], [2], [0, 0, 0, 1, 1, 2], [0], [0]>} : vector<2x32x32xbf16>, vector<2x32x8xbf16>, vector<2x32x8xf32> -> vector<2x32x8xf32>
    "tpu.trace_stop"() : () -> ()
    %401 = tpu.concatenate %328, %352, %376, %400 in 2 : vector<2x32x8xf32>, vector<2x32x8xf32>, vector<2x32x8xf32>, vector<2x32x8xf32> -> vector<2x32x32xf32>
    %c240 = arith.constant 240 : index
    %c0_88 = arith.constant 0 : index
    %402 = vector.load %arg1[%c240, %c0_88] : memref<400x128xbf16, #tpu.memory_space<vmem>>, vector<32x32xbf16>
    %403 = arith.truncf %401 : vector<2x32x32xf32> to vector<2x32x32xbf16>
    %404 = vector.shape_cast %403 : vector<2x32x32xbf16> to vector<64x32xbf16>
    %cst_89 = arith.constant dense<0.000000e+00> : vector<64x32xf32>
    %405 = tpu.matmul %404, %402, %cst_89 {dimension_numbers = #tpu.dot_dimension_numbers<[1], [0], [0], [1], [0, 0, 1, 1], [], []>} : vector<64x32xbf16>, vector<32x32xbf16>, vector<64x32xf32> -> vector<64x32xf32>
    %406 = vector.shape_cast %405 : vector<64x32xf32> to vector<2x32x32xf32>
    %407 = vector.extract_strided_slice %0 {offsets = [51, 0], sizes = [1, 32], strides = [1, 1]} : vector<56x128xf32> to vector<1x32xf32>
    %408 = vector.shape_cast %407 : vector<1x32xf32> to vector<32xf32>
    %409 = vector.shape_cast %408 : vector<32xf32> to vector<1x1x32xf32>
    %410 = vector.broadcast %409 : vector<1x1x32xf32> to vector<2x32x32xf32>
    %411 = arith.addf %406, %410 : vector<2x32x32xf32>
    %412 = arith.addf %266, %411 : vector<2x32x32xf32>
    %413 = vector.extract_strided_slice %0 {offsets = [52, 0], sizes = [1, 32], strides = [1, 1]} : vector<56x128xf32> to vector<1x32xf32>
    %414 = vector.shape_cast %413 : vector<1x32xf32> to vector<32xf32>
    %415 = vector.extract_strided_slice %0 {offsets = [53, 0], sizes = [1, 32], strides = [1, 1]} : vector<56x128xf32> to vector<1x32xf32>
    %416 = vector.shape_cast %415 : vector<1x32xf32> to vector<32xf32>
    %cst_90 = arith.constant dense<0.000000e+00> : vector<2x32xf32>
    %417 = vector.multi_reduction <add>, %412, %cst_90 [2] : vector<2x32x32xf32> to vector<2x32xf32>
    %418 = vector.shape_cast %417 : vector<2x32xf32> to vector<2x32x1xf32>
    %cst_91 = arith.constant 3.200000e+01 : f32
    %419 = vector.broadcast %cst_91 : f32 to vector<2x32x1xf32>
    %420 = arith.divf %418, %419 : vector<2x32x1xf32>
    %421 = vector.broadcast %420 : vector<2x32x1xf32> to vector<2x32x32xf32>
    %422 = arith.subf %412, %421 : vector<2x32x32xf32>
    %423 = arith.mulf %422, %422 : vector<2x32x32xf32>
    %cst_92 = arith.constant dense<0.000000e+00> : vector<2x32xf32>
    %424 = vector.multi_reduction <add>, %423, %cst_92 [2] : vector<2x32x32xf32> to vector<2x32xf32>
    %425 = vector.shape_cast %424 : vector<2x32xf32> to vector<2x32x1xf32>
    %cst_93 = arith.constant 3.200000e+01 : f32
    %426 = vector.broadcast %cst_93 : f32 to vector<2x32x1xf32>
    %427 = arith.divf %425, %426 : vector<2x32x1xf32>
    %428 = vector.broadcast %420 : vector<2x32x1xf32> to vector<2x32x32xf32>
    %429 = arith.subf %412, %428 : vector<2x32x32xf32>
    %cst_94 = arith.constant 9.99999974E-6 : f32
    %430 = vector.broadcast %cst_94 : f32 to vector<2x32x1xf32>
    %431 = arith.addf %427, %430 : vector<2x32x1xf32>
    %432 = math.rsqrt %431 : vector<2x32x1xf32>
    %433 = vector.broadcast %432 : vector<2x32x1xf32> to vector<2x32x32xf32>
    %434 = arith.mulf %429, %433 : vector<2x32x32xf32>
    %435 = vector.shape_cast %414 : vector<32xf32> to vector<1x1x32xf32>
    %436 = vector.broadcast %435 : vector<1x1x32xf32> to vector<2x32x32xf32>
    %437 = arith.mulf %434, %436 : vector<2x32x32xf32>
    %438 = vector.shape_cast %416 : vector<32xf32> to vector<1x1x32xf32>
    %439 = vector.broadcast %438 : vector<1x1x32xf32> to vector<2x32x32xf32>
    %440 = arith.addf %437, %439 : vector<2x32x32xf32>
    %c272 = arith.constant 272 : index
    %c0_95 = arith.constant 0 : index
    %441 = vector.load %arg1[%c272, %c0_95] : memref<400x128xbf16, #tpu.memory_space<vmem>>, vector<32x64xbf16>
    %442 = arith.truncf %440 : vector<2x32x32xf32> to vector<2x32x32xbf16>
    %443 = vector.shape_cast %442 : vector<2x32x32xbf16> to vector<64x32xbf16>
    %cst_96 = arith.constant dense<0.000000e+00> : vector<64x64xf32>
    %444 = tpu.matmul %443, %441, %cst_96 {dimension_numbers = #tpu.dot_dimension_numbers<[1], [0], [0], [1], [0, 0, 1, 1], [], []>} : vector<64x32xbf16>, vector<32x64xbf16>, vector<64x64xf32> -> vector<64x64xf32>
    %445 = vector.shape_cast %444 : vector<64x64xf32> to vector<2x32x64xf32>
    %446 = vector.extract_strided_slice %0 {offsets = [54, 0], sizes = [1, 64], strides = [1, 1]} : vector<56x128xf32> to vector<1x64xf32>
    %447 = vector.shape_cast %446 : vector<1x64xf32> to vector<64xf32>
    %448 = vector.shape_cast %447 : vector<64xf32> to vector<1x1x64xf32>
    %449 = vector.broadcast %448 : vector<1x1x64xf32> to vector<2x32x64xf32>
    %450 = arith.addf %445, %449 : vector<2x32x64xf32>
    %cst_97 = arith.constant 5.000000e-01 : f32
    %451 = vector.broadcast %cst_97 : f32 to vector<2x32x64xf32>
    %452 = arith.mulf %451, %450 : vector<2x32x64xf32>
    %cst_98 = arith.constant 0.707106769 : f32
    %453 = vector.broadcast %cst_98 : f32 to vector<2x32x64xf32>
    %454 = arith.mulf %450, %453 : vector<2x32x64xf32>
    %455 = math.absf %454 : vector<2x32x64xf32>
    %cst_99 = arith.constant 0.327591091 : f32
    %456 = vector.broadcast %cst_99 : f32 to vector<2x32x64xf32>
    %457 = arith.mulf %456, %455 : vector<2x32x64xf32>
    %cst_100 = arith.constant 1.000000e+00 : f32
    %458 = vector.broadcast %cst_100 : f32 to vector<2x32x64xf32>
    %459 = arith.addf %458, %457 : vector<2x32x64xf32>
    %cst_101 = arith.constant 1.000000e+00 : f32
    %460 = vector.broadcast %cst_101 : f32 to vector<2x32x64xf32>
    %461 = arith.divf %460, %459 : vector<2x32x64xf32>
    %cst_102 = arith.constant 1.06140542 : f32
    %462 = vector.broadcast %cst_102 : f32 to vector<2x32x64xf32>
    %463 = arith.mulf %462, %461 : vector<2x32x64xf32>
    %cst_103 = arith.constant -1.45315206 : f32
    %464 = vector.broadcast %cst_103 : f32 to vector<2x32x64xf32>
    %465 = arith.addf %463, %464 : vector<2x32x64xf32>
    %466 = arith.mulf %465, %461 : vector<2x32x64xf32>
    %cst_104 = arith.constant 1.42141378 : f32
    %467 = vector.broadcast %cst_104 : f32 to vector<2x32x64xf32>
    %468 = arith.addf %466, %467 : vector<2x32x64xf32>
    %469 = arith.mulf %468, %461 : vector<2x32x64xf32>
    %cst_105 = arith.constant -0.284496725 : f32
    %470 = vector.broadcast %cst_105 : f32 to vector<2x32x64xf32>
    %471 = arith.addf %469, %470 : vector<2x32x64xf32>
    %472 = arith.mulf %471, %461 : vector<2x32x64xf32>
    %cst_106 = arith.constant 0.254829586 : f32
    %473 = vector.broadcast %cst_106 : f32 to vector<2x32x64xf32>
    %474 = arith.addf %472, %473 : vector<2x32x64xf32>
    %475 = arith.mulf %474, %461 : vector<2x32x64xf32>
    %476 = arith.mulf %455, %455 : vector<2x32x64xf32>
    %cst_107 = arith.constant 0.000000e+00 : f32
    %477 = vector.broadcast %cst_107 : f32 to vector<2x32x64xf32>
    %478 = arith.subf %477, %476 : vector<2x32x64xf32>
    %479 = math.exp %478 : vector<2x32x64xf32>
    %480 = arith.mulf %475, %479 : vector<2x32x64xf32>
    %cst_108 = arith.constant 1.000000e+00 : f32
    %481 = vector.broadcast %cst_108 : f32 to vector<2x32x64xf32>
    %482 = arith.subf %481, %480 : vector<2x32x64xf32>
    %cst_109 = arith.constant 0.000000e+00 : f32
    %483 = vector.broadcast %cst_109 : f32 to vector<2x32x64xf32>
    %484 = arith.cmpf olt, %454, %483 : vector<2x32x64xf32>
    %cst_110 = arith.constant 0.000000e+00 : f32
    %485 = vector.broadcast %cst_110 : f32 to vector<2x32x64xf32>
    %486 = arith.subf %485, %482 : vector<2x32x64xf32>
    %487 = arith.select %484, %486, %482 : vector<2x32x64xi1>, vector<2x32x64xf32>
    %cst_111 = arith.constant 1.000000e+00 : f32
    %488 = vector.broadcast %cst_111 : f32 to vector<2x32x64xf32>
    %489 = arith.addf %488, %487 : vector<2x32x64xf32>
    %490 = arith.mulf %452, %489 : vector<2x32x64xf32>
    %c304 = arith.constant 304 : index
    %c0_112 = arith.constant 0 : index
    %491 = vector.load %arg1[%c304, %c0_112] : memref<400x128xbf16, #tpu.memory_space<vmem>>, vector<64x32xbf16>
    %492 = arith.truncf %490 : vector<2x32x64xf32> to vector<2x32x64xbf16>
    %493 = vector.shape_cast %492 : vector<2x32x64xbf16> to vector<64x64xbf16>
    %cst_113 = arith.constant dense<0.000000e+00> : vector<64x32xf32>
    %494 = tpu.matmul %493, %491, %cst_113 {dimension_numbers = #tpu.dot_dimension_numbers<[1], [0], [0], [1], [0, 0, 1, 1], [], []>} : vector<64x64xbf16>, vector<64x32xbf16>, vector<64x32xf32> -> vector<64x32xf32>
    %495 = vector.shape_cast %494 : vector<64x32xf32> to vector<2x32x32xf32>
    %496 = vector.extract_strided_slice %0 {offsets = [55, 0], sizes = [1, 32], strides = [1, 1]} : vector<56x128xf32> to vector<1x32xf32>
    %497 = vector.shape_cast %496 : vector<1x32xf32> to vector<32xf32>
    %498 = vector.shape_cast %497 : vector<32xf32> to vector<1x1x32xf32>
    %499 = vector.broadcast %498 : vector<1x1x32xf32> to vector<2x32x32xf32>
    %500 = arith.addf %495, %499 : vector<2x32x32xf32>
    %501 = arith.addf %412, %500 : vector<2x32x32xf32>
    %502 = vector.extract_strided_slice %501 {offsets = [0, 0, 0], sizes = [2, 1, 32], strides = [1, 1, 1]} : vector<2x32x32xf32> to vector<2x1x32xf32>
    %503 = vector.shape_cast %502 : vector<2x1x32xf32> to vector<2x32xf32>
    %504 = vector.extract_strided_slice %0 {offsets = [2, 0], sizes = [1, 32], strides = [1, 1]} : vector<56x128xf32> to vector<1x32xf32>
    %505 = vector.shape_cast %504 : vector<1x32xf32> to vector<32xf32>
    %506 = vector.extract_strided_slice %0 {offsets = [3, 0], sizes = [1, 32], strides = [1, 1]} : vector<56x128xf32> to vector<1x32xf32>
    %507 = vector.shape_cast %506 : vector<1x32xf32> to vector<32xf32>
    %cst_114 = arith.constant dense<0.000000e+00> : vector<2xf32>
    %508 = vector.multi_reduction <add>, %503, %cst_114 [1] : vector<2x32xf32> to vector<2xf32>
    %509 = vector.shape_cast %508 : vector<2xf32> to vector<2x1xf32>
    %cst_115 = arith.constant 3.200000e+01 : f32
    %510 = vector.broadcast %cst_115 : f32 to vector<2x1xf32>
    %511 = arith.divf %509, %510 : vector<2x1xf32>
    %512 = vector.broadcast %511 : vector<2x1xf32> to vector<2x32xf32>
    %513 = arith.subf %503, %512 : vector<2x32xf32>
    %514 = arith.mulf %513, %513 : vector<2x32xf32>
    %cst_116 = arith.constant dense<0.000000e+00> : vector<2xf32>
    %515 = vector.multi_reduction <add>, %514, %cst_116 [1] : vector<2x32xf32> to vector<2xf32>
    %516 = vector.shape_cast %515 : vector<2xf32> to vector<2x1xf32>
    %cst_117 = arith.constant 3.200000e+01 : f32
    %517 = vector.broadcast %cst_117 : f32 to vector<2x1xf32>
    %518 = arith.divf %516, %517 : vector<2x1xf32>
    %519 = vector.broadcast %511 : vector<2x1xf32> to vector<2x32xf32>
    %520 = arith.subf %503, %519 : vector<2x32xf32>
    %cst_118 = arith.constant 9.99999974E-6 : f32
    %521 = vector.broadcast %cst_118 : f32 to vector<2x1xf32>
    %522 = arith.addf %518, %521 : vector<2x1xf32>
    %523 = math.rsqrt %522 : vector<2x1xf32>
    %524 = vector.broadcast %523 : vector<2x1xf32> to vector<2x32xf32>
    %525 = arith.mulf %520, %524 : vector<2x32xf32>
    %526 = vector.shape_cast %505 : vector<32xf32> to vector<1x32xf32>
    %527 = vector.broadcast %526 : vector<1x32xf32> to vector<2x32xf32>
    %528 = arith.mulf %525, %527 : vector<2x32xf32>
    %529 = vector.shape_cast %507 : vector<32xf32> to vector<1x32xf32>
    %530 = vector.broadcast %529 : vector<1x32xf32> to vector<2x32xf32>
    %531 = arith.addf %528, %530 : vector<2x32xf32>
    %c368 = arith.constant 368 : index
    %c0_119 = arith.constant 0 : index
    %532 = vector.load %arg1[%c368, %c0_119] : memref<400x128xbf16, #tpu.memory_space<vmem>>, vector<32x10xbf16>
    %533 = arith.truncf %531 : vector<2x32xf32> to vector<2x32xbf16>
    %cst_120 = arith.constant dense<0.000000e+00> : vector<2x10xf32>
    %534 = tpu.matmul %533, %532, %cst_120 {dimension_numbers = #tpu.dot_dimension_numbers<[1], [0], [0], [1], [0, 0, 1, 1], [], []>} : vector<2x32xbf16>, vector<32x10xbf16>, vector<2x10xf32> -> vector<2x10xf32>
    %535 = vector.extract_strided_slice %0 {offsets = [4, 0], sizes = [1, 10], strides = [1, 1]} : vector<56x128xf32> to vector<1x10xf32>
    %536 = vector.shape_cast %535 : vector<1x10xf32> to vector<10xf32>
    %537 = vector.shape_cast %536 : vector<10xf32> to vector<1x10xf32>
    %538 = vector.broadcast %537 : vector<1x10xf32> to vector<2x10xf32>
    %539 = arith.addf %534, %538 : vector<2x10xf32>
    %c0_121 = arith.constant 0 : index
    %c0_122 = arith.constant 0 : index
    %540 = vector.load %arg3[%c0_121, %c0_122] : memref<2x10xf32, #tpu.memory_space<vmem>>, vector<2x10xf32>
    tpu.vector_store %arg3[%c0_121, %c0_122], %539 {strides = array<i32>} : memref<2x10xf32, #tpu.memory_space<vmem>>, vector<2x10xf32>,
    return
  }
}

</mosaic_0001>

<llo_original>
// kernel: vit_forward.1
$region0: #{vit_forward.1}
  #allocation0 [shape = 'u32[]', space=smem, size = 0x4, offset = 0x4, fixed_abs, tag = 'smem constant byte address 0x4 - core index']
  #allocation1 [shape = 'u32[72,128]{1,0:T(1,128)}', space=vmem, size = 0x9000, scoped, tag = 'internal scratch']
  %s0 = inlined_call_operand.vmem [shape: f32[2,32,48], index: 0, kind: input, shape index: {}]
  %s1 = inlined_call_operand.vmem [shape: bf16[400,128], index: 1, kind: input, shape index: {}]
  %s2 = inlined_call_operand.vmem [shape: f32[56,128], index: 2, kind: input, shape index: {}]
  %s3 = inlined_call_operand.hbm [shape: f32[2,10], index: 3, kind: output, shape index: {}]
  %s4 = sld [smem:[#allocation0]]
  $region22: #{vit_forward.1} parent=0
    _
  %s6 = ssub.s32 1, %s4
  %s7 = scalar_select 0, %s6, %s4
  $region1: #{vit_forward.1} parent=0
    #allocation2 [shape = 'u8[1024]{0}', space=vmem, size = 0x400, scoped, tag = 'output window, operand 0, single buffered']
    #allocation3 [shape = 's32[1]{0}', space=sflag, size = 0x4, scoped, tag = 'scoped memory for vit_forward.1']
    %8 = vsyncpa [#allocation3], 0
    // Predicated region
    $region2: #{vit_forward.1} parent=1 // pred_check
      _
    $region3: #{vit_forward.1} parent=1 // pred_check_branch
      %10 = sbr.rel (0) target = $region5
    $region4: #{vit_forward.1} parent=1 // pred_region
      _
    $region5: #{vit_forward.1} parent=1 // pred_fallthru
      _
    // Predicated region
    $region6: #{vit_forward.1} parent=1 // pred_check
      _
    $region7: #{vit_forward.1} parent=1 // pred_check_branch
      %12 = sbr.rel (0) target = $region9
    $region8: #{vit_forward.1} parent=1 // pred_region
      _
    $region9: #{vit_forward.1} parent=1 // pred_fallthru
      _
    // Predicated region
    $region10: #{vit_forward.1} parent=1 // pred_check
      _
    $region11: #{vit_forward.1} parent=1 // pred_check_branch
      %14 = sbr.rel (0) target = $region13
    $region12: #{vit_forward.1} parent=1 // pred_region
      _
    $region13: #{vit_forward.1} parent=1 // pred_fallthru
      _
    %v16 = vld [vmem:[%s2] sm:$0xff]
    %v17 = vld [vmem:[%s2 + $0x8] sm:$0xff]
    %v18 = vld [vmem:[%s2 + $0x10] sm:$0xff]
    %v19 = vld [vmem:[%s2 + $0x18] sm:$0xff]
    %v20 = vld [vmem:[%s2 + $0x20] sm:$0xff]
    %v21 = vld [vmem:[%s2 + $0x28] sm:$0xff]
    %v22 = vld [vmem:[%s2 + $0x30] sm:$0xff]
    %v23 = vlaneseq
    %v24 = vand.u32 %v23, 127
    %vm25 = vcmp.ge.s32.totalorder %v24, 17
    %v26 = vsel %vm25, -1e+30, 0.0
    %v27 = vld [vmem:[%s1] sm:$0xf]
    %v28 = vld [vmem:[%s1 + $0x4] sm:$0xf]
    %v29 = vld [vmem:[%s1 + $0x8] sm:$0xf]
    %v30 = vld [vmem:[%s1 + $0xc] sm:$0xf]
    %v31 = vld [vmem:[%s1 + $0x10] sm:$0xf]
    %v32 = vld [vmem:[%s1 + $0x14] sm:$0xf]
    %v33 = vld [vmem:[%s0] sm:$0xff]
    %v34 = vld [vmem:[%s0 + $0x8] sm:$0xff]
    %v35 = vld [vmem:[%s0 + $0x10] sm:$0xff]
    %v36 = vld [vmem:[%s0 + $0x18] sm:$0xff]
    %v37 = vld [vmem:[%s0 + $0x20] sm:$0xff]
    %v38 = vld [vmem:[%s0 + $0x28] sm:$0xff]
    %v39 = vld [vmem:[%s0 + $0x30] sm:$0xff]
    %v40 = vld [vmem:[%s0 + $0x38] sm:$0xff]
    %v41 = vpack.c.bf16 %v33, %v33
    %v42 = vpack.c.bf16 %v34, %v34
    %v43 = vpack.c.bf16 %v35, %v35
    %v44 = vpack.c.bf16 %v36, %v36
    %v45 = vpack.c.bf16 %v37, %v37
    %v46 = vpack.c.bf16 %v38, %v38
    %v47 = vpack.c.bf16 %v39, %v39
    %v48 = vpack.c.bf16 %v40, %v40
    %v57 = vunpack.c.l.b16 %v41
    %v58 = vunpack.c.l.b16 %v42
    %v59 = vunpack.c.l.b16 %v43
    %v60 = vunpack.c.l.b16 %v44
    %v61 = vunpack.c.l.b16 %v45
    %v62 = vunpack.c.l.b16 %v46
    %v63 = vunpack.c.l.b16 %v47
    %v64 = vunpack.c.l.b16 %v48
    %v65 = vpack.c.b16 %v58, %v57
    %v66 = vpack.c.b16 %v60, %v59
    %v67 = vpack.c.b16 %v62, %v61
    %v68 = vpack.c.b16 %v64, %v63
    %v75 = vunpack.c.l.b16 %v27
    %v76 = vunpack.c.l.b16 %v28
    %v77 = vunpack.c.l.b16 %v29
    %v78 = vunpack.c.l.b16 %v30
    %v79 = vunpack.c.l.b16 %v31
    %v80 = vunpack.c.l.b16 %v32
    %v81 = vpack.c.b16 %v76, %v75
    %v82 = vpack.c.b16 %v78, %v77
    %v83 = vpack.c.b16 %v80, %v79
    %vm87 = vcmask 392192
    %v89 = vsel %vm87, %v65, 0
    %v92 = vsel %vm87, %v66, 0
    %v95 = vsel %vm87, %v67, 0
    %v98 = vsel %vm87, %v68, 0
    %100 = vmatpush.bf16.msra.mxu0 0
    %101 = vmatpush.bf16.msra.mxu0 0
    %102 = vmatpush.bf16.msra.mxu0 0
    %103 = vmatpush.bf16.msra.mxu0 0
    %104 = vmatpush.bf16.msra.mxu0 0
    %105 = vmatpush.bf16.msra.mxu0 %v83
    %106 = vmatpush.bf16.msra.mxu0 %v82
    %107 = vmatpush.bf16.msra.mxu0 %v81
    %108 = vmatmul.bf16.gmra.mxu0 %v89
    %v109 = vpop.f32.mrf.mxu0
    %v110 = vadd.f32 0.0, %v109
    %v111 = vpop.f32.mrf.mxu0
    %v112 = vadd.f32 0.0, %v111
    %113 = vmatmul.bf16.gmra.mxu0 %v92
    %v114 = vpop.f32.mrf.mxu0
    %v115 = vadd.f32 0.0, %v114
    %v116 = vpop.f32.mrf.mxu0
    %v117 = vadd.f32 0.0, %v116
    %118 = vmatmul.bf16.gmra.mxu0 %v95
    %v119 = vpop.f32.mrf.mxu0
    %v120 = vadd.f32 0.0, %v119
    %v121 = vpop.f32.mrf.mxu0
    %v122 = vadd.f32 0.0, %v121
    %123 = vmatmul.bf16.gmra.mxu0 %v98
    %v124 = vpop.f32.mrf.mxu0
    %v125 = vadd.f32 0.0, %v124
    %v126 = vpop.f32.mrf.mxu0
    %v127 = vadd.f32 0.0, %v126
    %128 = vdwg.mxu0
    %v129 = vperm.slane %v16, 0
    %v130 = vadd.f32 %v110, %v129
    %v131 = vadd.f32 %v112, %v129
    %v132 = vadd.f32 %v115, %v129
    %v133 = vadd.f32 %v117, %v129
    %v134 = vadd.f32 %v120, %v129
    %v135 = vadd.f32 %v122, %v129
    %v136 = vadd.f32 %v125, %v129
    %v137 = vadd.f32 %v127, %v129
    %v138 = vlaneseq
    %v139 = vshrl.u32 %v138, 7
    %v140 = vadd.s32 %v139, 8
    %v141 = vadd.s32 %v139, 16
    %v142 = vadd.s32 %v139, 24
    %vm143 = vcmp.eq.s32.totalorder %v139, 0
    %vm144 = vcmp.eq.s32.totalorder %v140, 0
    %vm145 = vcmp.eq.s32.totalorder %v141, 0
    %vm146 = vcmp.eq.s32.totalorder %v142, 0
    %v147 = vsel %vm143, 1, 0
    %v148 = vsel %vm144, 1, 0
    %v149 = vsel %vm145, 1, 0
    %v150 = vsel %vm146, 1, 0
    %vm151 = vcmp.eq.s32.totalorder %v147, 1
    %vm152 = vcmp.eq.s32.totalorder %v148, 1
    %vm153 = vcmp.eq.s32.totalorder %v149, 1
    %vm154 = vcmp.eq.s32.totalorder %v150, 1
    %v155 = vperm.slane %v16, 1
    %v156 = vsel %vm151, %v155, %v130
    %v157 = vsel %vm152, %v155, %v131
    %v158 = vsel %vm153, %v155, %v132
    %v159 = vsel %vm154, %v155, %v133
    %v160 = vsel %vm151, %v155, %v134
    %v161 = vsel %vm152, %v155, %v135
    %v162 = vsel %vm153, %v155, %v136
    %v163 = vsel %vm154, %v155, %v137
    %v164 = vadd.f32 %v156, %v17
    %v165 = vadd.f32 %v157, %v18
    %v166 = vadd.f32 %v158, %v19
    %v167 = vadd.f32 %v159, %v20
    %v168 = vadd.f32 %v160, %v17
    %v169 = vadd.f32 %v161, %v18
    %v170 = vadd.f32 %v162, %v19
    %v171 = vadd.f32 %v163, %v20
    %vm172 = vcmask 261120
    %v173 = vsel %vm172, %v164, 0.0
    %174 = vadd.xlane.f32.xlu0 %v173
    %v175 = vpop.xlane.xlu0 %174
    %v176 = vsel %vm172, %v165, 0.0
    %177 = vadd.xlane.f32.xlu0 %v176
    %v178 = vpop.xlane.xlu0 %177
    %v179 = vsel %vm172, %v166, 0.0
    %180 = vadd.xlane.f32.xlu0 %v179
    %v181 = vpop.xlane.xlu0 %180
    %v182 = vsel %vm172, %v167, 0.0
    %183 = vadd.xlane.f32.xlu0 %v182
    %v184 = vpop.xlane.xlu0 %183
    %v185 = vsel %vm172, %v168, 0.0
    %186 = vadd.xlane.f32.xlu0 %v185
    %v187 = vpop.xlane.xlu0 %186
    %v188 = vsel %vm172, %v169, 0.0
    %189 = vadd.xlane.f32.xlu0 %v188
    %v190 = vpop.xlane.xlu0 %189
    %v191 = vsel %vm172, %v170, 0.0
    %192 = vadd.xlane.f32.xlu0 %v191
    %v193 = vpop.xlane.xlu0 %192
    %v194 = vsel %vm172, %v171, 0.0
    %195 = vadd.xlane.f32.xlu0 %v194
    %v196 = vpop.xlane.xlu0 %195
    %v197 = vrcp.pop 32.0
    %v198 = vmul.f32 32.0, %v197
    %v199 = vsub.f32 1.0, %v198
    %v200 = vmul.f32 %v197, %v199
    %v201 = vadd.f32 %v197, %v200
    %vm202 = vweird.f32 %v197
    %v203 = vsel %vm202, %v197, %v201
    %v204 = vmul.f32 %v175, %v203
    %v205 = vmul.f32 %v178, %v203
    %v206 = vmul.f32 %v181, %v203
    %v207 = vmul.f32 %v184, %v203
    %v208 = vmul.f32 %v187, %v203
    %v209 = vmul.f32 %v190, %v203
    %v210 = vmul.f32 %v193, %v203
    %v211 = vmul.f32 %v196, %v203
    %v212 = vsub.f32 %v164, %v204
    %v213 = vsub.f32 %v165, %v205
    %v214 = vsub.f32 %v166, %v206
    %v215 = vsub.f32 %v167, %v207
    %v216 = vsub.f32 %v168, %v208
    %v217 = vsub.f32 %v169, %v209
    %v218 = vsub.f32 %v170, %v210
    %v219 = vsub.f32 %v171, %v211
    %v220 = vmul.f32 %v212, %v212
    %v221 = vmul.f32 %v213, %v213
    %v222 = vmul.f32 %v214, %v214
    %v223 = vmul.f32 %v215, %v215
    %v224 = vmul.f32 %v216, %v216
    %v225 = vmul.f32 %v217, %v217
    %v226 = vmul.f32 %v218, %v218
    %v227 = vmul.f32 %v219, %v219
    %v228 = vsel %vm172, %v220, 0.0
    %229 = vadd.xlane.f32.xlu0 %v228
    %v230 = vpop.xlane.xlu0 %229
    %v231 = vsel %vm172, %v221, 0.0
    %232 = vadd.xlane.f32.xlu0 %v231
    %v233 = vpop.xlane.xlu0 %232
    %v234 = vsel %vm172, %v222, 0.0
    %235 = vadd.xlane.f32.xlu0 %v234
    %v236 = vpop.xlane.xlu0 %235
    %v237 = vsel %vm172, %v223, 0.0
    %238 = vadd.xlane.f32.xlu0 %v237
    %v239 = vpop.xlane.xlu0 %238
    %v240 = vsel %vm172, %v224, 0.0
    %241 = vadd.xlane.f32.xlu0 %v240
    %v242 = vpop.xlane.xlu0 %241
    %v243 = vsel %vm172, %v225, 0.0
    %244 = vadd.xlane.f32.xlu0 %v243
    %v245 = vpop.xlane.xlu0 %244
    %v246 = vsel %vm172, %v226, 0.0
    %247 = vadd.xlane.f32.xlu0 %v246
    %v248 = vpop.xlane.xlu0 %247
    %v249 = vsel %vm172, %v227, 0.0
    %250 = vadd.xlane.f32.xlu0 %v249
    %v251 = vpop.xlane.xlu0 %250
    %v252 = vmul.f32 %v230, %v203
    %v253 = vmul.f32 %v233, %v203
    %v254 = vmul.f32 %v236, %v203
    %v255 = vmul.f32 %v239, %v203
    %v256 = vmul.f32 %v242, %v203
    %v257 = vmul.f32 %v245, %v203
    %v258 = vmul.f32 %v248, %v203
    %v259 = vmul.f32 %v251, %v203
    %v260 = vadd.f32 %v252, 1e-05
    %v261 = vadd.f32 %v253, 1e-05
    %v262 = vadd.f32 %v254, 1e-05
    %v263 = vadd.f32 %v255, 1e-05
    %v264 = vadd.f32 %v256, 1e-05
    %v265 = vadd.f32 %v257, 1e-05
    %v266 = vadd.f32 %v258, 1e-05
    %v267 = vadd.f32 %v259, 1e-05
    %v268 = vrsqrt.pop %v260
    %v269 = vmul.f32 %v268, %v260
    %v270 = vmul.f32 %v269, %v268
    %v271 = vmul.f32 0.5, %v270
    %v272 = vsub.f32 1.5, %v271
    %v273 = vmul.f32 %v268, %v272
    %vm274 = vweird.f32 %v260
    %vm275 = vweird.f32 %v268
    %vm276 = vmor %vm274, %vm275
    %v277 = vsel %vm276, %v268, %v273
    %v278 = vrsqrt.pop %v261
    %v279 = vmul.f32 %v278, %v261
    %v280 = vmul.f32 %v279, %v278
    %v281 = vmul.f32 0.5, %v280
    %v282 = vsub.f32 1.5, %v281
    %v283 = vmul.f32 %v278, %v282
    %vm284 = vweird.f32 %v261
    %vm285 = vweird.f32 %v278
    %vm286 = vmor %vm284, %vm285
    %v287 = vsel %vm286, %v278, %v283
    %v288 = vrsqrt.pop %v262
    %v289 = vmul.f32 %v288, %v262
    %v290 = vmul.f32 %v289, %v288
    %v291 = vmul.f32 0.5, %v290
    %v292 = vsub.f32 1.5, %v291
    %v293 = vmul.f32 %v288, %v292
    %vm294 = vweird.f32 %v262
    %vm295 = vweird.f32 %v288
    %vm296 = vmor %vm294, %vm295
    %v297 = vsel %vm296, %v288, %v293
    %v298 = vrsqrt.pop %v263
    %v299 = vmul.f32 %v298, %v263
    %v300 = vmul.f32 %v299, %v298
    %v301 = vmul.f32 0.5, %v300
    %v302 = vsub.f32 1.5, %v301
    %v303 = vmul.f32 %v298, %v302
    %vm304 = vweird.f32 %v263
    %vm305 = vweird.f32 %v298
    %vm306 = vmor %vm304, %vm305
    %v307 = vsel %vm306, %v298, %v303
    %v308 = vrsqrt.pop %v264
    %v309 = vmul.f32 %v308, %v264
    %v310 = vmul.f32 %v309, %v308
    %v311 = vmul.f32 0.5, %v310
    %v312 = vsub.f32 1.5, %v311
    %v313 = vmul.f32 %v308, %v312
    %vm314 = vweird.f32 %v264
    %vm315 = vweird.f32 %v308
    %vm316 = vmor %vm314, %vm315
    %v317 = vsel %vm316, %v308, %v313
    %v318 = vrsqrt.pop %v265
    %v319 = vmul.f32 %v318, %v265
    %v320 = vmul.f32 %v319, %v318
    %v321 = vmul.f32 0.5, %v320
    %v322 = vsub.f32 1.5, %v321
    %v323 = vmul.f32 %v318, %v322
    %vm324 = vweird.f32 %v265
    %vm325 = vweird.f32 %v318
    %vm326 = vmor %vm324, %vm325
    %v327 = vsel %vm326, %v318, %v323
    %v328 = vrsqrt.pop %v266
    %v329 = vmul.f32 %v328, %v266
    %v330 = vmul.f32 %v329, %v328
    %v331 = vmul.f32 0.5, %v330
    %v332 = vsub.f32 1.5, %v331
    %v333 = vmul.f32 %v328, %v332
    %vm334 = vweird.f32 %v266
    %vm335 = vweird.f32 %v328
    %vm336 = vmor %vm334, %vm335
    %v337 = vsel %vm336, %v328, %v333
    %v338 = vrsqrt.pop %v267
    %v339 = vmul.f32 %v338, %v267
    %v340 = vmul.f32 %v339, %v338
    %v341 = vmul.f32 0.5, %v340
    %v342 = vsub.f32 1.5, %v341
    %v343 = vmul.f32 %v338, %v342
    %vm344 = vweird.f32 %v267
    %vm345 = vweird.f32 %v338
    %vm346 = vmor %vm344, %vm345
    %v347 = vsel %vm346, %v338, %v343
    %v348 = vmul.f32 %v212, %v277
    %v349 = vmul.f32 %v213, %v287
    %v350 = vmul.f32 %v214, %v297
    %v351 = vmul.f32 %v215, %v307
    %v352 = vmul.f32 %v216, %v317
    %v353 = vmul.f32 %v217, %v327
    %v354 = vmul.f32 %v218, %v337
    %v355 = vmul.f32 %v219, %v347
    %v356 = vperm.slane %v21, 0
    %v357 = vmul.f32 %v348, %v356
    %v358 = vmul.f32 %v349, %v356
    %v359 = vmul.f32 %v350, %v356
    %v360 = vmul.f32 %v351, %v356
    %v361 = vmul.f32 %v352, %v356
    %v362 = vmul.f32 %v353, %v356
    %v363 = vmul.f32 %v354, %v356
    %v364 = vmul.f32 %v355, %v356
    %v365 = vperm.slane %v21, 1
    %v366 = vadd.f32 %v357, %v365
    %v367 = vadd.f32 %v358, %v365
    %v368 = vadd.f32 %v359, %v365
    %v369 = vadd.f32 %v360, %v365
    %v370 = vadd.f32 %v361, %v365
    %v371 = vadd.f32 %v362, %v365
    %v372 = vadd.f32 %v363, %v365
    %v373 = vadd.f32 %v364, %v365
    %v374 = vpack.c.bf16 %v366, %v366
    %v375 = vpack.c.bf16 %v367, %v367
    %v376 = vpack.c.bf16 %v368, %v368
    %v377 = vpack.c.bf16 %v369, %v369
    %v378 = vpack.c.bf16 %v370, %v370
    %v379 = vpack.c.bf16 %v371, %v371
    %v380 = vpack.c.bf16 %v372, %v372
    %v381 = vpack.c.bf16 %v373, %v373
    %v382 = vld [vmem:[%s1 + $0x18] sm:$0xf]
    %v383 = vld [vmem:[%s1 + $0x1c] sm:$0xf]
    %v384 = vld [vmem:[%s1 + $0x20] sm:$0xf]
    %v385 = vld [vmem:[%s1 + $0x24] sm:$0xf]
    %v394 = vunpack.c.l.b16 %v374
    %v395 = vunpack.c.l.b16 %v375
    %v396 = vunpack.c.l.b16 %v376
    %v397 = vunpack.c.l.b16 %v377
    %v398 = vunpack.c.l.b16 %v378
    %v399 = vunpack.c.l.b16 %v379
    %v400 = vunpack.c.l.b16 %v380
    %v401 = vunpack.c.l.b16 %v381
    %v402 = vpack.c.b16 %v395, %v394
    %v403 = vpack.c.b16 %v397, %v396
    %v404 = vpack.c.b16 %v399, %v398
    %v405 = vpack.c.b16 %v401, %v400
    %v410 = vunpack.c.l.b16 %v382
    %v411 = vunpack.c.l.b16 %v383
    %v412 = vunpack.c.l.b16 %v384
    %v413 = vunpack.c.l.b16 %v385
    %v414 = vpack.c.b16 %v411, %v410
    %v415 = vpack.c.b16 %v413, %v412
    %v419 = vsel %vm172, %v402, 0
    %v422 = vsel %vm172, %v403, 0
    %v425 = vsel %vm172, %v404, 0
    %v428 = vsel %vm172, %v405, 0
    %430 = vmatpush.bf16.msra.mxu0 0
    %431 = vmatpush.bf16.msra.mxu0 0
    %432 = vmatpush.bf16.msra.mxu0 0
    %433 = vmatpush.bf16.msra.mxu0 0
    %434 = vmatpush.bf16.msra.mxu0 0
    %435 = vmatpush.bf16.msra.mxu0 0
    %436 = vmatpush.bf16.msra.mxu0 %v415
    %437 = vmatpush.bf16.msra.mxu0 %v414
    %438 = vmatmul.bf16.gmra.mxu0 %v419
    %v439 = vpop.f32.mrf.mxu0
    %v440 = vadd.f32 0.0, %v439
    %v441 = vpop.f32.mrf.mxu0
    %v442 = vadd.f32 0.0, %v441
    %443 = vmatmul.bf16.gmra.mxu0 %v422
    %v444 = vpop.f32.mrf.mxu0
    %v445 = vadd.f32 0.0, %v444
    %v446 = vpop.f32.mrf.mxu0
    %v447 = vadd.f32 0.0, %v446
    %448 = vmatmul.bf16.gmra.mxu0 %v425
    %v449 = vpop.f32.mrf.mxu0
    %v450 = vadd.f32 0.0, %v449
    %v451 = vpop.f32.mrf.mxu0
    %v452 = vadd.f32 0.0, %v451
    %453 = vmatmul.bf16.gmra.mxu0 %v428
    %v454 = vpop.f32.mrf.mxu0
    %v455 = vadd.f32 0.0, %v454
    %v456 = vpop.f32.mrf.mxu0
    %v457 = vadd.f32 0.0, %v456
    %458 = vdwg.mxu0
    %v459 = vperm.slane %v21, 2
    %v460 = vadd.f32 %v440, %v459
    %v461 = vadd.f32 %v442, %v459
    %v462 = vadd.f32 %v445, %v459
    %v463 = vadd.f32 %v447, %v459
    %v464 = vadd.f32 %v450, %v459
    %v465 = vadd.f32 %v452, %v459
    %v466 = vadd.f32 %v455, %v459
    %v467 = vadd.f32 %v457, %v459
    %v468 = vpack.c.bf16 %v460, %v460
    %v469 = vpack.c.bf16 %v461, %v461
    %v470 = vpack.c.bf16 %v462, %v462
    %v471 = vpack.c.bf16 %v463, %v463
    %v472 = vpack.c.bf16 %v464, %v464
    %v473 = vpack.c.bf16 %v465, %v465
    %v474 = vpack.c.bf16 %v466, %v466
    %v475 = vpack.c.bf16 %v467, %v467
    %v480 = vunpack.c.l.b16 %v468
    %v481 = vunpack.c.l.b16 %v469
    %v482 = vunpack.c.l.b16 %v470
    %v483 = vunpack.c.l.b16 %v471
    %v484 = vpack.c.b16 %v481, %v480
    %v485 = vpack.c.b16 %v483, %v482
    %486 = vrot.lane.b32.xlu0 %v484, 96
    %v487 = vpop.permute.xlu0 %486
    %488 = vrot.lane.b32.xlu0 %v485, 96
    %v489 = vpop.permute.xlu0 %488
    %vm490 = vcmask 64512
    %v492 = vsel %vm490, %v484, 0
    %v495 = vsel %vm490, %v485, 0
    %v498 = vsel %vm490, %v487, 0
    %v501 = vsel %vm490, %v489, 0
    %503 = vmatpush.bf16.xpose.msra.mxu0 0
    %504 = vmatpush.bf16.xpose.msra.mxu0 0
    %505 = vmatpush.bf16.xpose.msra.mxu0 0
    %506 = vmatpush.bf16.xpose.msra.mxu0 0
    %507 = vmatpush.bf16.xpose.msra.mxu0 0
    %508 = vmatpush.bf16.xpose.msra.mxu0 0
    %509 = vmatpush.bf16.xpose.msra.mxu0 %v501
    %510 = vmatpush.bf16.xpose.msra.mxu0 %v498
    %511 = vmatmul.bf16.gmra.mxu0 %v492
    %v512 = vpop.f32.mrf.mxu0
    %v513 = vadd.f32 0.0, %v512
    %v514 = vpop.f32.mrf.mxu0
    %v515 = vadd.f32 0.0, %v514
    %516 = vmatmul.bf16.gmra.mxu0 %v495
    %v517 = vpop.f32.mrf.mxu0
    %v518 = vadd.f32 0.0, %v517
    %v519 = vpop.f32.mrf.mxu0
    %v520 = vadd.f32 0.0, %v519
    %521 = vdwg.mxu0
    %v526 = vunpack.c.l.b16 %v472
    %v527 = vunpack.c.l.b16 %v473
    %v528 = vunpack.c.l.b16 %v474
    %v529 = vunpack.c.l.b16 %v475
    %v530 = vpack.c.b16 %v527, %v526
    %v531 = vpack.c.b16 %v529, %v528
    %532 = vrot.lane.b32.xlu0 %v530, 96
    %v533 = vpop.permute.xlu0 %532
    %534 = vrot.lane.b32.xlu0 %v531, 96
    %v535 = vpop.permute.xlu0 %534
    %v537 = vsel %vm490, %v530, 0
    %v540 = vsel %vm490, %v531, 0
    %v543 = vsel %vm490, %v533, 0
    %v546 = vsel %vm490, %v535, 0
    %548 = vmatpush.bf16.xpose.msra.mxu0 0
    %549 = vmatpush.bf16.xpose.msra.mxu0 0
    %550 = vmatpush.bf16.xpose.msra.mxu0 0
    %551 = vmatpush.bf16.xpose.msra.mxu0 0
    %552 = vmatpush.bf16.xpose.msra.mxu0 0
    %553 = vmatpush.bf16.xpose.msra.mxu0 0
    %554 = vmatpush.bf16.xpose.msra.mxu0 %v546
    %555 = vmatpush.bf16.xpose.msra.mxu0 %v543
    %556 = vmatmul.bf16.gmra.mxu0 %v537
    %v557 = vpop.f32.mrf.mxu0
    %v558 = vadd.f32 0.0, %v557
    %v559 = vpop.f32.mrf.mxu0
    %v560 = vadd.f32 0.0, %v559
    %561 = vmatmul.bf16.gmra.mxu0 %v540
    %v562 = vpop.f32.mrf.mxu0
    %v563 = vadd.f32 0.0, %v562
    %v564 = vpop.f32.mrf.mxu0
    %v565 = vadd.f32 0.0, %v564
    %566 = vdwg.mxu0
    %v567 = vmul.f32 %v513, 0.35355338
    %v568 = vmul.f32 %v515, 0.35355338
    %v569 = vmul.f32 %v518, 0.35355338
    %v570 = vmul.f32 %v520, 0.35355338
    %v571 = vmul.f32 %v558, 0.35355338
    %v572 = vmul.f32 %v560, 0.35355338
    %v573 = vmul.f32 %v563, 0.35355338
    %v574 = vmul.f32 %v565, 0.35355338
    %v575 = vadd.f32 %v567, %v26
    %v576 = vadd.f32 %v568, %v26
    %v577 = vadd.f32 %v569, %v26
    %v578 = vadd.f32 %v570, %v26
    %v579 = vadd.f32 %v571, %v26
    %v580 = vadd.f32 %v572, %v26
    %v581 = vadd.f32 %v573, %v26
    %v582 = vadd.f32 %v574, %v26
    %v583 = vsel %vm172, %v575, -inf
    %584 = vmax.xlane.f32.xlu0 %v583
    %v585 = vpop.xlane.xlu0 %584
    %v586 = vsel %vm172, %v576, -inf
    %587 = vmax.xlane.f32.xlu0 %v586
    %v588 = vpop.xlane.xlu0 %587
    %v589 = vsel %vm172, %v577, -inf
    %590 = vmax.xlane.f32.xlu0 %v589
    %v591 = vpop.xlane.xlu0 %590
    %v592 = vsel %vm172, %v578, -inf
    %593 = vmax.xlane.f32.xlu0 %v592
    %v594 = vpop.xlane.xlu0 %593
    %v595 = vsel %vm172, %v579, -inf
    %596 = vmax.xlane.f32.xlu0 %v595
    %v597 = vpop.xlane.xlu0 %596
    %v598 = vsel %vm172, %v580, -inf
    %599 = vmax.xlane.f32.xlu0 %v598
    %v600 = vpop.xlane.xlu0 %599
    %v601 = vsel %vm172, %v581, -inf
    %602 = vmax.xlane.f32.xlu0 %v601
    %v603 = vpop.xlane.xlu0 %602
    %v604 = vsel %vm172, %v582, -inf
    %605 = vmax.xlane.f32.xlu0 %v604
    %v606 = vpop.xlane.xlu0 %605
    %v607 = vsub.f32 %v575, %v585
    %v608 = vsub.f32 %v576, %v588
    %v609 = vsub.f32 %v577, %v591
    %v610 = vsub.f32 %v578, %v594
    %v611 = vsub.f32 %v579, %v597
    %v612 = vsub.f32 %v580, %v600
    %v613 = vsub.f32 %v581, %v603
    %v614 = vsub.f32 %v582, %v606
    %v615 = vmul.f32 %v607, 1.442695
    %v616 = vpow.pop %v615
    %v617 = vmul.f32 %v608, 1.442695
    %v618 = vpow.pop %v617
    %v619 = vmul.f32 %v609, 1.442695
    %v620 = vpow.pop %v619
    %v621 = vmul.f32 %v610, 1.442695
    %v622 = vpow.pop %v621
    %v623 = vmul.f32 %v611, 1.442695
    %v624 = vpow.pop %v623
    %v625 = vmul.f32 %v612, 1.442695
    %v626 = vpow.pop %v625
    %v627 = vmul.f32 %v613, 1.442695
    %v628 = vpow.pop %v627
    %v629 = vmul.f32 %v614, 1.442695
    %v630 = vpow.pop %v629
    %v631 = vsel %vm172, %v616, 0.0
    %632 = vadd.xlane.f32.xlu0 %v631
    %v633 = vpop.xlane.xlu0 %632
    %v634 = vsel %vm172, %v618, 0.0
    %635 = vadd.xlane.f32.xlu0 %v634
    %v636 = vpop.xlane.xlu0 %635
    %v637 = vsel %vm172, %v620, 0.0
    %638 = vadd.xlane.f32.xlu0 %v637
    %v639 = vpop.xlane.xlu0 %638
    %v640 = vsel %vm172, %v622, 0.0
    %641 = vadd.xlane.f32.xlu0 %v640
    %v642 = vpop.xlane.xlu0 %641
    %v643 = vsel %vm172, %v624, 0.0
    %644 = vadd.xlane.f32.xlu0 %v643
    %v645 = vpop.xlane.xlu0 %644
    %v646 = vsel %vm172, %v626, 0.0
    %647 = vadd.xlane.f32.xlu0 %v646
    %v648 = vpop.xlane.xlu0 %647
    %v649 = vsel %vm172, %v628, 0.0
    %650 = vadd.xlane.f32.xlu0 %v649
    %v651 = vpop.xlane.xlu0 %650
    %v652 = vsel %vm172, %v630, 0.0
    %653 = vadd.xlane.f32.xlu0 %v652
    %v654 = vpop.xlane.xlu0 %653
    %v655 = vrcp.pop %v633
    %v656 = vrcp.pop %v636
    %v657 = vrcp.pop %v639
    %v658 = vrcp.pop %v642
    %v659 = vrcp.pop %v645
    %v660 = vrcp.pop %v648
    %v661 = vrcp.pop %v651
    %v662 = vrcp.pop %v654
    %v663 = vmul.f32 %v616, %v655
    %v664 = vmul.f32 %v618, %v656
    %v665 = vmul.f32 %v620, %v657
    %v666 = vmul.f32 %v622, %v658
    %v667 = vmul.f32 %v624, %v659
    %v668 = vmul.f32 %v626, %v660
    %v669 = vmul.f32 %v628, %v661
    %v670 = vmul.f32 %v630, %v662
    %v671 = vpack.c.bf16 %v663, %v663
    %v672 = vpack.c.bf16 %v664, %v664
    %v673 = vpack.c.bf16 %v665, %v665
    %v674 = vpack.c.bf16 %v666, %v666
    %v675 = vpack.c.bf16 %v667, %v667
    %v676 = vpack.c.bf16 %v668, %v668
    %v677 = vpack.c.bf16 %v669, %v669
    %v678 = vpack.c.bf16 %v670, %v670
    %v683 = vunpack.c.l.b16 %v671
    %v684 = vunpack.c.l.b16 %v672
    %v685 = vunpack.c.l.b16 %v673
    %v686 = vunpack.c.l.b16 %v674
    %v687 = vpack.c.b16 %v684, %v683
    %v688 = vpack.c.b16 %v686, %v685
    %689 = vrot.lane.b32.xlu0 %v484, 64
    %v690 = vpop.permute.xlu0 %689
    %691 = vrot.lane.b32.xlu0 %v485, 64
    %v692 = vpop.permute.xlu0 %691
    %v696 = vsel %vm172, %v687, 0
    %v699 = vsel %vm172, %v688, 0
    %701 = vmatpush.bf16.msra.mxu0 0
    %702 = vmatpush.bf16.msra.mxu0 0
    %703 = vmatpush.bf16.msra.mxu0 0
    %704 = vmatpush.bf16.msra.mxu0 0
    %705 = vmatpush.bf16.msra.mxu0 0
    %706 = vmatpush.bf16.msra.mxu0 0
    %707 = vmatpush.bf16.msra.mxu0 %v692
    %708 = vmatpush.bf16.msra.mxu0 %v690
    %709 = vmatmul.bf16.gmra.mxu0 %v696
    %v710 = vpop.f32.mrf.mxu0
    %v711 = vadd.f32 0.0, %v710
    %v712 = vpop.f32.mrf.mxu0
    %v713 = vadd.f32 0.0, %v712
    %714 = vmatmul.bf16.gmra.mxu0 %v699
    %v715 = vpop.f32.mrf.mxu0
    %v716 = vadd.f32 0.0, %v715
    %v717 = vpop.f32.mrf.mxu0
    %v718 = vadd.f32 0.0, %v717
    %719 = vdwg.mxu0
    %v724 = vunpack.c.l.b16 %v675
    %v725 = vunpack.c.l.b16 %v676
    %v726 = vunpack.c.l.b16 %v677
    %v727 = vunpack.c.l.b16 %v678
    %v728 = vpack.c.b16 %v725, %v724
    %v729 = vpack.c.b16 %v727, %v726
    %730 = vrot.lane.b32.xlu0 %v530, 64
    %v731 = vpop.permute.xlu0 %730
    %732 = vrot.lane.b32.xlu0 %v531, 64
    %v733 = vpop.permute.xlu0 %732
    %v737 = vsel %vm172, %v728, 0
    %v740 = vsel %vm172, %v729, 0
    %742 = vmatpush.bf16.msra.mxu0 0
    %743 = vmatpush.bf16.msra.mxu0 0
    %744 = vmatpush.bf16.msra.mxu0 0
    %745 = vmatpush.bf16.msra.mxu0 0
    %746 = vmatpush.bf16.msra.mxu0 0
    %747 = vmatpush.bf16.msra.mxu0 0
    %748 = vmatpush.bf16.msra.mxu0 %v733
    %749 = vmatpush.bf16.msra.mxu0 %v731
    %750 = vmatmul.bf16.gmra.mxu0 %v737
    %v751 = vpop.f32.mrf.mxu0
    %v752 = vadd.f32 0.0, %v751
    %v753 = vpop.f32.mrf.mxu0
    %v754 = vadd.f32 0.0, %v753
    %755 = vmatmul.bf16.gmra.mxu0 %v740
    %v756 = vpop.f32.mrf.mxu0
    %v757 = vadd.f32 0.0, %v756
    %v758 = vpop.f32.mrf.mxu0
    %v759 = vadd.f32 0.0, %v758
    %760 = vdwg.mxu0
    %761 = vrot.lane.b32.xlu0 %v484, 120
    %v762 = vpop.permute.xlu0 %761
    %763 = vrot.lane.b32.xlu0 %v485, 120
    %v764 = vpop.permute.xlu0 %763
    %765 = vrot.lane.b32.xlu0 %v484, 88
    %v766 = vpop.permute.xlu0 %765
    %767 = vrot.lane.b32.xlu0 %v485, 88
    %v768 = vpop.permute.xlu0 %767
    %v770 = vsel %vm490, %v762, 0
    %v773 = vsel %vm490, %v764, 0
    %v776 = vsel %vm490, %v766, 0
    %v779 = vsel %vm490, %v768, 0
    %781 = vmatpush.bf16.xpose.msra.mxu0 0
    %782 = vmatpush.bf16.xpose.msra.mxu0 0
    %783 = vmatpush.bf16.xpose.msra.mxu0 0
    %784 = vmatpush.bf16.xpose.msra.mxu0 0
    %785 = vmatpush.bf16.xpose.msra.mxu0 0
    %786 = vmatpush.bf16.xpose.msra.mxu0 0
    %787 = vmatpush.bf16.xpose.msra.mxu0 %v779
    %788 = vmatpush.bf16.xpose.msra.mxu0 %v776
    %789 = vmatmul.bf16.gmra.mxu0 %v770
    %v790 = vpop.f32.mrf.mxu0
    %v791 = vadd.f32 0.0, %v790
    %v792 = vpop.f32.mrf.mxu0
    %v793 = vadd.f32 0.0, %v792
    %794 = vmatmul.bf16.gmra.mxu0 %v773
    %v795 = vpop.f32.mrf.mxu0
    %v796 = vadd.f32 0.0, %v795
    %v797 = vpop.f32.mrf.mxu0
    %v798 = vadd.f32 0.0, %v797
    %799 = vdwg.mxu0
    %800 = vrot.lane.b32.xlu0 %v530, 120
    %v801 = vpop.permute.xlu0 %800
    %802 = vrot.lane.b32.xlu0 %v531, 120
    %v803 = vpop.permute.xlu0 %802
    %804 = vrot.lane.b32.xlu0 %v530, 88
    %v805 = vpop.permute.xlu0 %804
    %806 = vrot.lane.b32.xlu0 %v531, 88
    %v807 = vpop.permute.xlu0 %806
    %v809 = vsel %vm490, %v801, 0
    %v812 = vsel %vm490, %v803, 0
    %v815 = vsel %vm490, %v805, 0
    %v818 = vsel %vm490, %v807, 0
    %820 = vmatpush.bf16.xpose.msra.mxu0 0
    %821 = vmatpush.bf16.xpose.msra.mxu0 0
    %822 = vmatpush.bf16.xpose.msra.mxu0 0
    %823 = vmatpush.bf16.xpose.msra.mxu0 0
    %824 = vmatpush.bf16.xpose.msra.mxu0 0
    %825 = vmatpush.bf16.xpose.msra.mxu0 0
    %826 = vmatpush.bf16.xpose.msra.mxu0 %v818
    %827 = vmatpush.bf16.xpose.msra.mxu0 %v815
    %828 = vmatmul.bf16.gmra.mxu0 %v809
    %v829 = vpop.f32.mrf.mxu0
    %v830 = vadd.f32 0.0, %v829
    %v831 = vpop.f32.mrf.mxu0
    %v832 = vadd.f32 0.0, %v831
    %833 = vmatmul.bf16.gmra.mxu0 %v812
    %v834 = vpop.f32.mrf.mxu0
    %v835 = vadd.f32 0.0, %v834
    %v836 = vpop.f32.mrf.mxu0
    %v837 = vadd.f32 0.0, %v836
    %838 = vdwg.mxu0
    %v839 = vmul.f32 %v791, 0.35355338
    %v840 = vmul.f32 %v793, 0.35355338
    %v841 = vmul.f32 %v796, 0.35355338
    %v842 = vmul.f32 %v798, 0.35355338
    %v843 = vmul.f32 %v830, 0.35355338
    %v844 = vmul.f32 %v832, 0.35355338
    %v845 = vmul.f32 %v835, 0.35355338
    %v846 = vmul.f32 %v837, 0.35355338
    %v847 = vadd.f32 %v839, %v26
    %v848 = vadd.f32 %v840, %v26
    %v849 = vadd.f32 %v841, %v26
    %v850 = vadd.f32 %v842, %v26
    %v851 = vadd.f32 %v843, %v26
    %v852 = vadd.f32 %v844, %v26
    %v853 = vadd.f32 %v845, %v26
    %v854 = vadd.f32 %v846, %v26
    %v855 = vsel %vm172, %v847, -inf
    %856 = vmax.xlane.f32.xlu0 %v855
    %v857 = vpop.xlane.xlu0 %856
    %v858 = vsel %vm172, %v848, -inf
    %859 = vmax.xlane.f32.xlu0 %v858
    %v860 = vpop.xlane.xlu0 %859
    %v861 = vsel %vm172, %v849, -inf
    %862 = vmax.xlane.f32.xlu0 %v861
    %v863 = vpop.xlane.xlu0 %862
    %v864 = vsel %vm172, %v850, -inf
    %865 = vmax.xlane.f32.xlu0 %v864
    %v866 = vpop.xlane.xlu0 %865
    %v867 = vsel %vm172, %v851, -inf
    %868 = vmax.xlane.f32.xlu0 %v867
    %v869 = vpop.xlane.xlu0 %868
    %v870 = vsel %vm172, %v852, -inf
    %871 = vmax.xlane.f32.xlu0 %v870
    %v872 = vpop.xlane.xlu0 %871
    %v873 = vsel %vm172, %v853, -inf
    %874 = vmax.xlane.f32.xlu0 %v873
    %v875 = vpop.xlane.xlu0 %874
    %v876 = vsel %vm172, %v854, -inf
    %877 = vmax.xlane.f32.xlu0 %v876
    %v878 = vpop.xlane.xlu0 %877
    %v879 = vsub.f32 %v847, %v857
    %v880 = vsub.f32 %v848, %v860
    %v881 = vsub.f32 %v849, %v863
    %v882 = vsub.f32 %v850, %v866
    %v883 = vsub.f32 %v851, %v869
    %v884 = vsub.f32 %v852, %v872
    %v885 = vsub.f32 %v853, %v875
    %v886 = vsub.f32 %v854, %v878
    %v887 = vmul.f32 %v879, 1.442695
    %v888 = vpow.pop %v887
    %v889 = vmul.f32 %v880, 1.442695
    %v890 = vpow.pop %v889
    %v891 = vmul.f32 %v881, 1.442695
    %v892 = vpow.pop %v891
    %v893 = vmul.f32 %v882, 1.442695
    %v894 = vpow.pop %v893
    %v895 = vmul.f32 %v883, 1.442695
    %v896 = vpow.pop %v895
    %v897 = vmul.f32 %v884, 1.442695
    %v898 = vpow.pop %v897
    %v899 = vmul.f32 %v885, 1.442695
    %v900 = vpow.pop %v899
    %v901 = vmul.f32 %v886, 1.442695
    %v902 = vpow.pop %v901
    %v903 = vsel %vm172, %v888, 0.0
    %904 = vadd.xlane.f32.xlu0 %v903
    %v905 = vpop.xlane.xlu0 %904
    %v906 = vsel %vm172, %v890, 0.0
    %907 = vadd.xlane.f32.xlu0 %v906
    %v908 = vpop.xlane.xlu0 %907
    %v909 = vsel %vm172, %v892, 0.0
    %910 = vadd.xlane.f32.xlu0 %v909
    %v911 = vpop.xlane.xlu0 %910
    %v912 = vsel %vm172, %v894, 0.0
    %913 = vadd.xlane.f32.xlu0 %v912
    %v914 = vpop.xlane.xlu0 %913
    %v915 = vsel %vm172, %v896, 0.0
    %916 = vadd.xlane.f32.xlu0 %v915
    %v917 = vpop.xlane.xlu0 %916
    %v918 = vsel %vm172, %v898, 0.0
    %919 = vadd.xlane.f32.xlu0 %v918
    %v920 = vpop.xlane.xlu0 %919
    %v921 = vsel %vm172, %v900, 0.0
    %922 = vadd.xlane.f32.xlu0 %v921
    %v923 = vpop.xlane.xlu0 %922
    %v924 = vsel %vm172, %v902, 0.0
    %925 = vadd.xlane.f32.xlu0 %v924
    %v926 = vpop.xlane.xlu0 %925
    %v927 = vrcp.pop %v905
    %v928 = vrcp.pop %v908
    %v929 = vrcp.pop %v911
    %v930 = vrcp.pop %v914
    %v931 = vrcp.pop %v917
    %v932 = vrcp.pop %v920
    %v933 = vrcp.pop %v923
    %v934 = vrcp.pop %v926
    %v935 = vmul.f32 %v888, %v927
    %v936 = vmul.f32 %v890, %v928
    %v937 = vmul.f32 %v892, %v929
    %v938 = vmul.f32 %v894, %v930
    %v939 = vmul.f32 %v896, %v931
    %v940 = vmul.f32 %v898, %v932
    %v941 = vmul.f32 %v900, %v933
    %v942 = vmul.f32 %v902, %v934
    %v943 = vpack.c.bf16 %v935, %v935
    %v944 = vpack.c.bf16 %v936, %v936
    %v945 = vpack.c.bf16 %v937, %v937
    %v946 = vpack.c.bf16 %v938, %v938
    %v947 = vpack.c.bf16 %v939, %v939
    %v948 = vpack.c.bf16 %v940, %v940
    %v949 = vpack.c.bf16 %v941, %v941
    %v950 = vpack.c.bf16 %v942, %v942
    %v955 = vunpack.c.l.b16 %v943
    %v956 = vunpack.c.l.b16 %v944
    %v957 = vunpack.c.l.b16 %v945
    %v958 = vunpack.c.l.b16 %v946
    %v959 = vpack.c.b16 %v956, %v955
    %v960 = vpack.c.b16 %v958, %v957
    %961 = vrot.lane.b32.xlu0 %v484, 56
    %v962 = vpop.permute.xlu0 %961
    %963 = vrot.lane.b32.xlu0 %v485, 56
    %v964 = vpop.permute.xlu0 %963
    %v968 = vsel %vm172, %v959, 0
    %v971 = vsel %vm172, %v960, 0
    %973 = vmatpush.bf16.msra.mxu0 0
    %974 = vmatpush.bf16.msra.mxu0 0
    %975 = vmatpush.bf16.msra.mxu0 0
    %976 = vmatpush.bf16.msra.mxu0 0
    %977 = vmatpush.bf16.msra.mxu0 0
    %978 = vmatpush.bf16.msra.mxu0 0
    %979 = vmatpush.bf16.msra.mxu0 %v964
    %980 = vmatpush.bf16.msra.mxu0 %v962
    %981 = vmatmul.bf16.gmra.mxu0 %v968
    %v982 = vpop.f32.mrf.mxu0
    %v983 = vadd.f32 0.0, %v982
    %v984 = vpop.f32.mrf.mxu0
    %v985 = vadd.f32 0.0, %v984
    %986 = vmatmul.bf16.gmra.mxu0 %v971
    %v987 = vpop.f32.mrf.mxu0
    %v988 = vadd.f32 0.0, %v987
    %v989 = vpop.f32.mrf.mxu0
    %v990 = vadd.f32 0.0, %v989
    %991 = vdwg.mxu0
    %v996 = vunpack.c.l.b16 %v947
    %v997 = vunpack.c.l.b16 %v948
    %v998 = vunpack.c.l.b16 %v949
    %v999 = vunpack.c.l.b16 %v950
    %v1000 = vpack.c.b16 %v997, %v996
    %v1001 = vpack.c.b16 %v999, %v998
    %1002 = vrot.lane.b32.xlu0 %v530, 56
    %v1003 = vpop.permute.xlu0 %1002
    %1004 = vrot.lane.b32.xlu0 %v531, 56
    %v1005 = vpop.permute.xlu0 %1004
    %v1009 = vsel %vm172, %v1000, 0
    %v1012 = vsel %vm172, %v1001, 0
    %1014 = vmatpush.bf16.msra.mxu0 0
    %1015 = vmatpush.bf16.msra.mxu0 0
    %1016 = vmatpush.bf16.msra.mxu0 0
    %1017 = vmatpush.bf16.msra.mxu0 0
    %1018 = vmatpush.bf16.msra.mxu0 0
    %1019 = vmatpush.bf16.msra.mxu0 0
    %1020 = vmatpush.bf16.msra.mxu0 %v1005
    %1021 = vmatpush.bf16.msra.mxu0 %v1003
    %1022 = vmatmul.bf16.gmra.mxu0 %v1009
    %v1023 = vpop.f32.mrf.mxu0
    %v1024 = vadd.f32 0.0, %v1023
    %v1025 = vpop.f32.mrf.mxu0
    %v1026 = vadd.f32 0.0, %v1025
    %1027 = vmatmul.bf16.gmra.mxu0 %v1012
    %v1028 = vpop.f32.mrf.mxu0
    %v1029 = vadd.f32 0.0, %v1028
    %v1030 = vpop.f32.mrf.mxu0
    %v1031 = vadd.f32 0.0, %v1030
    %1032 = vdwg.mxu0
    %1033 = vrot.lane.b32.xlu0 %v484, 112
    %v1034 = vpop.permute.xlu0 %1033
    %1035 = vrot.lane.b32.xlu0 %v485, 112
    %v1036 = vpop.permute.xlu0 %1035
    %1037 = vrot.lane.b32.xlu0 %v484, 80
    %v1038 = vpop.permute.xlu0 %1037
    %1039 = vrot.lane.b32.xlu0 %v485, 80
    %v1040 = vpop.permute.xlu0 %1039
    %v1042 = vsel %vm490, %v1034, 0
    %v1045 = vsel %vm490, %v1036, 0
    %v1048 = vsel %vm490, %v1038, 0
    %v1051 = vsel %vm490, %v1040, 0
    %1053 = vmatpush.bf16.xpose.msra.mxu0 0
    %1054 = vmatpush.bf16.xpose.msra.mxu0 0
    %1055 = vmatpush.bf16.xpose.msra.mxu0 0
    %1056 = vmatpush.bf16.xpose.msra.mxu0 0
    %1057 = vmatpush.bf16.xpose.msra.mxu0 0
    %1058 = vmatpush.bf16.xpose.msra.mxu0 0
    %1059 = vmatpush.bf16.xpose.msra.mxu0 %v1051
    %1060 = vmatpush.bf16.xpose.msra.mxu0 %v1048
    %1061 = vmatmul.bf16.gmra.mxu0 %v1042
    %v1062 = vpop.f32.mrf.mxu0
    %v1063 = vadd.f32 0.0, %v1062
    %v1064 = vpop.f32.mrf.mxu0
    %v1065 = vadd.f32 0.0, %v1064
    %1066 = vmatmul.bf16.gmra.mxu0 %v1045
    %v1067 = vpop.f32.mrf.mxu0
    %v1068 = vadd.f32 0.0, %v1067
    %v1069 = vpop.f32.mrf.mxu0
    %v1070 = vadd.f32 0.0, %v1069
    %1071 = vdwg.mxu0
    %1072 = vrot.lane.b32.xlu0 %v530, 112
    %v1073 = vpop.permute.xlu0 %1072
    %1074 = vrot.lane.b32.xlu0 %v531, 112
    %v1075 = vpop.permute.xlu0 %1074
    %1076 = vrot.lane.b32.xlu0 %v530, 80
    %v1077 = vpop.permute.xlu0 %1076
    %1078 = vrot.lane.b32.xlu0 %v531, 80
    %v1079 = vpop.permute.xlu0 %1078
    %v1081 = vsel %vm490, %v1073, 0
    %v1084 = vsel %vm490, %v1075, 0
    %v1087 = vsel %vm490, %v1077, 0
    %v1090 = vsel %vm490, %v1079, 0
    %1092 = vmatpush.bf16.xpose.msra.mxu0 0
    %1093 = vmatpush.bf16.xpose.msra.mxu0 0
    %1094 = vmatpush.bf16.xpose.msra.mxu0 0
    %1095 = vmatpush.bf16.xpose.msra.mxu0 0
    %1096 = vmatpush.bf16.xpose.msra.mxu0 0
    %1097 = vmatpush.bf16.xpose.msra.mxu0 0
    %1098 = vmatpush.bf16.xpose.msra.mxu0 %v1090
    %1099 = vmatpush.bf16.xpose.msra.mxu0 %v1087
    %1100 = vmatmul.bf16.gmra.mxu0 %v1081
    %v1101 = vpop.f32.mrf.mxu0
    %v1102 = vadd.f32 0.0, %v1101
    %v1103 = vpop.f32.mrf.mxu0
    %v1104 = vadd.f32 0.0, %v1103
    %1105 = vmatmul.bf16.gmra.mxu0 %v1084
    %v1106 = vpop.f32.mrf.mxu0
    %v1107 = vadd.f32 0.0, %v1106
    %v1108 = vpop.f32.mrf.mxu0
    %v1109 = vadd.f32 0.0, %v1108
    %1110 = vdwg.mxu0
    %v1111 = vmul.f32 %v1063, 0.35355338
    %v1112 = vmul.f32 %v1065, 0.35355338
    %v1113 = vmul.f32 %v1068, 0.35355338
    %v1114 = vmul.f32 %v1070, 0.35355338
    %v1115 = vmul.f32 %v1102, 0.35355338
    %v1116 = vmul.f32 %v1104, 0.35355338
    %v1117 = vmul.f32 %v1107, 0.35355338
    %v1118 = vmul.f32 %v1109, 0.35355338
    %v1119 = vadd.f32 %v1111, %v26
    %v1120 = vadd.f32 %v1112, %v26
    %v1121 = vadd.f32 %v1113, %v26
    %v1122 = vadd.f32 %v1114, %v26
    %v1123 = vadd.f32 %v1115, %v26
    %v1124 = vadd.f32 %v1116, %v26
    %v1125 = vadd.f32 %v1117, %v26
    %v1126 = vadd.f32 %v1118, %v26
    %v1127 = vsel %vm172, %v1119, -inf
    %1128 = vmax.xlane.f32.xlu0 %v1127
    %v1129 = vpop.xlane.xlu0 %1128
    %v1130 = vsel %vm172, %v1120, -inf
    %1131 = vmax.xlane.f32.xlu0 %v1130
    %v1132 = vpop.xlane.xlu0 %1131
    %v1133 = vsel %vm172, %v1121, -inf
    %1134 = vmax.xlane.f32.xlu0 %v1133
    %v1135 = vpop.xlane.xlu0 %1134
    %v1136 = vsel %vm172, %v1122, -inf
    %1137 = vmax.xlane.f32.xlu0 %v1136
    %v1138 = vpop.xlane.xlu0 %1137
    %v1139 = vsel %vm172, %v1123, -inf
    %1140 = vmax.xlane.f32.xlu0 %v1139
    %v1141 = vpop.xlane.xlu0 %1140
    %v1142 = vsel %vm172, %v1124, -inf
    %1143 = vmax.xlane.f32.xlu0 %v1142
    %v1144 = vpop.xlane.xlu0 %1143
    %v1145 = vsel %vm172, %v1125, -inf
    %1146 = vmax.xlane.f32.xlu0 %v1145
    %v1147 = vpop.xlane.xlu0 %1146
    %v1148 = vsel %vm172, %v1126, -inf
    %1149 = vmax.xlane.f32.xlu0 %v1148
    %v1150 = vpop.xlane.xlu0 %1149
    %v1151 = vsub.f32 %v1119, %v1129
    %v1152 = vsub.f32 %v1120, %v1132
    %v1153 = vsub.f32 %v1121, %v1135
    %v1154 = vsub.f32 %v1122, %v1138
    %v1155 = vsub.f32 %v1123, %v1141
    %v1156 = vsub.f32 %v1124, %v1144
    %v1157 = vsub.f32 %v1125, %v1147
    %v1158 = vsub.f32 %v1126, %v1150
    %v1159 = vmul.f32 %v1151, 1.442695
    %v1160 = vpow.pop %v1159
    %v1161 = vmul.f32 %v1152, 1.442695
    %v1162 = vpow.pop %v1161
    %v1163 = vmul.f32 %v1153, 1.442695
    %v1164 = vpow.pop %v1163
    %v1165 = vmul.f32 %v1154, 1.442695
    %v1166 = vpow.pop %v1165
    %v1167 = vmul.f32 %v1155, 1.442695
    %v1168 = vpow.pop %v1167
    %v1169 = vmul.f32 %v1156, 1.442695
    %v1170 = vpow.pop %v1169
    %v1171 = vmul.f32 %v1157, 1.442695
    %v1172 = vpow.pop %v1171
    %v1173 = vmul.f32 %v1158, 1.442695
    %v1174 = vpow.pop %v1173
    %v1175 = vsel %vm172, %v1160, 0.0
    %1176 = vadd.xlane.f32.xlu0 %v1175
    %v1177 = vpop.xlane.xlu0 %1176
    %v1178 = vsel %vm172, %v1162, 0.0
    %1179 = vadd.xlane.f32.xlu0 %v1178
    %v1180 = vpop.xlane.xlu0 %1179
    %v1181 = vsel %vm172, %v1164, 0.0
    %1182 = vadd.xlane.f32.xlu0 %v1181
    %v1183 = vpop.xlane.xlu0 %1182
    %v1184 = vsel %vm172, %v1166, 0.0
    %1185 = vadd.xlane.f32.xlu0 %v1184
    %v1186 = vpop.xlane.xlu0 %1185
    %v1187 = vsel %vm172, %v1168, 0.0
    %1188 = vadd.xlane.f32.xlu0 %v1187
    %v1189 = vpop.xlane.xlu0 %1188
    %v1190 = vsel %vm172, %v1170, 0.0
    %1191 = vadd.xlane.f32.xlu0 %v1190
    %v1192 = vpop.xlane.xlu0 %1191
    %v1193 = vsel %vm172, %v1172, 0.0
    %1194 = vadd.xlane.f32.xlu0 %v1193
    %v1195 = vpop.xlane.xlu0 %1194
    %v1196 = vsel %vm172, %v1174, 0.0
    %1197 = vadd.xlane.f32.xlu0 %v1196
    %v1198 = vpop.xlane.xlu0 %1197
    %v1199 = vrcp.pop %v1177
    %v1200 = vrcp.pop %v1180
    %v1201 = vrcp.pop %v1183
    %v1202 = vrcp.pop %v1186
    %v1203 = vrcp.pop %v1189
    %v1204 = vrcp.pop %v1192
    %v1205 = vrcp.pop %v1195
    %v1206 = vrcp.pop %v1198
    %v1207 = vmul.f32 %v1160, %v1199
    %v1208 = vmul.f32 %v1162, %v1200
    %v1209 = vmul.f32 %v1164, %v1201
    %v1210 = vmul.f32 %v1166, %v1202
    %v1211 = vmul.f32 %v1168, %v1203
    %v1212 = vmul.f32 %v1170, %v1204
    %v1213 = vmul.f32 %v1172, %v1205
    %v1214 = vmul.f32 %v1174, %v1206
    %v1215 = vpack.c.bf16 %v1207, %v1207
    %v1216 = vpack.c.bf16 %v1208, %v1208
    %v1217 = vpack.c.bf16 %v1209, %v1209
    %v1218 = vpack.c.bf16 %v1210, %v1210
    %v1219 = vpack.c.bf16 %v1211, %v1211
    %v1220 = vpack.c.bf16 %v1212, %v1212
    %v1221 = vpack.c.bf16 %v1213, %v1213
    %v1222 = vpack.c.bf16 %v1214, %v1214
    %v1227 = vunpack.c.l.b16 %v1215
    %v1228 = vunpack.c.l.b16 %v1216
    %v1229 = vunpack.c.l.b16 %v1217
    %v1230 = vunpack.c.l.b16 %v1218
    %v1231 = vpack.c.b16 %v1228, %v1227
    %v1232 = vpack.c.b16 %v1230, %v1229
    %1233 = vrot.lane.b32.xlu0 %v484, 48
    %v1234 = vpop.permute.xlu0 %1233
    %1235 = vrot.lane.b32.xlu0 %v485, 48
    %v1236 = vpop.permute.xlu0 %1235
    %v1240 = vsel %vm172, %v1231, 0
    %v1243 = vsel %vm172, %v1232, 0
    %1245 = vmatpush.bf16.msra.mxu0 0
    %1246 = vmatpush.bf16.msra.mxu0 0
    %1247 = vmatpush.bf16.msra.mxu0 0
    %1248 = vmatpush.bf16.msra.mxu0 0
    %1249 = vmatpush.bf16.msra.mxu0 0
    %1250 = vmatpush.bf16.msra.mxu0 0
    %1251 = vmatpush.bf16.msra.mxu0 %v1236
    %1252 = vmatpush.bf16.msra.mxu0 %v1234
    %1253 = vmatmul.bf16.gmra.mxu0 %v1240
    %v1254 = vpop.f32.mrf.mxu0
    %v1255 = vadd.f32 0.0, %v1254
    %v1256 = vpop.f32.mrf.mxu0
    %v1257 = vadd.f32 0.0, %v1256
    %1258 = vmatmul.bf16.gmra.mxu0 %v1243
    %v1259 = vpop.f32.mrf.mxu0
    %v1260 = vadd.f32 0.0, %v1259
    %v1261 = vpop.f32.mrf.mxu0
    %v1262 = vadd.f32 0.0, %v1261
    %1263 = vdwg.mxu0
    %v1268 = vunpack.c.l.b16 %v1219
    %v1269 = vunpack.c.l.b16 %v1220
    %v1270 = vunpack.c.l.b16 %v1221
    %v1271 = vunpack.c.l.b16 %v1222
    %v1272 = vpack.c.b16 %v1269, %v1268
    %v1273 = vpack.c.b16 %v1271, %v1270
    %1274 = vrot.lane.b32.xlu0 %v530, 48
    %v1275 = vpop.permute.xlu0 %1274
    %1276 = vrot.lane.b32.xlu0 %v531, 48
    %v1277 = vpop.permute.xlu0 %1276
    %v1281 = vsel %vm172, %v1272, 0
    %v1284 = vsel %vm172, %v1273, 0
    %1286 = vmatpush.bf16.msra.mxu0 0
    %1287 = vmatpush.bf16.msra.mxu0 0
    %1288 = vmatpush.bf16.msra.mxu0 0
    %1289 = vmatpush.bf16.msra.mxu0 0
    %1290 = vmatpush.bf16.msra.mxu0 0
    %1291 = vmatpush.bf16.msra.mxu0 0
    %1292 = vmatpush.bf16.msra.mxu0 %v1277
    %1293 = vmatpush.bf16.msra.mxu0 %v1275
    %1294 = vmatmul.bf16.gmra.mxu0 %v1281
    %v1295 = vpop.f32.mrf.mxu0
    %v1296 = vadd.f32 0.0, %v1295
    %v1297 = vpop.f32.mrf.mxu0
    %v1298 = vadd.f32 0.0, %v1297
    %1299 = vmatmul.bf16.gmra.mxu0 %v1284
    %v1300 = vpop.f32.mrf.mxu0
    %v1301 = vadd.f32 0.0, %v1300
    %v1302 = vpop.f32.mrf.mxu0
    %v1303 = vadd.f32 0.0, %v1302
    %1304 = vdwg.mxu0
    %1305 = vrot.lane.b32.xlu0 %v484, 104
    %v1306 = vpop.permute.xlu0 %1305
    %1307 = vrot.lane.b32.xlu0 %v485, 104
    %v1308 = vpop.permute.xlu0 %1307
    %1309 = vrot.lane.b32.xlu0 %v484, 72
    %v1310 = vpop.permute.xlu0 %1309
    %1311 = vrot.lane.b32.xlu0 %v485, 72
    %v1312 = vpop.permute.xlu0 %1311
    %v1314 = vsel %vm490, %v1306, 0
    %v1317 = vsel %vm490, %v1308, 0
    %v1320 = vsel %vm490, %v1310, 0
    %v1323 = vsel %vm490, %v1312, 0
    %1325 = vmatpush.bf16.xpose.msra.mxu0 0
    %1326 = vmatpush.bf16.xpose.msra.mxu0 0
    %1327 = vmatpush.bf16.xpose.msra.mxu0 0
    %1328 = vmatpush.bf16.xpose.msra.mxu0 0
    %1329 = vmatpush.bf16.xpose.msra.mxu0 0
    %1330 = vmatpush.bf16.xpose.msra.mxu0 0
    %1331 = vmatpush.bf16.xpose.msra.mxu0 %v1323
    %1332 = vmatpush.bf16.xpose.msra.mxu0 %v1320
    %1333 = vmatmul.bf16.gmra.mxu0 %v1314
    %v1334 = vpop.f32.mrf.mxu0
    %v1335 = vadd.f32 0.0, %v1334
    %v1336 = vpop.f32.mrf.mxu0
    %v1337 = vadd.f32 0.0, %v1336
    %1338 = vmatmul.bf16.gmra.mxu0 %v1317
    %v1339 = vpop.f32.mrf.mxu0
    %v1340 = vadd.f32 0.0, %v1339
    %v1341 = vpop.f32.mrf.mxu0
    %v1342 = vadd.f32 0.0, %v1341
    %1343 = vdwg.mxu0
    %1344 = vrot.lane.b32.xlu0 %v530, 104
    %v1345 = vpop.permute.xlu0 %1344
    %1346 = vrot.lane.b32.xlu0 %v531, 104
    %v1347 = vpop.permute.xlu0 %1346
    %1348 = vrot.lane.b32.xlu0 %v530, 72
    %v1349 = vpop.permute.xlu0 %1348
    %1350 = vrot.lane.b32.xlu0 %v531, 72
    %v1351 = vpop.permute.xlu0 %1350
    %v1353 = vsel %vm490, %v1345, 0
    %v1356 = vsel %vm490, %v1347, 0
    %v1359 = vsel %vm490, %v1349, 0
    %v1362 = vsel %vm490, %v1351, 0
    %1364 = vmatpush.bf16.xpose.msra.mxu0 0
    %1365 = vmatpush.bf16.xpose.msra.mxu0 0
    %1366 = vmatpush.bf16.xpose.msra.mxu0 0
    %1367 = vmatpush.bf16.xpose.msra.mxu0 0
    %1368 = vmatpush.bf16.xpose.msra.mxu0 0
    %1369 = vmatpush.bf16.xpose.msra.mxu0 0
    %1370 = vmatpush.bf16.xpose.msra.mxu0 %v1362
    %1371 = vmatpush.bf16.xpose.msra.mxu0 %v1359
    %1372 = vmatmul.bf16.gmra.mxu0 %v1353
    %v1373 = vpop.f32.mrf.mxu0
    %v1374 = vadd.f32 0.0, %v1373
    %v1375 = vpop.f32.mrf.mxu0
    %v1376 = vadd.f32 0.0, %v1375
    %1377 = vmatmul.bf16.gmra.mxu0 %v1356
    %v1378 = vpop.f32.mrf.mxu0
    %v1379 = vadd.f32 0.0, %v1378
    %v1380 = vpop.f32.mrf.mxu0
    %v1381 = vadd.f32 0.0, %v1380
    %1382 = vdwg.mxu0
    %v1383 = vmul.f32 %v1335, 0.35355338
    %v1384 = vmul.f32 %v1337, 0.35355338
    %v1385 = vmul.f32 %v1340, 0.35355338
    %v1386 = vmul.f32 %v1342, 0.35355338
    %v1387 = vmul.f32 %v1374, 0.35355338
    %v1388 = vmul.f32 %v1376, 0.35355338
    %v1389 = vmul.f32 %v1379, 0.35355338
    %v1390 = vmul.f32 %v1381, 0.35355338
    %v1391 = vadd.f32 %v1383, %v26
    %v1392 = vadd.f32 %v1384, %v26
    %v1393 = vadd.f32 %v1385, %v26
    %v1394 = vadd.f32 %v1386, %v26
    %v1395 = vadd.f32 %v1387, %v26
    %v1396 = vadd.f32 %v1388, %v26
    %v1397 = vadd.f32 %v1389, %v26
    %v1398 = vadd.f32 %v1390, %v26
    %v1399 = vsel %vm172, %v1391, -inf
    %1400 = vmax.xlane.f32.xlu0 %v1399
    %v1401 = vpop.xlane.xlu0 %1400
    %v1402 = vsel %vm172, %v1392, -inf
    %1403 = vmax.xlane.f32.xlu0 %v1402
    %v1404 = vpop.xlane.xlu0 %1403
    %v1405 = vsel %vm172, %v1393, -inf
    %1406 = vmax.xlane.f32.xlu0 %v1405
    %v1407 = vpop.xlane.xlu0 %1406
    %v1408 = vsel %vm172, %v1394, -inf
    %1409 = vmax.xlane.f32.xlu0 %v1408
    %v1410 = vpop.xlane.xlu0 %1409
    %v1411 = vsel %vm172, %v1395, -inf
    %1412 = vmax.xlane.f32.xlu0 %v1411
    %v1413 = vpop.xlane.xlu0 %1412
    %v1414 = vsel %vm172, %v1396, -inf
    %1415 = vmax.xlane.f32.xlu0 %v1414
    %v1416 = vpop.xlane.xlu0 %1415
    %v1417 = vsel %vm172, %v1397, -inf
    %1418 = vmax.xlane.f32.xlu0 %v1417
    %v1419 = vpop.xlane.xlu0 %1418
    %v1420 = vsel %vm172, %v1398, -inf
    %1421 = vmax.xlane.f32.xlu0 %v1420
    %v1422 = vpop.xlane.xlu0 %1421
    %v1423 = vsub.f32 %v1391, %v1401
    %v1424 = vsub.f32 %v1392, %v1404
    %v1425 = vsub.f32 %v1393, %v1407
    %v1426 = vsub.f32 %v1394, %v1410
    %v1427 = vsub.f32 %v1395, %v1413
    %v1428 = vsub.f32 %v1396, %v1416
    %v1429 = vsub.f32 %v1397, %v1419
    %v1430 = vsub.f32 %v1398, %v1422
    %v1431 = vmul.f32 %v1423, 1.442695
    %v1432 = vpow.pop %v1431
    %v1433 = vmul.f32 %v1424, 1.442695
    %v1434 = vpow.pop %v1433
    %v1435 = vmul.f32 %v1425, 1.442695
    %v1436 = vpow.pop %v1435
    %v1437 = vmul.f32 %v1426, 1.442695
    %v1438 = vpow.pop %v1437
    %v1439 = vmul.f32 %v1427, 1.442695
    %v1440 = vpow.pop %v1439
    %v1441 = vmul.f32 %v1428, 1.442695
    %v1442 = vpow.pop %v1441
    %v1443 = vmul.f32 %v1429, 1.442695
    %v1444 = vpow.pop %v1443
    %v1445 = vmul.f32 %v1430, 1.442695
    %v1446 = vpow.pop %v1445
    %v1447 = vsel %vm172, %v1432, 0.0
    %1448 = vadd.xlane.f32.xlu0 %v1447
    %v1449 = vpop.xlane.xlu0 %1448
    %v1450 = vsel %vm172, %v1434, 0.0
    %1451 = vadd.xlane.f32.xlu0 %v1450
    %v1452 = vpop.xlane.xlu0 %1451
    %v1453 = vsel %vm172, %v1436, 0.0
    %1454 = vadd.xlane.f32.xlu0 %v1453
    %v1455 = vpop.xlane.xlu0 %1454
    %v1456 = vsel %vm172, %v1438, 0.0
    %1457 = vadd.xlane.f32.xlu0 %v1456
    %v1458 = vpop.xlane.xlu0 %1457
    %v1459 = vsel %vm172, %v1440, 0.0
    %1460 = vadd.xlane.f32.xlu0 %v1459
    %v1461 = vpop.xlane.xlu0 %1460
    %v1462 = vsel %vm172, %v1442, 0.0
    %1463 = vadd.xlane.f32.xlu0 %v1462
    %v1464 = vpop.xlane.xlu0 %1463
    %v1465 = vsel %vm172, %v1444, 0.0
    %1466 = vadd.xlane.f32.xlu0 %v1465
    %v1467 = vpop.xlane.xlu0 %1466
    %v1468 = vsel %vm172, %v1446, 0.0
    %1469 = vadd.xlane.f32.xlu0 %v1468
    %v1470 = vpop.xlane.xlu0 %1469
    %v1471 = vrcp.pop %v1449
    %v1472 = vrcp.pop %v1452
    %v1473 = vrcp.pop %v1455
    %v1474 = vrcp.pop %v1458
    %v1475 = vrcp.pop %v1461
    %v1476 = vrcp.pop %v1464
    %v1477 = vrcp.pop %v1467
    %v1478 = vrcp.pop %v1470
    %v1479 = vmul.f32 %v1432, %v1471
    %v1480 = vmul.f32 %v1434, %v1472
    %v1481 = vmul.f32 %v1436, %v1473
    %v1482 = vmul.f32 %v1438, %v1474
    %v1483 = vmul.f32 %v1440, %v1475
    %v1484 = vmul.f32 %v1442, %v1476
    %v1485 = vmul.f32 %v1444, %v1477
    %v1486 = vmul.f32 %v1446, %v1478
    %v1487 = vpack.c.bf16 %v1479, %v1479
    %v1488 = vpack.c.bf16 %v1480, %v1480
    %v1489 = vpack.c.bf16 %v1481, %v1481
    %v1490 = vpack.c.bf16 %v1482, %v1482
    %v1491 = vpack.c.bf16 %v1483, %v1483
    %v1492 = vpack.c.bf16 %v1484, %v1484
    %v1493 = vpack.c.bf16 %v1485, %v1485
    %v1494 = vpack.c.bf16 %v1486, %v1486
    %v1499 = vunpack.c.l.b16 %v1487
    %v1500 = vunpack.c.l.b16 %v1488
    %v1501 = vunpack.c.l.b16 %v1489
    %v1502 = vunpack.c.l.b16 %v1490
    %v1503 = vpack.c.b16 %v1500, %v1499
    %v1504 = vpack.c.b16 %v1502, %v1501
    %1505 = vrot.lane.b32.xlu0 %v484, 40
    %v1506 = vpop.permute.xlu0 %1505
    %1507 = vrot.lane.b32.xlu0 %v485, 40
    %v1508 = vpop.permute.xlu0 %1507
    %v1512 = vsel %vm172, %v1503, 0
    %v1515 = vsel %vm172, %v1504, 0
    %1517 = vmatpush.bf16.msra.mxu0 0
    %1518 = vmatpush.bf16.msra.mxu0 0
    %1519 = vmatpush.bf16.msra.mxu0 0
    %1520 = vmatpush.bf16.msra.mxu0 0
    %1521 = vmatpush.bf16.msra.mxu0 0
    %1522 = vmatpush.bf16.msra.mxu0 0
    %1523 = vmatpush.bf16.msra.mxu0 %v1508
    %1524 = vmatpush.bf16.msra.mxu0 %v1506
    %1525 = vmatmul.bf16.gmra.mxu0 %v1512
    %v1526 = vpop.f32.mrf.mxu0
    %v1527 = vadd.f32 0.0, %v1526
    %v1528 = vpop.f32.mrf.mxu0
    %v1529 = vadd.f32 0.0, %v1528
    %1530 = vmatmul.bf16.gmra.mxu0 %v1515
    %v1531 = vpop.f32.mrf.mxu0
    %v1532 = vadd.f32 0.0, %v1531
    %v1533 = vpop.f32.mrf.mxu0
    %v1534 = vadd.f32 0.0, %v1533
    %1535 = vdwg.mxu0
    %v1540 = vunpack.c.l.b16 %v1491
    %v1541 = vunpack.c.l.b16 %v1492
    %v1542 = vunpack.c.l.b16 %v1493
    %v1543 = vunpack.c.l.b16 %v1494
    %v1544 = vpack.c.b16 %v1541, %v1540
    %v1545 = vpack.c.b16 %v1543, %v1542
    %1546 = vrot.lane.b32.xlu0 %v530, 40
    %v1547 = vpop.permute.xlu0 %1546
    %1548 = vrot.lane.b32.xlu0 %v531, 40
    %v1549 = vpop.permute.xlu0 %1548
    %v1553 = vsel %vm172, %v1544, 0
    %v1556 = vsel %vm172, %v1545, 0
    %1558 = vmatpush.bf16.msra.mxu0 0
    %1559 = vmatpush.bf16.msra.mxu0 0
    %1560 = vmatpush.bf16.msra.mxu0 0
    %1561 = vmatpush.bf16.msra.mxu0 0
    %1562 = vmatpush.bf16.msra.mxu0 0
    %1563 = vmatpush.bf16.msra.mxu0 0
    %1564 = vmatpush.bf16.msra.mxu0 %v1549
    %1565 = vmatpush.bf16.msra.mxu0 %v1547
    %1566 = vmatmul.bf16.gmra.mxu0 %v1553
    %v1567 = vpop.f32.mrf.mxu0
    %v1568 = vadd.f32 0.0, %v1567
    %v1569 = vpop.f32.mrf.mxu0
    %v1570 = vadd.f32 0.0, %v1569
    %1571 = vmatmul.bf16.gmra.mxu0 %v1556
    %v1572 = vpop.f32.mrf.mxu0
    %v1573 = vadd.f32 0.0, %v1572
    %v1574 = vpop.f32.mrf.mxu0
    %v1575 = vadd.f32 0.0, %v1574
    %1576 = vdwg.mxu0
    %1585 = vrot.lane.b32.xlu0 %v983, 8
    %v1586 = vpop.permute.xlu0 %1585
    %1587 = vrot.lane.b32.xlu0 %v985, 8
    %v1588 = vpop.permute.xlu0 %1587
    %1589 = vrot.lane.b32.xlu0 %v988, 8
    %v1590 = vpop.permute.xlu0 %1589
    %1591 = vrot.lane.b32.xlu0 %v990, 8
    %v1592 = vpop.permute.xlu0 %1591
    %1593 = vrot.lane.b32.xlu0 %v1024, 8
    %v1594 = vpop.permute.xlu0 %1593
    %1595 = vrot.lane.b32.xlu0 %v1026, 8
    %v1596 = vpop.permute.xlu0 %1595
    %1597 = vrot.lane.b32.xlu0 %v1029, 8
    %v1598 = vpop.permute.xlu0 %1597
    %1599 = vrot.lane.b32.xlu0 %v1031, 8
    %v1600 = vpop.permute.xlu0 %1599
    %1617 = vrot.lane.b32.xlu0 %v1255, 16
    %v1618 = vpop.permute.xlu0 %1617
    %1619 = vrot.lane.b32.xlu0 %v1257, 16
    %v1620 = vpop.permute.xlu0 %1619
    %1621 = vrot.lane.b32.xlu0 %v1260, 16
    %v1622 = vpop.permute.xlu0 %1621
    %1623 = vrot.lane.b32.xlu0 %v1262, 16
    %v1624 = vpop.permute.xlu0 %1623
    %1625 = vrot.lane.b32.xlu0 %v1296, 16
    %v1626 = vpop.permute.xlu0 %1625
    %1627 = vrot.lane.b32.xlu0 %v1298, 16
    %v1628 = vpop.permute.xlu0 %1627
    %1629 = vrot.lane.b32.xlu0 %v1301, 16
    %v1630 = vpop.permute.xlu0 %1629
    %1631 = vrot.lane.b32.xlu0 %v1303, 16
    %v1632 = vpop.permute.xlu0 %1631
    %1649 = vrot.lane.b32.xlu0 %v1527, 24
    %v1650 = vpop.permute.xlu0 %1649
    %1651 = vrot.lane.b32.xlu0 %v1529, 24
    %v1652 = vpop.permute.xlu0 %1651
    %1653 = vrot.lane.b32.xlu0 %v1532, 24
    %v1654 = vpop.permute.xlu0 %1653
    %1655 = vrot.lane.b32.xlu0 %v1534, 24
    %v1656 = vpop.permute.xlu0 %1655
    %1657 = vrot.lane.b32.xlu0 %v1568, 24
    %v1658 = vpop.permute.xlu0 %1657
    %1659 = vrot.lane.b32.xlu0 %v1570, 24
    %v1660 = vpop.permute.xlu0 %1659
    %1661 = vrot.lane.b32.xlu0 %v1573, 24
    %v1662 = vpop.permute.xlu0 %1661
    %1663 = vrot.lane.b32.xlu0 %v1575, 24
    %v1664 = vpop.permute.xlu0 %1663
    %v1673 = vsel %vm490, %v711, %v1586
    %v1674 = vsel %vm490, %v713, %v1588
    %v1675 = vsel %vm490, %v716, %v1590
    %v1676 = vsel %vm490, %v718, %v1592
    %v1677 = vsel %vm490, %v752, %v1594
    %v1678 = vsel %vm490, %v754, %v1596
    %v1679 = vsel %vm490, %v757, %v1598
    %v1680 = vsel %vm490, %v759, %v1600
    %vm1681 = vcmask 130048
    %v1682 = vsel %vm1681, %v1673, %v1618
    %v1683 = vsel %vm1681, %v1674, %v1620
    %v1684 = vsel %vm1681, %v1675, %v1622
    %v1685 = vsel %vm1681, %v1676, %v1624
    %v1686 = vsel %vm1681, %v1677, %v1626
    %v1687 = vsel %vm1681, %v1678, %v1628
    %v1688 = vsel %vm1681, %v1679, %v1630
    %v1689 = vsel %vm1681, %v1680, %v1632
    %vm1690 = vcmask 195584
    %v1691 = vsel %vm1690, %v1682, %v1650
    %v1692 = vsel %vm1690, %v1683, %v1652
    %v1693 = vsel %vm1690, %v1684, %v1654
    %v1694 = vsel %vm1690, %v1685, %v1656
    %v1695 = vsel %vm1690, %v1686, %v1658
    %v1696 = vsel %vm1690, %v1687, %v1660
    %v1697 = vsel %vm1690, %v1688, %v1662
    %v1698 = vsel %vm1690, %v1689, %v1664
    %v1699 = vld [vmem:[%s1 + $0x28] sm:$0xf]
    %v1700 = vld [vmem:[%s1 + $0x2c] sm:$0xf]
    %v1701 = vld [vmem:[%s1 + $0x30] sm:$0xf]
    %v1702 = vld [vmem:[%s1 + $0x34] sm:$0xf]
    %v1703 = vpack.c.bf16 %v1691, %v1691
    %v1704 = vpack.c.bf16 %v1692, %v1692
    %v1705 = vpack.c.bf16 %v1693, %v1693
    %v1706 = vpack.c.bf16 %v1694, %v1694
    %v1707 = vpack.c.bf16 %v1695, %v1695
    %v1708 = vpack.c.bf16 %v1696, %v1696
    %v1709 = vpack.c.bf16 %v1697, %v1697
    %v1710 = vpack.c.bf16 %v1698, %v1698
    %v1719 = vunpack.c.l.b16 %v1703
    %v1720 = vunpack.c.l.b16 %v1704
    %v1721 = vunpack.c.l.b16 %v1705
    %v1722 = vunpack.c.l.b16 %v1706
    %v1723 = vunpack.c.l.b16 %v1707
    %v1724 = vunpack.c.l.b16 %v1708
    %v1725 = vunpack.c.l.b16 %v1709
    %v1726 = vunpack.c.l.b16 %v1710
    %v1727 = vpack.c.b16 %v1720, %v1719
    %v1728 = vpack.c.b16 %v1722, %v1721
    %v1729 = vpack.c.b16 %v1724, %v1723
    %v1730 = vpack.c.b16 %v1726, %v1725
    %v1735 = vunpack.c.l.b16 %v1699
    %v1736 = vunpack.c.l.b16 %v1700
    %v1737 = vunpack.c.l.b16 %v1701
    %v1738 = vunpack.c.l.b16 %v1702
    %v1739 = vpack.c.b16 %v1736, %v1735
    %v1740 = vpack.c.b16 %v1738, %v1737
    %v1744 = vsel %vm172, %v1727, 0
    %v1747 = vsel %vm172, %v1728, 0
    %v1750 = vsel %vm172, %v1729, 0
    %v1753 = vsel %vm172, %v1730, 0
    %1755 = vmatpush.bf16.msra.mxu0 0
    %1756 = vmatpush.bf16.msra.mxu0 0
    %1757 = vmatpush.bf16.msra.mxu0 0
    %1758 = vmatpush.bf16.msra.mxu0 0
    %1759 = vmatpush.bf16.msra.mxu0 0
    %1760 = vmatpush.bf16.msra.mxu0 0
    %1761 = vmatpush.bf16.msra.mxu0 %v1740
    %1762 = vmatpush.bf16.msra.mxu0 %v1739
    %1763 = vmatmul.bf16.gmra.mxu0 %v1744
    %v1764 = vpop.f32.mrf.mxu0
    %v1765 = vadd.f32 0.0, %v1764
    %v1766 = vpop.f32.mrf.mxu0
    %v1767 = vadd.f32 0.0, %v1766
    %1768 = vmatmul.bf16.gmra.mxu0 %v1747
    %v1769 = vpop.f32.mrf.mxu0
    %v1770 = vadd.f32 0.0, %v1769
    %v1771 = vpop.f32.mrf.mxu0
    %v1772 = vadd.f32 0.0, %v1771
    %1773 = vmatmul.bf16.gmra.mxu0 %v1750
    %v1774 = vpop.f32.mrf.mxu0
    %v1775 = vadd.f32 0.0, %v1774
    %v1776 = vpop.f32.mrf.mxu0
    %v1777 = vadd.f32 0.0, %v1776
    %1778 = vmatmul.bf16.gmra.mxu0 %v1753
    %v1779 = vpop.f32.mrf.mxu0
    %v1780 = vadd.f32 0.0, %v1779
    %v1781 = vpop.f32.mrf.mxu0
    %v1782 = vadd.f32 0.0, %v1781
    %1783 = vdwg.mxu0
    %v1784 = vperm.slane %v21, 3
    %v1785 = vadd.f32 %v1765, %v1784
    %v1786 = vadd.f32 %v1767, %v1784
    %v1787 = vadd.f32 %v1770, %v1784
    %v1788 = vadd.f32 %v1772, %v1784
    %v1789 = vadd.f32 %v1775, %v1784
    %v1790 = vadd.f32 %v1777, %v1784
    %v1791 = vadd.f32 %v1780, %v1784
    %v1792 = vadd.f32 %v1782, %v1784
    %v1793 = vadd.f32 %v164, %v1785
    %v1794 = vadd.f32 %v165, %v1786
    %v1795 = vadd.f32 %v166, %v1787
    %v1796 = vadd.f32 %v167, %v1788
    %v1797 = vadd.f32 %v168, %v1789
    %v1798 = vadd.f32 %v169, %v1790
    %v1799 = vadd.f32 %v170, %v1791
    %v1800 = vadd.f32 %v171, %v1792
    %v1801 = vsel %vm172, %v1793, 0.0
    %1802 = vadd.xlane.f32.xlu0 %v1801
    %v1803 = vpop.xlane.xlu0 %1802
    %v1804 = vsel %vm172, %v1794, 0.0
    %1805 = vadd.xlane.f32.xlu0 %v1804
    %v1806 = vpop.xlane.xlu0 %1805
    %v1807 = vsel %vm172, %v1795, 0.0
    %1808 = vadd.xlane.f32.xlu0 %v1807
    %v1809 = vpop.xlane.xlu0 %1808
    %v1810 = vsel %vm172, %v1796, 0.0
    %1811 = vadd.xlane.f32.xlu0 %v1810
    %v1812 = vpop.xlane.xlu0 %1811
    %v1813 = vsel %vm172, %v1797, 0.0
    %1814 = vadd.xlane.f32.xlu0 %v1813
    %v1815 = vpop.xlane.xlu0 %1814
    %v1816 = vsel %vm172, %v1798, 0.0
    %1817 = vadd.xlane.f32.xlu0 %v1816
    %v1818 = vpop.xlane.xlu0 %1817
    %v1819 = vsel %vm172, %v1799, 0.0
    %1820 = vadd.xlane.f32.xlu0 %v1819
    %v1821 = vpop.xlane.xlu0 %1820
    %v1822 = vsel %vm172, %v1800, 0.0
    %1823 = vadd.xlane.f32.xlu0 %v1822
    %v1824 = vpop.xlane.xlu0 %1823
    %v1825 = vmul.f32 %v1803, %v203
    %v1826 = vmul.f32 %v1806, %v203
    %v1827 = vmul.f32 %v1809, %v203
    %v1828 = vmul.f32 %v1812, %v203
    %v1829 = vmul.f32 %v1815, %v203
    %v1830 = vmul.f32 %v1818, %v203
    %v1831 = vmul.f32 %v1821, %v203
    %v1832 = vmul.f32 %v1824, %v203
    %v1833 = vsub.f32 %v1793, %v1825
    %v1834 = vsub.f32 %v1794, %v1826
    %v1835 = vsub.f32 %v1795, %v1827
    %v1836 = vsub.f32 %v1796, %v1828
    %v1837 = vsub.f32 %v1797, %v1829
    %v1838 = vsub.f32 %v1798, %v1830
    %v1839 = vsub.f32 %v1799, %v1831
    %v1840 = vsub.f32 %v1800, %v1832
    %v1841 = vmul.f32 %v1833, %v1833
    %v1842 = vmul.f32 %v1834, %v1834
    %v1843 = vmul.f32 %v1835, %v1835
    %v1844 = vmul.f32 %v1836, %v1836
    %v1845 = vmul.f32 %v1837, %v1837
    %v1846 = vmul.f32 %v1838, %v1838
    %v1847 = vmul.f32 %v1839, %v1839
    %v1848 = vmul.f32 %v1840, %v1840
    %v1849 = vsel %vm172, %v1841, 0.0
    %1850 = vadd.xlane.f32.xlu0 %v1849
    %v1851 = vpop.xlane.xlu0 %1850
    %v1852 = vsel %vm172, %v1842, 0.0
    %1853 = vadd.xlane.f32.xlu0 %v1852
    %v1854 = vpop.xlane.xlu0 %1853
    %v1855 = vsel %vm172, %v1843, 0.0
    %1856 = vadd.xlane.f32.xlu0 %v1855
    %v1857 = vpop.xlane.xlu0 %1856
    %v1858 = vsel %vm172, %v1844, 0.0
    %1859 = vadd.xlane.f32.xlu0 %v1858
    %v1860 = vpop.xlane.xlu0 %1859
    %v1861 = vsel %vm172, %v1845, 0.0
    %1862 = vadd.xlane.f32.xlu0 %v1861
    %v1863 = vpop.xlane.xlu0 %1862
    %v1864 = vsel %vm172, %v1846, 0.0
    %1865 = vadd.xlane.f32.xlu0 %v1864
    %v1866 = vpop.xlane.xlu0 %1865
    %v1867 = vsel %vm172, %v1847, 0.0
    %1868 = vadd.xlane.f32.xlu0 %v1867
    %v1869 = vpop.xlane.xlu0 %1868
    %v1870 = vsel %vm172, %v1848, 0.0
    %1871 = vadd.xlane.f32.xlu0 %v1870
    %v1872 = vpop.xlane.xlu0 %1871
    %v1873 = vmul.f32 %v1851, %v203
    %v1874 = vmul.f32 %v1854, %v203
    %v1875 = vmul.f32 %v1857, %v203
    %v1876 = vmul.f32 %v1860, %v203
    %v1877 = vmul.f32 %v1863, %v203
    %v1878 = vmul.f32 %v1866, %v203
    %v1879 = vmul.f32 %v1869, %v203
    %v1880 = vmul.f32 %v1872, %v203
    %v1881 = vadd.f32 %v1873, 1e-05
    %v1882 = vadd.f32 %v1874, 1e-05
    %v1883 = vadd.f32 %v1875, 1e-05
    %v1884 = vadd.f32 %v1876, 1e-05
    %v1885 = vadd.f32 %v1877, 1e-05
    %v1886 = vadd.f32 %v1878, 1e-05
    %v1887 = vadd.f32 %v1879, 1e-05
    %v1888 = vadd.f32 %v1880, 1e-05
    %v1889 = vrsqrt.pop %v1881
    %v1890 = vmul.f32 %v1889, %v1881
    %v1891 = vmul.f32 %v1890, %v1889
    %v1892 = vmul.f32 0.5, %v1891
    %v1893 = vsub.f32 1.5, %v1892
    %v1894 = vmul.f32 %v1889, %v1893
    %vm1895 = vweird.f32 %v1881
    %vm1896 = vweird.f32 %v1889
    %vm1897 = vmor %vm1895, %vm1896
    %v1898 = vsel %vm1897, %v1889, %v1894
    %v1899 = vrsqrt.pop %v1882
    %v1900 = vmul.f32 %v1899, %v1882
    %v1901 = vmul.f32 %v1900, %v1899
    %v1902 = vmul.f32 0.5, %v1901
    %v1903 = vsub.f32 1.5, %v1902
    %v1904 = vmul.f32 %v1899, %v1903
    %vm1905 = vweird.f32 %v1882
    %vm1906 = vweird.f32 %v1899
    %vm1907 = vmor %vm1905, %vm1906
    %v1908 = vsel %vm1907, %v1899, %v1904
    %v1909 = vrsqrt.pop %v1883
    %v1910 = vmul.f32 %v1909, %v1883
    %v1911 = vmul.f32 %v1910, %v1909
    %v1912 = vmul.f32 0.5, %v1911
    %v1913 = vsub.f32 1.5, %v1912
    %v1914 = vmul.f32 %v1909, %v1913
    %vm1915 = vweird.f32 %v1883
    %vm1916 = vweird.f32 %v1909
    %vm1917 = vmor %vm1915, %vm1916
    %v1918 = vsel %vm1917, %v1909, %v1914
    %v1919 = vrsqrt.pop %v1884
    %v1920 = vmul.f32 %v1919, %v1884
    %v1921 = vmul.f32 %v1920, %v1919
    %v1922 = vmul.f32 0.5, %v1921
    %v1923 = vsub.f32 1.5, %v1922
    %v1924 = vmul.f32 %v1919, %v1923
    %vm1925 = vweird.f32 %v1884
    %vm1926 = vweird.f32 %v1919
    %vm1927 = vmor %vm1925, %vm1926
    %v1928 = vsel %vm1927, %v1919, %v1924
    %v1929 = vrsqrt.pop %v1885
    %v1930 = vmul.f32 %v1929, %v1885
    %v1931 = vmul.f32 %v1930, %v1929
    %v1932 = vmul.f32 0.5, %v1931
    %v1933 = vsub.f32 1.5, %v1932
    %v1934 = vmul.f32 %v1929, %v1933
    %vm1935 = vweird.f32 %v1885
    %vm1936 = vweird.f32 %v1929
    %vm1937 = vmor %vm1935, %vm1936
    %v1938 = vsel %vm1937, %v1929, %v1934
    %v1939 = vrsqrt.pop %v1886
    %v1940 = vmul.f32 %v1939, %v1886
    %v1941 = vmul.f32 %v1940, %v1939
    %v1942 = vmul.f32 0.5, %v1941
    %v1943 = vsub.f32 1.5, %v1942
    %v1944 = vmul.f32 %v1939, %v1943
    %vm1945 = vweird.f32 %v1886
    %vm1946 = vweird.f32 %v1939
    %vm1947 = vmor %vm1945, %vm1946
    %v1948 = vsel %vm1947, %v1939, %v1944
    %v1949 = vrsqrt.pop %v1887
    %v1950 = vmul.f32 %v1949, %v1887
    %v1951 = vmul.f32 %v1950, %v1949
    %v1952 = vmul.f32 0.5, %v1951
    %v1953 = vsub.f32 1.5, %v1952
    %v1954 = vmul.f32 %v1949, %v1953
    %vm1955 = vweird.f32 %v1887
    %vm1956 = vweird.f32 %v1949
    %vm1957 = vmor %vm1955, %vm1956
    %v1958 = vsel %vm1957, %v1949, %v1954
    %v1959 = vrsqrt.pop %v1888
    %v1960 = vmul.f32 %v1959, %v1888
    %v1961 = vmul.f32 %v1960, %v1959
    %v1962 = vmul.f32 0.5, %v1961
    %v1963 = vsub.f32 1.5, %v1962
    %v1964 = vmul.f32 %v1959, %v1963
    %vm1965 = vweird.f32 %v1888
    %vm1966 = vweird.f32 %v1959
    %vm1967 = vmor %vm1965, %vm1966
    %v1968 = vsel %vm1967, %v1959, %v1964
    %v1969 = vmul.f32 %v1833, %v1898
    %v1970 = vmul.f32 %v1834, %v1908
    %v1971 = vmul.f32 %v1835, %v1918
    %v1972 = vmul.f32 %v1836, %v1928
    %v1973 = vmul.f32 %v1837, %v1938
    %v1974 = vmul.f32 %v1838, %v1948
    %v1975 = vmul.f32 %v1839, %v1958
    %v1976 = vmul.f32 %v1840, %v1968
    %v1977 = vperm.slane %v21, 4
    %v1978 = vmul.f32 %v1969, %v1977
    %v1979 = vmul.f32 %v1970, %v1977
    %v1980 = vmul.f32 %v1971, %v1977
    %v1981 = vmul.f32 %v1972, %v1977
    %v1982 = vmul.f32 %v1973, %v1977
    %v1983 = vmul.f32 %v1974, %v1977
    %v1984 = vmul.f32 %v1975, %v1977
    %v1985 = vmul.f32 %v1976, %v1977
    %v1986 = vperm.slane %v21, 5
    %v1987 = vadd.f32 %v1978, %v1986
    %v1988 = vadd.f32 %v1979, %v1986
    %v1989 = vadd.f32 %v1980, %v1986
    %v1990 = vadd.f32 %v1981, %v1986
    %v1991 = vadd.f32 %v1982, %v1986
    %v1992 = vadd.f32 %v1983, %v1986
    %v1993 = vadd.f32 %v1984, %v1986
    %v1994 = vadd.f32 %v1985, %v1986
    %v1995 = vld [vmem:[%s1 + $0x38] sm:$0xf]
    %v1996 = vld [vmem:[%s1 + $0x3c] sm:$0xf]
    %v1997 = vld [vmem:[%s1 + $0x40] sm:$0xf]
    %v1998 = vld [vmem:[%s1 + $0x44] sm:$0xf]
    %v1999 = vpack.c.bf16 %v1987, %v1987
    %v2000 = vpack.c.bf16 %v1988, %v1988
    %v2001 = vpack.c.bf16 %v1989, %v1989
    %v2002 = vpack.c.bf16 %v1990, %v1990
    %v2003 = vpack.c.bf16 %v1991, %v1991
    %v2004 = vpack.c.bf16 %v1992, %v1992
    %v2005 = vpack.c.bf16 %v1993, %v1993
    %v2006 = vpack.c.bf16 %v1994, %v1994
    %v2015 = vunpack.c.l.b16 %v1999
    %v2016 = vunpack.c.l.b16 %v2000
    %v2017 = vunpack.c.l.b16 %v2001
    %v2018 = vunpack.c.l.b16 %v2002
    %v2019 = vunpack.c.l.b16 %v2003
    %v2020 = vunpack.c.l.b16 %v2004
    %v2021 = vunpack.c.l.b16 %v2005
    %v2022 = vunpack.c.l.b16 %v2006
    %v2023 = vpack.c.b16 %v2016, %v2015
    %v2024 = vpack.c.b16 %v2018, %v2017
    %v2025 = vpack.c.b16 %v2020, %v2019
    %v2026 = vpack.c.b16 %v2022, %v2021
    %v2031 = vunpack.c.l.b16 %v1995
    %v2032 = vunpack.c.l.b16 %v1996
    %v2033 = vunpack.c.l.b16 %v1997
    %v2034 = vunpack.c.l.b16 %v1998
    %v2035 = vpack.c.b16 %v2032, %v2031
    %v2036 = vpack.c.b16 %v2034, %v2033
    %v2040 = vsel %vm172, %v2023, 0
    %v2043 = vsel %vm172, %v2024, 0
    %v2046 = vsel %vm172, %v2025, 0
    %v2049 = vsel %vm172, %v2026, 0
    %2051 = vmatpush.bf16.msra.mxu0 0
    %2052 = vmatpush.bf16.msra.mxu0 0
    %2053 = vmatpush.bf16.msra.mxu0 0
    %2054 = vmatpush.bf16.msra.mxu0 0
    %2055 = vmatpush.bf16.msra.mxu0 0
    %2056 = vmatpush.bf16.msra.mxu0 0
    %2057 = vmatpush.bf16.msra.mxu0 %v2036
    %2058 = vmatpush.bf16.msra.mxu0 %v2035
    %2059 = vmatmul.bf16.gmra.mxu0 %v2040
    %v2060 = vpop.f32.mrf.mxu0
    %v2061 = vadd.f32 0.0, %v2060
    %v2062 = vpop.f32.mrf.mxu0
    %v2063 = vadd.f32 0.0, %v2062
    %2064 = vmatmul.bf16.gmra.mxu0 %v2043
    %v2065 = vpop.f32.mrf.mxu0
    %v2066 = vadd.f32 0.0, %v2065
    %v2067 = vpop.f32.mrf.mxu0
    %v2068 = vadd.f32 0.0, %v2067
    %2069 = vmatmul.bf16.gmra.mxu0 %v2046
    %v2070 = vpop.f32.mrf.mxu0
    %v2071 = vadd.f32 0.0, %v2070
    %v2072 = vpop.f32.mrf.mxu0
    %v2073 = vadd.f32 0.0, %v2072
    %2074 = vmatmul.bf16.gmra.mxu0 %v2049
    %v2075 = vpop.f32.mrf.mxu0
    %v2076 = vadd.f32 0.0, %v2075
    %v2077 = vpop.f32.mrf.mxu0
    %v2078 = vadd.f32 0.0, %v2077
    %2079 = vdwg.mxu0
    %v2080 = vperm.slane %v21, 6
    %v2081 = vadd.f32 %v2061, %v2080
    %v2082 = vadd.f32 %v2063, %v2080
    %v2083 = vadd.f32 %v2066, %v2080
    %v2084 = vadd.f32 %v2068, %v2080
    %v2085 = vadd.f32 %v2071, %v2080
    %v2086 = vadd.f32 %v2073, %v2080
    %v2087 = vadd.f32 %v2076, %v2080
    %v2088 = vadd.f32 %v2078, %v2080
    %v2089 = vmul.f32 %v2081, 0.5
    %v2090 = vmul.f32 %v2082, 0.5
    %v2091 = vmul.f32 %v2083, 0.5
    %v2092 = vmul.f32 %v2084, 0.5
    %v2093 = vmul.f32 %v2085, 0.5
    %v2094 = vmul.f32 %v2086, 0.5
    %v2095 = vmul.f32 %v2087, 0.5
    %v2096 = vmul.f32 %v2088, 0.5
    %v2097 = vmul.f32 %v2081, 0.70710677
    %v2098 = vmul.f32 %v2082, 0.70710677
    %v2099 = vmul.f32 %v2083, 0.70710677
    %v2100 = vmul.f32 %v2084, 0.70710677
    %v2101 = vmul.f32 %v2085, 0.70710677
    %v2102 = vmul.f32 %v2086, 0.70710677
    %v2103 = vmul.f32 %v2087, 0.70710677
    %v2104 = vmul.f32 %v2088, 0.70710677
    %v2105 = vand.u32 2147483647, %v2097
    %v2106 = vand.u32 2147483647, %v2098
    %v2107 = vand.u32 2147483647, %v2099
    %v2108 = vand.u32 2147483647, %v2100
    %v2109 = vand.u32 2147483647, %v2101
    %v2110 = vand.u32 2147483647, %v2102
    %v2111 = vand.u32 2147483647, %v2103
    %v2112 = vand.u32 2147483647, %v2104
    %v2113 = vmul.f32 %v2105, 0.3275911
    %v2114 = vmul.f32 %v2106, 0.3275911
    %v2115 = vmul.f32 %v2107, 0.3275911
    %v2116 = vmul.f32 %v2108, 0.3275911
    %v2117 = vmul.f32 %v2109, 0.3275911
    %v2118 = vmul.f32 %v2110, 0.3275911
    %v2119 = vmul.f32 %v2111, 0.3275911
    %v2120 = vmul.f32 %v2112, 0.3275911
    %v2121 = vadd.f32 %v2113, 1.0
    %v2122 = vadd.f32 %v2114, 1.0
    %v2123 = vadd.f32 %v2115, 1.0
    %v2124 = vadd.f32 %v2116, 1.0
    %v2125 = vadd.f32 %v2117, 1.0
    %v2126 = vadd.f32 %v2118, 1.0
    %v2127 = vadd.f32 %v2119, 1.0
    %v2128 = vadd.f32 %v2120, 1.0
    %v2129 = vrcp.pop %v2121
    %v2130 = vmul.f32 %v2121, %v2129
    %v2131 = vsub.f32 1.0, %v2130
    %v2132 = vmul.f32 %v2129, %v2131
    %v2133 = vadd.f32 %v2129, %v2132
    %vm2134 = vweird.f32 %v2121
    %vm2135 = vweird.f32 %v2129
    %vm2136 = vmor %vm2134, %vm2135
    %v2137 = vsel %vm2136, %v2129, %v2133
    %v2138 = vand.u32 2147483647, %v2121
    %vm2139 = vcmp.eq.f32.partialorder %v2138, 8.507059e+37
    %v2140 = vand.u32 %v2121, 2147483648
    %v2141 = vor.u32 1.1754944e-38, %v2140
    %v2142 = vsel %vm2139, %v2141, %v2137
    %v2143 = vmul.f32 1.0, %v2142
    %v2144 = vrcp.pop %v2122
    %v2145 = vmul.f32 %v2122, %v2144
    %v2146 = vsub.f32 1.0, %v2145
    %v2147 = vmul.f32 %v2144, %v2146
    %v2148 = vadd.f32 %v2144, %v2147
    %vm2149 = vweird.f32 %v2122
    %vm2150 = vweird.f32 %v2144
    %vm2151 = vmor %vm2149, %vm2150
    %v2152 = vsel %vm2151, %v2144, %v2148
    %v2153 = vand.u32 2147483647, %v2122
    %vm2154 = vcmp.eq.f32.partialorder %v2153, 8.507059e+37
    %v2155 = vand.u32 %v2122, 2147483648
    %v2156 = vor.u32 1.1754944e-38, %v2155
    %v2157 = vsel %vm2154, %v2156, %v2152
    %v2158 = vmul.f32 1.0, %v2157
    %v2159 = vrcp.pop %v2123
    %v2160 = vmul.f32 %v2123, %v2159
    %v2161 = vsub.f32 1.0, %v2160
    %v2162 = vmul.f32 %v2159, %v2161
    %v2163 = vadd.f32 %v2159, %v2162
    %vm2164 = vweird.f32 %v2123
    %vm2165 = vweird.f32 %v2159
    %vm2166 = vmor %vm2164, %vm2165
    %v2167 = vsel %vm2166, %v2159, %v2163
    %v2168 = vand.u32 2147483647, %v2123
    %vm2169 = vcmp.eq.f32.partialorder %v2168, 8.507059e+37
    %v2170 = vand.u32 %v2123, 2147483648
    %v2171 = vor.u32 1.1754944e-38, %v2170
    %v2172 = vsel %vm2169, %v2171, %v2167
    %v2173 = vmul.f32 1.0, %v2172
    %v2174 = vrcp.pop %v2124
    %v2175 = vmul.f32 %v2124, %v2174
    %v2176 = vsub.f32 1.0, %v2175
    %v2177 = vmul.f32 %v2174, %v2176
    %v2178 = vadd.f32 %v2174, %v2177
    %vm2179 = vweird.f32 %v2124
    %vm2180 = vweird.f32 %v2174
    %vm2181 = vmor %vm2179, %vm2180
    %v2182 = vsel %vm2181, %v2174, %v2178
    %v2183 = vand.u32 2147483647, %v2124
    %vm2184 = vcmp.eq.f32.partialorder %v2183, 8.507059e+37
    %v2185 = vand.u32 %v2124, 2147483648
    %v2186 = vor.u32 1.1754944e-38, %v2185
    %v2187 = vsel %vm2184, %v2186, %v2182
    %v2188 = vmul.f32 1.0, %v2187
    %v2189 = vrcp.pop %v2125
    %v2190 = vmul.f32 %v2125, %v2189
    %v2191 = vsub.f32 1.0, %v2190
    %v2192 = vmul.f32 %v2189, %v2191
    %v2193 = vadd.f32 %v2189, %v2192
    %vm2194 = vweird.f32 %v2125
    %vm2195 = vweird.f32 %v2189
    %vm2196 = vmor %vm2194, %vm2195
    %v2197 = vsel %vm2196, %v2189, %v2193
    %v2198 = vand.u32 2147483647, %v2125
    %vm2199 = vcmp.eq.f32.partialorder %v2198, 8.507059e+37
    %v2200 = vand.u32 %v2125, 2147483648
    %v2201 = vor.u32 1.1754944e-38, %v2200
    %v2202 = vsel %vm2199, %v2201, %v2197
    %v2203 = vmul.f32 1.0, %v2202
    %v2204 = vrcp.pop %v2126
    %v2205 = vmul.f32 %v2126, %v2204
    %v2206 = vsub.f32 1.0, %v2205
    %v2207 = vmul.f32 %v2204, %v2206
    %v2208 = vadd.f32 %v2204, %v2207
    %vm2209 = vweird.f32 %v2126
    %vm2210 = vweird.f32 %v2204
    %vm2211 = vmor %vm2209, %vm2210
    %v2212 = vsel %vm2211, %v2204, %v2208
    %v2213 = vand.u32 2147483647, %v2126
    %vm2214 = vcmp.eq.f32.partialorder %v2213, 8.507059e+37
    %v2215 = vand.u32 %v2126, 2147483648
    %v2216 = vor.u32 1.1754944e-38, %v2215
    %v2217 = vsel %vm2214, %v2216, %v2212
    %v2218 = vmul.f32 1.0, %v2217
    %v2219 = vrcp.pop %v2127
    %v2220 = vmul.f32 %v2127, %v2219
    %v2221 = vsub.f32 1.0, %v2220
    %v2222 = vmul.f32 %v2219, %v2221
    %v2223 = vadd.f32 %v2219, %v2222
    %vm2224 = vweird.f32 %v2127
    %vm2225 = vweird.f32 %v2219
    %vm2226 = vmor %vm2224, %vm2225
    %v2227 = vsel %vm2226, %v2219, %v2223
    %v2228 = vand.u32 2147483647, %v2127
    %vm2229 = vcmp.eq.f32.partialorder %v2228, 8.507059e+37
    %v2230 = vand.u32 %v2127, 2147483648
    %v2231 = vor.u32 1.1754944e-38, %v2230
    %v2232 = vsel %vm2229, %v2231, %v2227
    %v2233 = vmul.f32 1.0, %v2232
    %v2234 = vrcp.pop %v2128
    %v2235 = vmul.f32 %v2128, %v2234
    %v2236 = vsub.f32 1.0, %v2235
    %v2237 = vmul.f32 %v2234, %v2236
    %v2238 = vadd.f32 %v2234, %v2237
    %vm2239 = vweird.f32 %v2128
    %vm2240 = vweird.f32 %v2234
    %vm2241 = vmor %vm2239, %vm2240
    %v2242 = vsel %vm2241, %v2234, %v2238
    %v2243 = vand.u32 2147483647, %v2128
    %vm2244 = vcmp.eq.f32.partialorder %v2243, 8.507059e+37
    %v2245 = vand.u32 %v2128, 2147483648
    %v2246 = vor.u32 1.1754944e-38, %v2245
    %v2247 = vsel %vm2244, %v2246, %v2242
    %v2248 = vmul.f32 1.0, %v2247
    %v2249 = vmul.f32 %v2143, 1.0614054
    %v2250 = vmul.f32 %v2158, 1.0614054
    %v2251 = vmul.f32 %v2173, 1.0614054
    %v2252 = vmul.f32 %v2188, 1.0614054
    %v2253 = vmul.f32 %v2203, 1.0614054
    %v2254 = vmul.f32 %v2218, 1.0614054
    %v2255 = vmul.f32 %v2233, 1.0614054
    %v2256 = vmul.f32 %v2248, 1.0614054
    %v2257 = vadd.f32 %v2249, -1.4531521
    %v2258 = vadd.f32 %v2250, -1.4531521
    %v2259 = vadd.f32 %v2251, -1.4531521
    %v2260 = vadd.f32 %v2252, -1.4531521
    %v2261 = vadd.f32 %v2253, -1.4531521
    %v2262 = vadd.f32 %v2254, -1.4531521
    %v2263 = vadd.f32 %v2255, -1.4531521
    %v2264 = vadd.f32 %v2256, -1.4531521
    %v2265 = vmul.f32 %v2257, %v2143
    %v2266 = vmul.f32 %v2258, %v2158
    %v2267 = vmul.f32 %v2259, %v2173
    %v2268 = vmul.f32 %v2260, %v2188
    %v2269 = vmul.f32 %v2261, %v2203
    %v2270 = vmul.f32 %v2262, %v2218
    %v2271 = vmul.f32 %v2263, %v2233
    %v2272 = vmul.f32 %v2264, %v2248
    %v2273 = vadd.f32 %v2265, 1.4214138
    %v2274 = vadd.f32 %v2266, 1.4214138
    %v2275 = vadd.f32 %v2267, 1.4214138
    %v2276 = vadd.f32 %v2268, 1.4214138
    %v2277 = vadd.f32 %v2269, 1.4214138
    %v2278 = vadd.f32 %v2270, 1.4214138
    %v2279 = vadd.f32 %v2271, 1.4214138
    %v2280 = vadd.f32 %v2272, 1.4214138
    %v2281 = vmul.f32 %v2273, %v2143
    %v2282 = vmul.f32 %v2274, %v2158
    %v2283 = vmul.f32 %v2275, %v2173
    %v2284 = vmul.f32 %v2276, %v2188
    %v2285 = vmul.f32 %v2277, %v2203
    %v2286 = vmul.f32 %v2278, %v2218
    %v2287 = vmul.f32 %v2279, %v2233
    %v2288 = vmul.f32 %v2280, %v2248
    %v2289 = vadd.f32 %v2281, -0.28449672
    %v2290 = vadd.f32 %v2282, -0.28449672
    %v2291 = vadd.f32 %v2283, -0.28449672
    %v2292 = vadd.f32 %v2284, -0.28449672
    %v2293 = vadd.f32 %v2285, -0.28449672
    %v2294 = vadd.f32 %v2286, -0.28449672
    %v2295 = vadd.f32 %v2287, -0.28449672
    %v2296 = vadd.f32 %v2288, -0.28449672
    %v2297 = vmul.f32 %v2289, %v2143
    %v2298 = vmul.f32 %v2290, %v2158
    %v2299 = vmul.f32 %v2291, %v2173
    %v2300 = vmul.f32 %v2292, %v2188
    %v2301 = vmul.f32 %v2293, %v2203
    %v2302 = vmul.f32 %v2294, %v2218
    %v2303 = vmul.f32 %v2295, %v2233
    %v2304 = vmul.f32 %v2296, %v2248
    %v2305 = vadd.f32 %v2297, 0.2548296
    %v2306 = vadd.f32 %v2298, 0.2548296
    %v2307 = vadd.f32 %v2299, 0.2548296
    %v2308 = vadd.f32 %v2300, 0.2548296
    %v2309 = vadd.f32 %v2301, 0.2548296
    %v2310 = vadd.f32 %v2302, 0.2548296
    %v2311 = vadd.f32 %v2303, 0.2548296
    %v2312 = vadd.f32 %v2304, 0.2548296
    %v2313 = vmul.f32 %v2305, %v2143
    %v2314 = vmul.f32 %v2306, %v2158
    %v2315 = vmul.f32 %v2307, %v2173
    %v2316 = vmul.f32 %v2308, %v2188
    %v2317 = vmul.f32 %v2309, %v2203
    %v2318 = vmul.f32 %v2310, %v2218
    %v2319 = vmul.f32 %v2311, %v2233
    %v2320 = vmul.f32 %v2312, %v2248
    %v2321 = vmul.f32 %v2105, %v2105
    %v2322 = vmul.f32 %v2106, %v2106
    %v2323 = vmul.f32 %v2107, %v2107
    %v2324 = vmul.f32 %v2108, %v2108
    %v2325 = vmul.f32 %v2109, %v2109
    %v2326 = vmul.f32 %v2110, %v2110
    %v2327 = vmul.f32 %v2111, %v2111
    %v2328 = vmul.f32 %v2112, %v2112
    %v2329 = vsub.f32 0.0, %v2321
    %v2330 = vsub.f32 0.0, %v2322
    %v2331 = vsub.f32 0.0, %v2323
    %v2332 = vsub.f32 0.0, %v2324
    %v2333 = vsub.f32 0.0, %v2325
    %v2334 = vsub.f32 0.0, %v2326
    %v2335 = vsub.f32 0.0, %v2327
    %v2336 = vsub.f32 0.0, %v2328
    %v2337 = vmul.f32 %v2329, 1.442695
    %v2338 = vpow.pop %v2337
    %v2339 = vmul.f32 %v2330, 1.442695
    %v2340 = vpow.pop %v2339
    %v2341 = vmul.f32 %v2331, 1.442695
    %v2342 = vpow.pop %v2341
    %v2343 = vmul.f32 %v2332, 1.442695
    %v2344 = vpow.pop %v2343
    %v2345 = vmul.f32 %v2333, 1.442695
    %v2346 = vpow.pop %v2345
    %v2347 = vmul.f32 %v2334, 1.442695
    %v2348 = vpow.pop %v2347
    %v2349 = vmul.f32 %v2335, 1.442695
    %v2350 = vpow.pop %v2349
    %v2351 = vmul.f32 %v2336, 1.442695
    %v2352 = vpow.pop %v2351
    %v2353 = vmul.f32 %v2313, %v2338
    %v2354 = vmul.f32 %v2314, %v2340
    %v2355 = vmul.f32 %v2315, %v2342
    %v2356 = vmul.f32 %v2316, %v2344
    %v2357 = vmul.f32 %v2317, %v2346
    %v2358 = vmul.f32 %v2318, %v2348
    %v2359 = vmul.f32 %v2319, %v2350
    %v2360 = vmul.f32 %v2320, %v2352
    %v2361 = vsub.f32 1.0, %v2353
    %v2362 = vsub.f32 1.0, %v2354
    %v2363 = vsub.f32 1.0, %v2355
    %v2364 = vsub.f32 1.0, %v2356
    %v2365 = vsub.f32 1.0, %v2357
    %v2366 = vsub.f32 1.0, %v2358
    %v2367 = vsub.f32 1.0, %v2359
    %v2368 = vsub.f32 1.0, %v2360
    %vm2369 = vcmp.lt.f32.partialorder %v2097, 0.0
    %vm2370 = vcmp.lt.f32.partialorder %v2098, 0.0
    %vm2371 = vcmp.lt.f32.partialorder %v2099, 0.0
    %vm2372 = vcmp.lt.f32.partialorder %v2100, 0.0
    %vm2373 = vcmp.lt.f32.partialorder %v2101, 0.0
    %vm2374 = vcmp.lt.f32.partialorder %v2102, 0.0
    %vm2375 = vcmp.lt.f32.partialorder %v2103, 0.0
    %vm2376 = vcmp.lt.f32.partialorder %v2104, 0.0
    %v2377 = vsub.f32 0.0, %v2361
    %v2378 = vsub.f32 0.0, %v2362
    %v2379 = vsub.f32 0.0, %v2363
    %v2380 = vsub.f32 0.0, %v2364
    %v2381 = vsub.f32 0.0, %v2365
    %v2382 = vsub.f32 0.0, %v2366
    %v2383 = vsub.f32 0.0, %v2367
    %v2384 = vsub.f32 0.0, %v2368
    %v2385 = vsel %vm2369, %v2377, %v2361
    %v2386 = vsel %vm2370, %v2378, %v2362
    %v2387 = vsel %vm2371, %v2379, %v2363
    %v2388 = vsel %vm2372, %v2380, %v2364
    %v2389 = vsel %vm2373, %v2381, %v2365
    %v2390 = vsel %vm2374, %v2382, %v2366
    %v2391 = vsel %vm2375, %v2383, %v2367
    %v2392 = vsel %vm2376, %v2384, %v2368
    %v2393 = vadd.f32 %v2385, 1.0
    %v2394 = vadd.f32 %v2386, 1.0
    %v2395 = vadd.f32 %v2387, 1.0
    %v2396 = vadd.f32 %v2388, 1.0
    %v2397 = vadd.f32 %v2389, 1.0
    %v2398 = vadd.f32 %v2390, 1.0
    %v2399 = vadd.f32 %v2391, 1.0
    %v2400 = vadd.f32 %v2392, 1.0
    %v2401 = vmul.f32 %v2089, %v2393
    %v2402 = vmul.f32 %v2090, %v2394
    %v2403 = vmul.f32 %v2091, %v2395
    %v2404 = vmul.f32 %v2092, %v2396
    %v2405 = vmul.f32 %v2093, %v2397
    %v2406 = vmul.f32 %v2094, %v2398
    %v2407 = vmul.f32 %v2095, %v2399
    %v2408 = vmul.f32 %v2096, %v2400
    %v2409 = vld [vmem:[%s1 + $0x48] sm:$0xf]
    %v2410 = vld [vmem:[%s1 + $0x4c] sm:$0xf]
    %v2411 = vld [vmem:[%s1 + $0x50] sm:$0xf]
    %v2412 = vld [vmem:[%s1 + $0x54] sm:$0xf]
    %v2413 = vld [vmem:[%s1 + $0x58] sm:$0xf]
    %v2414 = vld [vmem:[%s1 + $0x5c] sm:$0xf]
    %v2415 = vld [vmem:[%s1 + $0x60] sm:$0xf]
    %v2416 = vld [vmem:[%s1 + $0x64] sm:$0xf]
    %v2417 = vpack.c.bf16 %v2401, %v2401
    %v2418 = vpack.c.bf16 %v2402, %v2402
    %v2419 = vpack.c.bf16 %v2403, %v2403
    %v2420 = vpack.c.bf16 %v2404, %v2404
    %v2421 = vpack.c.bf16 %v2405, %v2405
    %v2422 = vpack.c.bf16 %v2406, %v2406
    %v2423 = vpack.c.bf16 %v2407, %v2407
    %v2424 = vpack.c.bf16 %v2408, %v2408
    %v2433 = vunpack.c.l.b16 %v2417
    %v2434 = vunpack.c.l.b16 %v2418
    %v2435 = vunpack.c.l.b16 %v2419
    %v2436 = vunpack.c.l.b16 %v2420
    %v2437 = vunpack.c.l.b16 %v2421
    %v2438 = vunpack.c.l.b16 %v2422
    %v2439 = vunpack.c.l.b16 %v2423
    %v2440 = vunpack.c.l.b16 %v2424
    %v2441 = vpack.c.b16 %v2434, %v2433
    %v2442 = vpack.c.b16 %v2436, %v2435
    %v2443 = vpack.c.b16 %v2438, %v2437
    %v2444 = vpack.c.b16 %v2440, %v2439
    %v2453 = vunpack.c.l.b16 %v2409
    %v2454 = vunpack.c.l.b16 %v2410
    %v2455 = vunpack.c.l.b16 %v2411
    %v2456 = vunpack.c.l.b16 %v2412
    %v2457 = vunpack.c.l.b16 %v2413
    %v2458 = vunpack.c.l.b16 %v2414
    %v2459 = vunpack.c.l.b16 %v2415
    %v2460 = vunpack.c.l.b16 %v2416
    %v2461 = vpack.c.b16 %v2454, %v2453
    %v2462 = vpack.c.b16 %v2456, %v2455
    %v2463 = vpack.c.b16 %v2458, %v2457
    %v2464 = vpack.c.b16 %v2460, %v2459
    %vm2469 = vcmask 523264
    %v2471 = vsel %vm2469, %v2441, 0
    %v2474 = vsel %vm2469, %v2442, 0
    %v2477 = vsel %vm2469, %v2443, 0
    %v2480 = vsel %vm2469, %v2444, 0
    %2482 = vmatpush.bf16.msra.mxu0 0
    %2483 = vmatpush.bf16.msra.mxu0 0
    %2484 = vmatpush.bf16.msra.mxu0 0
    %2485 = vmatpush.bf16.msra.mxu0 0
    %2486 = vmatpush.bf16.msra.mxu0 %v2464
    %2487 = vmatpush.bf16.msra.mxu0 %v2463
    %2488 = vmatpush.bf16.msra.mxu0 %v2462
    %2489 = vmatpush.bf16.msra.mxu0 %v2461
    %2490 = vmatmul.bf16.gmra.mxu0 %v2471
    %v2491 = vpop.f32.mrf.mxu0
    %v2492 = vadd.f32 0.0, %v2491
    %v2493 = vpop.f32.mrf.mxu0
    %v2494 = vadd.f32 0.0, %v2493
    %2495 = vmatmul.bf16.gmra.mxu0 %v2474
    %v2496 = vpop.f32.mrf.mxu0
    %v2497 = vadd.f32 0.0, %v2496
    %v2498 = vpop.f32.mrf.mxu0
    %v2499 = vadd.f32 0.0, %v2498
    %2500 = vmatmul.bf16.gmra.mxu0 %v2477
    %v2501 = vpop.f32.mrf.mxu0
    %v2502 = vadd.f32 0.0, %v2501
    %v2503 = vpop.f32.mrf.mxu0
    %v2504 = vadd.f32 0.0, %v2503
    %2505 = vmatmul.bf16.gmra.mxu0 %v2480
    %v2506 = vpop.f32.mrf.mxu0
    %v2507 = vadd.f32 0.0, %v2506
    %v2508 = vpop.f32.mrf.mxu0
    %v2509 = vadd.f32 0.0, %v2508
    %2510 = vdwg.mxu0
    %v2511 = vperm.slane %v21, 7
    %v2512 = vadd.f32 %v2492, %v2511
    %v2513 = vadd.f32 %v2494, %v2511
    %v2514 = vadd.f32 %v2497, %v2511
    %v2515 = vadd.f32 %v2499, %v2511
    %v2516 = vadd.f32 %v2502, %v2511
    %v2517 = vadd.f32 %v2504, %v2511
    %v2518 = vadd.f32 %v2507, %v2511
    %v2519 = vadd.f32 %v2509, %v2511
    %v2520 = vadd.f32 %v1793, %v2512
    %v2521 = vadd.f32 %v1794, %v2513
    %v2522 = vadd.f32 %v1795, %v2514
    %v2523 = vadd.f32 %v1796, %v2515
    %v2524 = vadd.f32 %v1797, %v2516
    %v2525 = vadd.f32 %v1798, %v2517
    %v2526 = vadd.f32 %v1799, %v2518
    %v2527 = vadd.f32 %v1800, %v2519
    %v2528 = vsel %vm172, %v2520, 0.0
    %2529 = vadd.xlane.f32.xlu0 %v2528
    %v2530 = vpop.xlane.xlu0 %2529
    %v2531 = vsel %vm172, %v2521, 0.0
    %2532 = vadd.xlane.f32.xlu0 %v2531
    %v2533 = vpop.xlane.xlu0 %2532
    %v2534 = vsel %vm172, %v2522, 0.0
    %2535 = vadd.xlane.f32.xlu0 %v2534
    %v2536 = vpop.xlane.xlu0 %2535
    %v2537 = vsel %vm172, %v2523, 0.0
    %2538 = vadd.xlane.f32.xlu0 %v2537
    %v2539 = vpop.xlane.xlu0 %2538
    %v2540 = vsel %vm172, %v2524, 0.0
    %2541 = vadd.xlane.f32.xlu0 %v2540
    %v2542 = vpop.xlane.xlu0 %2541
    %v2543 = vsel %vm172, %v2525, 0.0
    %2544 = vadd.xlane.f32.xlu0 %v2543
    %v2545 = vpop.xlane.xlu0 %2544
    %v2546 = vsel %vm172, %v2526, 0.0
    %2547 = vadd.xlane.f32.xlu0 %v2546
    %v2548 = vpop.xlane.xlu0 %2547
    %v2549 = vsel %vm172, %v2527, 0.0
    %2550 = vadd.xlane.f32.xlu0 %v2549
    %v2551 = vpop.xlane.xlu0 %2550
    %v2552 = vmul.f32 %v2530, %v203
    %v2553 = vmul.f32 %v2533, %v203
    %v2554 = vmul.f32 %v2536, %v203
    %v2555 = vmul.f32 %v2539, %v203
    %v2556 = vmul.f32 %v2542, %v203
    %v2557 = vmul.f32 %v2545, %v203
    %v2558 = vmul.f32 %v2548, %v203
    %v2559 = vmul.f32 %v2551, %v203
    %v2560 = vsub.f32 %v2520, %v2552
    %v2561 = vsub.f32 %v2521, %v2553
    %v2562 = vsub.f32 %v2522, %v2554
    %v2563 = vsub.f32 %v2523, %v2555
    %v2564 = vsub.f32 %v2524, %v2556
    %v2565 = vsub.f32 %v2525, %v2557
    %v2566 = vsub.f32 %v2526, %v2558
    %v2567 = vsub.f32 %v2527, %v2559
    %v2568 = vmul.f32 %v2560, %v2560
    %v2569 = vmul.f32 %v2561, %v2561
    %v2570 = vmul.f32 %v2562, %v2562
    %v2571 = vmul.f32 %v2563, %v2563
    %v2572 = vmul.f32 %v2564, %v2564
    %v2573 = vmul.f32 %v2565, %v2565
    %v2574 = vmul.f32 %v2566, %v2566
    %v2575 = vmul.f32 %v2567, %v2567
    %v2576 = vsel %vm172, %v2568, 0.0
    %2577 = vadd.xlane.f32.xlu0 %v2576
    %v2578 = vpop.xlane.xlu0 %2577
    %v2579 = vsel %vm172, %v2569, 0.0
    %2580 = vadd.xlane.f32.xlu0 %v2579
    %v2581 = vpop.xlane.xlu0 %2580
    %v2582 = vsel %vm172, %v2570, 0.0
    %2583 = vadd.xlane.f32.xlu0 %v2582
    %v2584 = vpop.xlane.xlu0 %2583
    %v2585 = vsel %vm172, %v2571, 0.0
    %2586 = vadd.xlane.f32.xlu0 %v2585
    %v2587 = vpop.xlane.xlu0 %2586
    %v2588 = vsel %vm172, %v2572, 0.0
    %2589 = vadd.xlane.f32.xlu0 %v2588
    %v2590 = vpop.xlane.xlu0 %2589
    %v2591 = vsel %vm172, %v2573, 0.0
    %2592 = vadd.xlane.f32.xlu0 %v2591
    %v2593 = vpop.xlane.xlu0 %2592
    %v2594 = vsel %vm172, %v2574, 0.0
    %2595 = vadd.xlane.f32.xlu0 %v2594
    %v2596 = vpop.xlane.xlu0 %2595
    %v2597 = vsel %vm172, %v2575, 0.0
    %2598 = vadd.xlane.f32.xlu0 %v2597
    %v2599 = vpop.xlane.xlu0 %2598
    %v2600 = vmul.f32 %v2578, %v203
    %v2601 = vmul.f32 %v2581, %v203
    %v2602 = vmul.f32 %v2584, %v203
    %v2603 = vmul.f32 %v2587, %v203
    %v2604 = vmul.f32 %v2590, %v203
    %v2605 = vmul.f32 %v2593, %v203
    %v2606 = vmul.f32 %v2596, %v203
    %v2607 = vmul.f32 %v2599, %v203
    %v2608 = vadd.f32 %v2600, 1e-05
    %v2609 = vadd.f32 %v2601, 1e-05
    %v2610 = vadd.f32 %v2602, 1e-05
    %v2611 = vadd.f32 %v2603, 1e-05
    %v2612 = vadd.f32 %v2604, 1e-05
    %v2613 = vadd.f32 %v2605, 1e-05
    %v2614 = vadd.f32 %v2606, 1e-05
    %v2615 = vadd.f32 %v2607, 1e-05
    %v2616 = vrsqrt.pop %v2608
    %v2617 = vmul.f32 %v2616, %v2608
    %v2618 = vmul.f32 %v2617, %v2616
    %v2619 = vmul.f32 0.5, %v2618
    %v2620 = vsub.f32 1.5, %v2619
    %v2621 = vmul.f32 %v2616, %v2620
    %vm2622 = vweird.f32 %v2608
    %vm2623 = vweird.f32 %v2616
    %vm2624 = vmor %vm2622, %vm2623
    %v2625 = vsel %vm2624, %v2616, %v2621
    %v2626 = vrsqrt.pop %v2609
    %v2627 = vmul.f32 %v2626, %v2609
    %v2628 = vmul.f32 %v2627, %v2626
    %v2629 = vmul.f32 0.5, %v2628
    %v2630 = vsub.f32 1.5, %v2629
    %v2631 = vmul.f32 %v2626, %v2630
    %vm2632 = vweird.f32 %v2609
    %vm2633 = vweird.f32 %v2626
    %vm2634 = vmor %vm2632, %vm2633
    %v2635 = vsel %vm2634, %v2626, %v2631
    %v2636 = vrsqrt.pop %v2610
    %v2637 = vmul.f32 %v2636, %v2610
    %v2638 = vmul.f32 %v2637, %v2636
    %v2639 = vmul.f32 0.5, %v2638
    %v2640 = vsub.f32 1.5, %v2639
    %v2641 = vmul.f32 %v2636, %v2640
    %vm2642 = vweird.f32 %v2610
    %vm2643 = vweird.f32 %v2636
    %vm2644 = vmor %vm2642, %vm2643
    %v2645 = vsel %vm2644, %v2636, %v2641
    %v2646 = vrsqrt.pop %v2611
    %v2647 = vmul.f32 %v2646, %v2611
    %v2648 = vmul.f32 %v2647, %v2646
    %v2649 = vmul.f32 0.5, %v2648
    %v2650 = vsub.f32 1.5, %v2649
    %v2651 = vmul.f32 %v2646, %v2650
    %vm2652 = vweird.f32 %v2611
    %vm2653 = vweird.f32 %v2646
    %vm2654 = vmor %vm2652, %vm2653
    %v2655 = vsel %vm2654, %v2646, %v2651
    %v2656 = vrsqrt.pop %v2612
    %v2657 = vmul.f32 %v2656, %v2612
    %v2658 = vmul.f32 %v2657, %v2656
    %v2659 = vmul.f32 0.5, %v2658
    %v2660 = vsub.f32 1.5, %v2659
    %v2661 = vmul.f32 %v2656, %v2660
    %vm2662 = vweird.f32 %v2612
    %vm2663 = vweird.f32 %v2656
    %vm2664 = vmor %vm2662, %vm2663
    %v2665 = vsel %vm2664, %v2656, %v2661
    %v2666 = vrsqrt.pop %v2613
    %v2667 = vmul.f32 %v2666, %v2613
    %v2668 = vmul.f32 %v2667, %v2666
    %v2669 = vmul.f32 0.5, %v2668
    %v2670 = vsub.f32 1.5, %v2669
    %v2671 = vmul.f32 %v2666, %v2670
    %vm2672 = vweird.f32 %v2613
    %vm2673 = vweird.f32 %v2666
    %vm2674 = vmor %vm2672, %vm2673
    %v2675 = vsel %vm2674, %v2666, %v2671
    %v2676 = vrsqrt.pop %v2614
    %v2677 = vmul.f32 %v2676, %v2614
    %v2678 = vmul.f32 %v2677, %v2676
    %v2679 = vmul.f32 0.5, %v2678
    %v2680 = vsub.f32 1.5, %v2679
    %v2681 = vmul.f32 %v2676, %v2680
    %vm2682 = vweird.f32 %v2614
    %vm2683 = vweird.f32 %v2676
    %vm2684 = vmor %vm2682, %vm2683
    %v2685 = vsel %vm2684, %v2676, %v2681
    %v2686 = vrsqrt.pop %v2615
    %v2687 = vmul.f32 %v2686, %v2615
    %v2688 = vmul.f32 %v2687, %v2686
    %v2689 = vmul.f32 0.5, %v2688
    %v2690 = vsub.f32 1.5, %v2689
    %v2691 = vmul.f32 %v2686, %v2690
    %vm2692 = vweird.f32 %v2615
    %vm2693 = vweird.f32 %v2686
    %vm2694 = vmor %vm2692, %vm2693
    %v2695 = vsel %vm2694, %v2686, %v2691
    %v2696 = vmul.f32 %v2560, %v2625
    %v2697 = vmul.f32 %v2561, %v2635
    %v2698 = vmul.f32 %v2562, %v2645
    %v2699 = vmul.f32 %v2563, %v2655
    %v2700 = vmul.f32 %v2564, %v2665
    %v2701 = vmul.f32 %v2565, %v2675
    %v2702 = vmul.f32 %v2566, %v2685
    %v2703 = vmul.f32 %v2567, %v2695
    %v2704 = vperm.slane %v22, 0
    %v2705 = vmul.f32 %v2696, %v2704
    %v2706 = vmul.f32 %v2697, %v2704
    %v2707 = vmul.f32 %v2698, %v2704
    %v2708 = vmul.f32 %v2699, %v2704
    %v2709 = vmul.f32 %v2700, %v2704
    %v2710 = vmul.f32 %v2701, %v2704
    %v2711 = vmul.f32 %v2702, %v2704
    %v2712 = vmul.f32 %v2703, %v2704
    %v2713 = vperm.slane %v22, 1
    %v2714 = vadd.f32 %v2705, %v2713
    %v2715 = vadd.f32 %v2706, %v2713
    %v2716 = vadd.f32 %v2707, %v2713
    %v2717 = vadd.f32 %v2708, %v2713
    %v2718 = vadd.f32 %v2709, %v2713
    %v2719 = vadd.f32 %v2710, %v2713
    %v2720 = vadd.f32 %v2711, %v2713
    %v2721 = vadd.f32 %v2712, %v2713
    %v2722 = vpack.c.bf16 %v2714, %v2714
    %v2723 = vpack.c.bf16 %v2715, %v2715
    %v2724 = vpack.c.bf16 %v2716, %v2716
    %v2725 = vpack.c.bf16 %v2717, %v2717
    %v2726 = vpack.c.bf16 %v2718, %v2718
    %v2727 = vpack.c.bf16 %v2719, %v2719
    %v2728 = vpack.c.bf16 %v2720, %v2720
    %v2729 = vpack.c.bf16 %v2721, %v2721
    %v2730 = vld [vmem:[%s1 + $0x68] sm:$0xf]
    %v2731 = vld [vmem:[%s1 + $0x6c] sm:$0xf]
    %v2732 = vld [vmem:[%s1 + $0x70] sm:$0xf]
    %v2733 = vld [vmem:[%s1 + $0x74] sm:$0xf]
    %v2742 = vunpack.c.l.b16 %v2722
    %v2743 = vunpack.c.l.b16 %v2723
    %v2744 = vunpack.c.l.b16 %v2724
    %v2745 = vunpack.c.l.b16 %v2725
    %v2746 = vunpack.c.l.b16 %v2726
    %v2747 = vunpack.c.l.b16 %v2727
    %v2748 = vunpack.c.l.b16 %v2728
    %v2749 = vunpack.c.l.b16 %v2729
    %v2750 = vpack.c.b16 %v2743, %v2742
    %v2751 = vpack.c.b16 %v2745, %v2744
    %v2752 = vpack.c.b16 %v2747, %v2746
    %v2753 = vpack.c.b16 %v2749, %v2748
    %v2758 = vunpack.c.l.b16 %v2730
    %v2759 = vunpack.c.l.b16 %v2731
    %v2760 = vunpack.c.l.b16 %v2732
    %v2761 = vunpack.c.l.b16 %v2733
    %v2762 = vpack.c.b16 %v2759, %v2758
    %v2763 = vpack.c.b16 %v2761, %v2760
    %v2767 = vsel %vm172, %v2750, 0
    %v2770 = vsel %vm172, %v2751, 0
    %v2773 = vsel %vm172, %v2752, 0
    %v2776 = vsel %vm172, %v2753, 0
    %2778 = vmatpush.bf16.msra.mxu0 0
    %2779 = vmatpush.bf16.msra.mxu0 0
    %2780 = vmatpush.bf16.msra.mxu0 0
    %2781 = vmatpush.bf16.msra.mxu0 0
    %2782 = vmatpush.bf16.msra.mxu0 0
    %2783 = vmatpush.bf16.msra.mxu0 0
    %2784 = vmatpush.bf16.msra.mxu0 %v2763
    %2785 = vmatpush.bf16.msra.mxu0 %v2762
    %2786 = vmatmul.bf16.gmra.mxu0 %v2767
    %v2787 = vpop.f32.mrf.mxu0
    %v2788 = vadd.f32 0.0, %v2787
    %v2789 = vpop.f32.mrf.mxu0
    %v2790 = vadd.f32 0.0, %v2789
    %2791 = vmatmul.bf16.gmra.mxu0 %v2770
    %v2792 = vpop.f32.mrf.mxu0
    %v2793 = vadd.f32 0.0, %v2792
    %v2794 = vpop.f32.mrf.mxu0
    %v2795 = vadd.f32 0.0, %v2794
    %2796 = vmatmul.bf16.gmra.mxu0 %v2773
    %v2797 = vpop.f32.mrf.mxu0
    %v2798 = vadd.f32 0.0, %v2797
    %v2799 = vpop.f32.mrf.mxu0
    %v2800 = vadd.f32 0.0, %v2799
    %2801 = vmatmul.bf16.gmra.mxu0 %v2776
    %v2802 = vpop.f32.mrf.mxu0
    %v2803 = vadd.f32 0.0, %v2802
    %v2804 = vpop.f32.mrf.mxu0
    %v2805 = vadd.f32 0.0, %v2804
    %2806 = vdwg.mxu0
    %v2807 = vperm.slane %v22, 2
    %v2808 = vadd.f32 %v2788, %v2807
    %v2809 = vadd.f32 %v2790, %v2807
    %v2810 = vadd.f32 %v2793, %v2807
    %v2811 = vadd.f32 %v2795, %v2807
    %v2812 = vadd.f32 %v2798, %v2807
    %v2813 = vadd.f32 %v2800, %v2807
    %v2814 = vadd.f32 %v2803, %v2807
    %v2815 = vadd.f32 %v2805, %v2807
    %v2816 = vpack.c.bf16 %v2808, %v2808
    %v2817 = vpack.c.bf16 %v2809, %v2809
    %v2818 = vpack.c.bf16 %v2810, %v2810
    %v2819 = vpack.c.bf16 %v2811, %v2811
    %v2820 = vpack.c.bf16 %v2812, %v2812
    %v2821 = vpack.c.bf16 %v2813, %v2813
    %v2822 = vpack.c.bf16 %v2814, %v2814
    %v2823 = vpack.c.bf16 %v2815, %v2815
    %v2828 = vunpack.c.l.b16 %v2816
    %v2829 = vunpack.c.l.b16 %v2817
    %v2830 = vunpack.c.l.b16 %v2818
    %v2831 = vunpack.c.l.b16 %v2819
    %v2832 = vpack.c.b16 %v2829, %v2828
    %v2833 = vpack.c.b16 %v2831, %v2830
    %2834 = vrot.lane.b32.xlu0 %v2832, 96
    %v2835 = vpop.permute.xlu0 %2834
    %2836 = vrot.lane.b32.xlu0 %v2833, 96
    %v2837 = vpop.permute.xlu0 %2836
    %v2839 = vsel %vm490, %v2832, 0
    %v2842 = vsel %vm490, %v2833, 0
    %v2845 = vsel %vm490, %v2835, 0
    %v2848 = vsel %vm490, %v2837, 0
    %2850 = vmatpush.bf16.xpose.msra.mxu0 0
    %2851 = vmatpush.bf16.xpose.msra.mxu0 0
    %2852 = vmatpush.bf16.xpose.msra.mxu0 0
    %2853 = vmatpush.bf16.xpose.msra.mxu0 0
    %2854 = vmatpush.bf16.xpose.msra.mxu0 0
    %2855 = vmatpush.bf16.xpose.msra.mxu0 0
    %2856 = vmatpush.bf16.xpose.msra.mxu0 %v2848
    %2857 = vmatpush.bf16.xpose.msra.mxu0 %v2845
    %2858 = vmatmul.bf16.gmra.mxu0 %v2839
    %v2859 = vpop.f32.mrf.mxu0
    %v2860 = vadd.f32 0.0, %v2859
    %v2861 = vpop.f32.mrf.mxu0
    %v2862 = vadd.f32 0.0, %v2861
    %2863 = vmatmul.bf16.gmra.mxu0 %v2842
    %v2864 = vpop.f32.mrf.mxu0
    %v2865 = vadd.f32 0.0, %v2864
    %v2866 = vpop.f32.mrf.mxu0
    %v2867 = vadd.f32 0.0, %v2866
    %2868 = vdwg.mxu0
    %v2873 = vunpack.c.l.b16 %v2820
    %v2874 = vunpack.c.l.b16 %v2821
    %v2875 = vunpack.c.l.b16 %v2822
    %v2876 = vunpack.c.l.b16 %v2823
    %v2877 = vpack.c.b16 %v2874, %v2873
    %v2878 = vpack.c.b16 %v2876, %v2875
    %2879 = vrot.lane.b32.xlu0 %v2877, 96
    %v2880 = vpop.permute.xlu0 %2879
    %2881 = vrot.lane.b32.xlu0 %v2878, 96
    %v2882 = vpop.permute.xlu0 %2881
    %v2884 = vsel %vm490, %v2877, 0
    %v2887 = vsel %vm490, %v2878, 0
    %v2890 = vsel %vm490, %v2880, 0
    %v2893 = vsel %vm490, %v2882, 0
    %2895 = vmatpush.bf16.xpose.msra.mxu0 0
    %2896 = vmatpush.bf16.xpose.msra.mxu0 0
    %2897 = vmatpush.bf16.xpose.msra.mxu0 0
    %2898 = vmatpush.bf16.xpose.msra.mxu0 0
    %2899 = vmatpush.bf16.xpose.msra.mxu0 0
    %2900 = vmatpush.bf16.xpose.msra.mxu0 0
    %2901 = vmatpush.bf16.xpose.msra.mxu0 %v2893
    %2902 = vmatpush.bf16.xpose.msra.mxu0 %v2890
    %2903 = vmatmul.bf16.gmra.mxu0 %v2884
    %v2904 = vpop.f32.mrf.mxu0
    %v2905 = vadd.f32 0.0, %v2904
    %v2906 = vpop.f32.mrf.mxu0
    %v2907 = vadd.f32 0.0, %v2906
    %2908 = vmatmul.bf16.gmra.mxu0 %v2887
    %v2909 = vpop.f32.mrf.mxu0
    %v2910 = vadd.f32 0.0, %v2909
    %v2911 = vpop.f32.mrf.mxu0
    %v2912 = vadd.f32 0.0, %v2911
    %2913 = vdwg.mxu0
    %v2914 = vmul.f32 %v2860, 0.35355338
    %v2915 = vmul.f32 %v2862, 0.35355338
    %v2916 = vmul.f32 %v2865, 0.35355338
    %v2917 = vmul.f32 %v2867, 0.35355338
    %v2918 = vmul.f32 %v2905, 0.35355338
    %v2919 = vmul.f32 %v2907, 0.35355338
    %v2920 = vmul.f32 %v2910, 0.35355338
    %v2921 = vmul.f32 %v2912, 0.35355338
    %v2922 = vadd.f32 %v2914, %v26
    %v2923 = vadd.f32 %v2915, %v26
    %v2924 = vadd.f32 %v2916, %v26
    %v2925 = vadd.f32 %v2917, %v26
    %v2926 = vadd.f32 %v2918, %v26
    %v2927 = vadd.f32 %v2919, %v26
    %v2928 = vadd.f32 %v2920, %v26
    %v2929 = vadd.f32 %v2921, %v26
    %v2930 = vsel %vm172, %v2922, -inf
    %2931 = vmax.xlane.f32.xlu0 %v2930
    %v2932 = vpop.xlane.xlu0 %2931
    %v2933 = vsel %vm172, %v2923, -inf
    %2934 = vmax.xlane.f32.xlu0 %v2933
    %v2935 = vpop.xlane.xlu0 %2934
    %v2936 = vsel %vm172, %v2924, -inf
    %2937 = vmax.xlane.f32.xlu0 %v2936
    %v2938 = vpop.xlane.xlu0 %2937
    %v2939 = vsel %vm172, %v2925, -inf
    %2940 = vmax.xlane.f32.xlu0 %v2939
    %v2941 = vpop.xlane.xlu0 %2940
    %v2942 = vsel %vm172, %v2926, -inf
    %2943 = vmax.xlane.f32.xlu0 %v2942
    %v2944 = vpop.xlane.xlu0 %2943
    %v2945 = vsel %vm172, %v2927, -inf
    %2946 = vmax.xlane.f32.xlu0 %v2945
    %v2947 = vpop.xlane.xlu0 %2946
    %v2948 = vsel %vm172, %v2928, -inf
    %2949 = vmax.xlane.f32.xlu0 %v2948
    %v2950 = vpop.xlane.xlu0 %2949
    %v2951 = vsel %vm172, %v2929, -inf
    %2952 = vmax.xlane.f32.xlu0 %v2951
    %v2953 = vpop.xlane.xlu0 %2952
    %v2954 = vsub.f32 %v2922, %v2932
    %v2955 = vsub.f32 %v2923, %v2935
    %v2956 = vsub.f32 %v2924, %v2938
    %v2957 = vsub.f32 %v2925, %v2941
    %v2958 = vsub.f32 %v2926, %v2944
    %v2959 = vsub.f32 %v2927, %v2947
    %v2960 = vsub.f32 %v2928, %v2950
    %v2961 = vsub.f32 %v2929, %v2953
    %v2962 = vmul.f32 %v2954, 1.442695
    %v2963 = vpow.pop %v2962
    %v2964 = vmul.f32 %v2955, 1.442695
    %v2965 = vpow.pop %v2964
    %v2966 = vmul.f32 %v2956, 1.442695
    %v2967 = vpow.pop %v2966
    %v2968 = vmul.f32 %v2957, 1.442695
    %v2969 = vpow.pop %v2968
    %v2970 = vmul.f32 %v2958, 1.442695
    %v2971 = vpow.pop %v2970
    %v2972 = vmul.f32 %v2959, 1.442695
    %v2973 = vpow.pop %v2972
    %v2974 = vmul.f32 %v2960, 1.442695
    %v2975 = vpow.pop %v2974
    %v2976 = vmul.f32 %v2961, 1.442695
    %v2977 = vpow.pop %v2976
    %v2978 = vsel %vm172, %v2963, 0.0
    %2979 = vadd.xlane.f32.xlu0 %v2978
    %v2980 = vpop.xlane.xlu0 %2979
    %v2981 = vsel %vm172, %v2965, 0.0
    %2982 = vadd.xlane.f32.xlu0 %v2981
    %v2983 = vpop.xlane.xlu0 %2982
    %v2984 = vsel %vm172, %v2967, 0.0
    %2985 = vadd.xlane.f32.xlu0 %v2984
    %v2986 = vpop.xlane.xlu0 %2985
    %v2987 = vsel %vm172, %v2969, 0.0
    %2988 = vadd.xlane.f32.xlu0 %v2987
    %v2989 = vpop.xlane.xlu0 %2988
    %v2990 = vsel %vm172, %v2971, 0.0
    %2991 = vadd.xlane.f32.xlu0 %v2990
    %v2992 = vpop.xlane.xlu0 %2991
    %v2993 = vsel %vm172, %v2973, 0.0
    %2994 = vadd.xlane.f32.xlu0 %v2993
    %v2995 = vpop.xlane.xlu0 %2994
    %v2996 = vsel %vm172, %v2975, 0.0
    %2997 = vadd.xlane.f32.xlu0 %v2996
    %v2998 = vpop.xlane.xlu0 %2997
    %v2999 = vsel %vm172, %v2977, 0.0
    %3000 = vadd.xlane.f32.xlu0 %v2999
    %v3001 = vpop.xlane.xlu0 %3000
    %v3002 = vrcp.pop %v2980
    %v3003 = vrcp.pop %v2983
    %v3004 = vrcp.pop %v2986
    %v3005 = vrcp.pop %v2989
    %v3006 = vrcp.pop %v2992
    %v3007 = vrcp.pop %v2995
    %v3008 = vrcp.pop %v2998
    %v3009 = vrcp.pop %v3001
    %v3010 = vmul.f32 %v2963, %v3002
    %v3011 = vmul.f32 %v2965, %v3003
    %v3012 = vmul.f32 %v2967, %v3004
    %v3013 = vmul.f32 %v2969, %v3005
    %v3014 = vmul.f32 %v2971, %v3006
    %v3015 = vmul.f32 %v2973, %v3007
    %v3016 = vmul.f32 %v2975, %v3008
    %v3017 = vmul.f32 %v2977, %v3009
    %v3018 = vpack.c.bf16 %v3010, %v3010
    %v3019 = vpack.c.bf16 %v3011, %v3011
    %v3020 = vpack.c.bf16 %v3012, %v3012
    %v3021 = vpack.c.bf16 %v3013, %v3013
    %v3022 = vpack.c.bf16 %v3014, %v3014
    %v3023 = vpack.c.bf16 %v3015, %v3015
    %v3024 = vpack.c.bf16 %v3016, %v3016
    %v3025 = vpack.c.bf16 %v3017, %v3017
    %v3030 = vunpack.c.l.b16 %v3018
    %v3031 = vunpack.c.l.b16 %v3019
    %v3032 = vunpack.c.l.b16 %v3020
    %v3033 = vunpack.c.l.b16 %v3021
    %v3034 = vpack.c.b16 %v3031, %v3030
    %v3035 = vpack.c.b16 %v3033, %v3032
    %3036 = vrot.lane.b32.xlu0 %v2832, 64
    %v3037 = vpop.permute.xlu0 %3036
    %3038 = vrot.lane.b32.xlu0 %v2833, 64
    %v3039 = vpop.permute.xlu0 %3038
    %v3043 = vsel %vm172, %v3034, 0
    %v3046 = vsel %vm172, %v3035, 0
    %3048 = vmatpush.bf16.msra.mxu0 0
    %3049 = vmatpush.bf16.msra.mxu0 0
    %3050 = vmatpush.bf16.msra.mxu0 0
    %3051 = vmatpush.bf16.msra.mxu0 0
    %3052 = vmatpush.bf16.msra.mxu0 0
    %3053 = vmatpush.bf16.msra.mxu0 0
    %3054 = vmatpush.bf16.msra.mxu0 %v3039
    %3055 = vmatpush.bf16.msra.mxu0 %v3037
    %3056 = vmatmul.bf16.gmra.mxu0 %v3043
    %v3057 = vpop.f32.mrf.mxu0
    %v3058 = vadd.f32 0.0, %v3057
    %v3059 = vpop.f32.mrf.mxu0
    %v3060 = vadd.f32 0.0, %v3059
    %3061 = vmatmul.bf16.gmra.mxu0 %v3046
    %v3062 = vpop.f32.mrf.mxu0
    %v3063 = vadd.f32 0.0, %v3062
    %v3064 = vpop.f32.mrf.mxu0
    %v3065 = vadd.f32 0.0, %v3064
    %3066 = vdwg.mxu0
    %v3071 = vunpack.c.l.b16 %v3022
    %v3072 = vunpack.c.l.b16 %v3023
    %v3073 = vunpack.c.l.b16 %v3024
    %v3074 = vunpack.c.l.b16 %v3025
    %v3075 = vpack.c.b16 %v3072, %v3071
    %v3076 = vpack.c.b16 %v3074, %v3073
    %3077 = vrot.lane.b32.xlu0 %v2877, 64
    %v3078 = vpop.permute.xlu0 %3077
    %3079 = vrot.lane.b32.xlu0 %v2878, 64
    %v3080 = vpop.permute.xlu0 %3079
    %v3084 = vsel %vm172, %v3075, 0
    %v3087 = vsel %vm172, %v3076, 0
    %3089 = vmatpush.bf16.msra.mxu0 0
    %3090 = vmatpush.bf16.msra.mxu0 0
    %3091 = vmatpush.bf16.msra.mxu0 0
    %3092 = vmatpush.bf16.msra.mxu0 0
    %3093 = vmatpush.bf16.msra.mxu0 0
    %3094 = vmatpush.bf16.msra.mxu0 0
    %3095 = vmatpush.bf16.msra.mxu0 %v3080
    %3096 = vmatpush.bf16.msra.mxu0 %v3078
    %3097 = vmatmul.bf16.gmra.mxu0 %v3084
    %v3098 = vpop.f32.mrf.mxu0
    %v3099 = vadd.f32 0.0, %v3098
    %v3100 = vpop.f32.mrf.mxu0
    %v3101 = vadd.f32 0.0, %v3100
    %3102 = vmatmul.bf16.gmra.mxu0 %v3087
    %v3103 = vpop.f32.mrf.mxu0
    %v3104 = vadd.f32 0.0, %v3103
    %v3105 = vpop.f32.mrf.mxu0
    %v3106 = vadd.f32 0.0, %v3105
    %3107 = vdwg.mxu0
    %3108 = vrot.lane.b32.xlu0 %v2832, 120
    %v3109 = vpop.permute.xlu0 %3108
    %3110 = vrot.lane.b32.xlu0 %v2833, 120
    %v3111 = vpop.permute.xlu0 %3110
    %3112 = vrot.lane.b32.xlu0 %v2832, 88
    %v3113 = vpop.permute.xlu0 %3112
    %3114 = vrot.lane.b32.xlu0 %v2833, 88
    %v3115 = vpop.permute.xlu0 %3114
    %v3117 = vsel %vm490, %v3109, 0
    %v3120 = vsel %vm490, %v3111, 0
    %v3123 = vsel %vm490, %v3113, 0
    %v3126 = vsel %vm490, %v3115, 0
    %3128 = vmatpush.bf16.xpose.msra.mxu0 0
    %3129 = vmatpush.bf16.xpose.msra.mxu0 0
    %3130 = vmatpush.bf16.xpose.msra.mxu0 0
    %3131 = vmatpush.bf16.xpose.msra.mxu0 0
    %3132 = vmatpush.bf16.xpose.msra.mxu0 0
    %3133 = vmatpush.bf16.xpose.msra.mxu0 0
    %3134 = vmatpush.bf16.xpose.msra.mxu0 %v3126
    %3135 = vmatpush.bf16.xpose.msra.mxu0 %v3123
    %3136 = vmatmul.bf16.gmra.mxu0 %v3117
    %v3137 = vpop.f32.mrf.mxu0
    %v3138 = vadd.f32 0.0, %v3137
    %v3139 = vpop.f32.mrf.mxu0
    %v3140 = vadd.f32 0.0, %v3139
    %3141 = vmatmul.bf16.gmra.mxu0 %v3120
    %v3142 = vpop.f32.mrf.mxu0
    %v3143 = vadd.f32 0.0, %v3142
    %v3144 = vpop.f32.mrf.mxu0
    %v3145 = vadd.f32 0.0, %v3144
    %3146 = vdwg.mxu0
    %3147 = vrot.lane.b32.xlu0 %v2877, 120
    %v3148 = vpop.permute.xlu0 %3147
    %3149 = vrot.lane.b32.xlu0 %v2878, 120
    %v3150 = vpop.permute.xlu0 %3149
    %3151 = vrot.lane.b32.xlu0 %v2877, 88
    %v3152 = vpop.permute.xlu0 %3151
    %3153 = vrot.lane.b32.xlu0 %v2878, 88
    %v3154 = vpop.permute.xlu0 %3153
    %v3156 = vsel %vm490, %v3148, 0
    %v3159 = vsel %vm490, %v3150, 0
    %v3162 = vsel %vm490, %v3152, 0
    %v3165 = vsel %vm490, %v3154, 0
    %3167 = vmatpush.bf16.xpose.msra.mxu0 0
    %3168 = vmatpush.bf16.xpose.msra.mxu0 0
    %3169 = vmatpush.bf16.xpose.msra.mxu0 0
    %3170 = vmatpush.bf16.xpose.msra.mxu0 0
    %3171 = vmatpush.bf16.xpose.msra.mxu0 0
    %3172 = vmatpush.bf16.xpose.msra.mxu0 0
    %3173 = vmatpush.bf16.xpose.msra.mxu0 %v3165
    %3174 = vmatpush.bf16.xpose.msra.mxu0 %v3162
    %3175 = vmatmul.bf16.gmra.mxu0 %v3156
    %v3176 = vpop.f32.mrf.mxu0
    %v3177 = vadd.f32 0.0, %v3176
    %v3178 = vpop.f32.mrf.mxu0
    %v3179 = vadd.f32 0.0, %v3178
    %3180 = vmatmul.bf16.gmra.mxu0 %v3159
    %v3181 = vpop.f32.mrf.mxu0
    %v3182 = vadd.f32 0.0, %v3181
    %v3183 = vpop.f32.mrf.mxu0
    %v3184 = vadd.f32 0.0, %v3183
    %3185 = vdwg.mxu0
    %v3186 = vmul.f32 %v3138, 0.35355338
    %v3187 = vmul.f32 %v3140, 0.35355338
    %v3188 = vmul.f32 %v3143, 0.35355338
    %v3189 = vmul.f32 %v3145, 0.35355338
    %v3190 = vmul.f32 %v3177, 0.35355338
    %v3191 = vmul.f32 %v3179, 0.35355338
    %v3192 = vmul.f32 %v3182, 0.35355338
    %v3193 = vmul.f32 %v3184, 0.35355338
    %v3194 = vadd.f32 %v3186, %v26
    %v3195 = vadd.f32 %v3187, %v26
    %v3196 = vadd.f32 %v3188, %v26
    %v3197 = vadd.f32 %v3189, %v26
    %v3198 = vadd.f32 %v3190, %v26
    %v3199 = vadd.f32 %v3191, %v26
    %v3200 = vadd.f32 %v3192, %v26
    %v3201 = vadd.f32 %v3193, %v26
    %v3202 = vsel %vm172, %v3194, -inf
    %3203 = vmax.xlane.f32.xlu0 %v3202
    %v3204 = vpop.xlane.xlu0 %3203
    %v3205 = vsel %vm172, %v3195, -inf
    %3206 = vmax.xlane.f32.xlu0 %v3205
    %v3207 = vpop.xlane.xlu0 %3206
    %v3208 = vsel %vm172, %v3196, -inf
    %3209 = vmax.xlane.f32.xlu0 %v3208
    %v3210 = vpop.xlane.xlu0 %3209
    %v3211 = vsel %vm172, %v3197, -inf
    %3212 = vmax.xlane.f32.xlu0 %v3211
    %v3213 = vpop.xlane.xlu0 %3212
    %v3214 = vsel %vm172, %v3198, -inf
    %3215 = vmax.xlane.f32.xlu0 %v3214
    %v3216 = vpop.xlane.xlu0 %3215
    %v3217 = vsel %vm172, %v3199, -inf
    %3218 = vmax.xlane.f32.xlu0 %v3217
    %v3219 = vpop.xlane.xlu0 %3218
    %v3220 = vsel %vm172, %v3200, -inf
    %3221 = vmax.xlane.f32.xlu0 %v3220
    %v3222 = vpop.xlane.xlu0 %3221
    %v3223 = vsel %vm172, %v3201, -inf
    %3224 = vmax.xlane.f32.xlu0 %v3223
    %v3225 = vpop.xlane.xlu0 %3224
    %v3226 = vsub.f32 %v3194, %v3204
    %v3227 = vsub.f32 %v3195, %v3207
    %v3228 = vsub.f32 %v3196, %v3210
    %v3229 = vsub.f32 %v3197, %v3213
    %v3230 = vsub.f32 %v3198, %v3216
    %v3231 = vsub.f32 %v3199, %v3219
    %v3232 = vsub.f32 %v3200, %v3222
    %v3233 = vsub.f32 %v3201, %v3225
    %v3234 = vmul.f32 %v3226, 1.442695
    %v3235 = vpow.pop %v3234
    %v3236 = vmul.f32 %v3227, 1.442695
    %v3237 = vpow.pop %v3236
    %v3238 = vmul.f32 %v3228, 1.442695
    %v3239 = vpow.pop %v3238
    %v3240 = vmul.f32 %v3229, 1.442695
    %v3241 = vpow.pop %v3240
    %v3242 = vmul.f32 %v3230, 1.442695
    %v3243 = vpow.pop %v3242
    %v3244 = vmul.f32 %v3231, 1.442695
    %v3245 = vpow.pop %v3244
    %v3246 = vmul.f32 %v3232, 1.442695
    %v3247 = vpow.pop %v3246
    %v3248 = vmul.f32 %v3233, 1.442695
    %v3249 = vpow.pop %v3248
    %v3250 = vsel %vm172, %v3235, 0.0
    %3251 = vadd.xlane.f32.xlu0 %v3250
    %v3252 = vpop.xlane.xlu0 %3251
    %v3253 = vsel %vm172, %v3237, 0.0
    %3254 = vadd.xlane.f32.xlu0 %v3253
    %v3255 = vpop.xlane.xlu0 %3254
    %v3256 = vsel %vm172, %v3239, 0.0
    %3257 = vadd.xlane.f32.xlu0 %v3256
    %v3258 = vpop.xlane.xlu0 %3257
    %v3259 = vsel %vm172, %v3241, 0.0
    %3260 = vadd.xlane.f32.xlu0 %v3259
    %v3261 = vpop.xlane.xlu0 %3260
    %v3262 = vsel %vm172, %v3243, 0.0
    %3263 = vadd.xlane.f32.xlu0 %v3262
    %v3264 = vpop.xlane.xlu0 %3263
    %v3265 = vsel %vm172, %v3245, 0.0
    %3266 = vadd.xlane.f32.xlu0 %v3265
    %v3267 = vpop.xlane.xlu0 %3266
    %v3268 = vsel %vm172, %v3247, 0.0
    %3269 = vadd.xlane.f32.xlu0 %v3268
    %v3270 = vpop.xlane.xlu0 %3269
    %v3271 = vsel %vm172, %v3249, 0.0
    %3272 = vadd.xlane.f32.xlu0 %v3271
    %v3273 = vpop.xlane.xlu0 %3272
    %v3274 = vrcp.pop %v3252
    %v3275 = vrcp.pop %v3255
    %v3276 = vrcp.pop %v3258
    %v3277 = vrcp.pop %v3261
    %v3278 = vrcp.pop %v3264
    %v3279 = vrcp.pop %v3267
    %v3280 = vrcp.pop %v3270
    %v3281 = vrcp.pop %v3273
    %v3282 = vmul.f32 %v3235, %v3274
    %v3283 = vmul.f32 %v3237, %v3275
    %v3284 = vmul.f32 %v3239, %v3276
    %v3285 = vmul.f32 %v3241, %v3277
    %v3286 = vmul.f32 %v3243, %v3278
    %v3287 = vmul.f32 %v3245, %v3279
    %v3288 = vmul.f32 %v3247, %v3280
    %v3289 = vmul.f32 %v3249, %v3281
    %v3290 = vpack.c.bf16 %v3282, %v3282
    %v3291 = vpack.c.bf16 %v3283, %v3283
    %v3292 = vpack.c.bf16 %v3284, %v3284
    %v3293 = vpack.c.bf16 %v3285, %v3285
    %v3294 = vpack.c.bf16 %v3286, %v3286
    %v3295 = vpack.c.bf16 %v3287, %v3287
    %v3296 = vpack.c.bf16 %v3288, %v3288
    %v3297 = vpack.c.bf16 %v3289, %v3289
    %v3302 = vunpack.c.l.b16 %v3290
    %v3303 = vunpack.c.l.b16 %v3291
    %v3304 = vunpack.c.l.b16 %v3292
    %v3305 = vunpack.c.l.b16 %v3293
    %v3306 = vpack.c.b16 %v3303, %v3302
    %v3307 = vpack.c.b16 %v3305, %v3304
    %3308 = vrot.lane.b32.xlu0 %v2832, 56
    %v3309 = vpop.permute.xlu0 %3308
    %3310 = vrot.lane.b32.xlu0 %v2833, 56
    %v3311 = vpop.permute.xlu0 %3310
    %v3315 = vsel %vm172, %v3306, 0
    %v3318 = vsel %vm172, %v3307, 0
    %3320 = vmatpush.bf16.msra.mxu0 0
    %3321 = vmatpush.bf16.msra.mxu0 0
    %3322 = vmatpush.bf16.msra.mxu0 0
    %3323 = vmatpush.bf16.msra.mxu0 0
    %3324 = vmatpush.bf16.msra.mxu0 0
    %3325 = vmatpush.bf16.msra.mxu0 0
    %3326 = vmatpush.bf16.msra.mxu0 %v3311
    %3327 = vmatpush.bf16.msra.mxu0 %v3309
    %3328 = vmatmul.bf16.gmra.mxu0 %v3315
    %v3329 = vpop.f32.mrf.mxu0
    %v3330 = vadd.f32 0.0, %v3329
    %v3331 = vpop.f32.mrf.mxu0
    %v3332 = vadd.f32 0.0, %v3331
    %3333 = vmatmul.bf16.gmra.mxu0 %v3318
    %v3334 = vpop.f32.mrf.mxu0
    %v3335 = vadd.f32 0.0, %v3334
    %v3336 = vpop.f32.mrf.mxu0
    %v3337 = vadd.f32 0.0, %v3336
    %3338 = vdwg.mxu0
    %v3343 = vunpack.c.l.b16 %v3294
    %v3344 = vunpack.c.l.b16 %v3295
    %v3345 = vunpack.c.l.b16 %v3296
    %v3346 = vunpack.c.l.b16 %v3297
    %v3347 = vpack.c.b16 %v3344, %v3343
    %v3348 = vpack.c.b16 %v3346, %v3345
    %3349 = vrot.lane.b32.xlu0 %v2877, 56
    %v3350 = vpop.permute.xlu0 %3349
    %3351 = vrot.lane.b32.xlu0 %v2878, 56
    %v3352 = vpop.permute.xlu0 %3351
    %v3356 = vsel %vm172, %v3347, 0
    %v3359 = vsel %vm172, %v3348, 0
    %3361 = vmatpush.bf16.msra.mxu0 0
    %3362 = vmatpush.bf16.msra.mxu0 0
    %3363 = vmatpush.bf16.msra.mxu0 0
    %3364 = vmatpush.bf16.msra.mxu0 0
    %3365 = vmatpush.bf16.msra.mxu0 0
    %3366 = vmatpush.bf16.msra.mxu0 0
    %3367 = vmatpush.bf16.msra.mxu0 %v3352
    %3368 = vmatpush.bf16.msra.mxu0 %v3350
    %3369 = vmatmul.bf16.gmra.mxu0 %v3356
    %v3370 = vpop.f32.mrf.mxu0
    %v3371 = vadd.f32 0.0, %v3370
    %v3372 = vpop.f32.mrf.mxu0
    %v3373 = vadd.f32 0.0, %v3372
    %3374 = vmatmul.bf16.gmra.mxu0 %v3359
    %v3375 = vpop.f32.mrf.mxu0
    %v3376 = vadd.f32 0.0, %v3375
    %v3377 = vpop.f32.mrf.mxu0
    %v3378 = vadd.f32 0.0, %v3377
    %3379 = vdwg.mxu0
    %3380 = vrot.lane.b32.xlu0 %v2832, 112
    %v3381 = vpop.permute.xlu0 %3380
    %3382 = vrot.lane.b32.xlu0 %v2833, 112
    %v3383 = vpop.permute.xlu0 %3382
    %3384 = vrot.lane.b32.xlu0 %v2832, 80
    %v3385 = vpop.permute.xlu0 %3384
    %3386 = vrot.lane.b32.xlu0 %v2833, 80
    %v3387 = vpop.permute.xlu0 %3386
    %v3389 = vsel %vm490, %v3381, 0
    %v3392 = vsel %vm490, %v3383, 0
    %v3395 = vsel %vm490, %v3385, 0
    %v3398 = vsel %vm490, %v3387, 0
    %3400 = vmatpush.bf16.xpose.msra.mxu0 0
    %3401 = vmatpush.bf16.xpose.msra.mxu0 0
    %3402 = vmatpush.bf16.xpose.msra.mxu0 0
    %3403 = vmatpush.bf16.xpose.msra.mxu0 0
    %3404 = vmatpush.bf16.xpose.msra.mxu0 0
    %3405 = vmatpush.bf16.xpose.msra.mxu0 0
    %3406 = vmatpush.bf16.xpose.msra.mxu0 %v3398
    %3407 = vmatpush.bf16.xpose.msra.mxu0 %v3395
    %3408 = vmatmul.bf16.gmra.mxu0 %v3389
    %v3409 = vpop.f32.mrf.mxu0
    %v3410 = vadd.f32 0.0, %v3409
    %v3411 = vpop.f32.mrf.mxu0
    %v3412 = vadd.f32 0.0, %v3411
    %3413 = vmatmul.bf16.gmra.mxu0 %v3392
    %v3414 = vpop.f32.mrf.mxu0
    %v3415 = vadd.f32 0.0, %v3414
    %v3416 = vpop.f32.mrf.mxu0
    %v3417 = vadd.f32 0.0, %v3416
    %3418 = vdwg.mxu0
    %3419 = vrot.lane.b32.xlu0 %v2877, 112
    %v3420 = vpop.permute.xlu0 %3419
    %3421 = vrot.lane.b32.xlu0 %v2878, 112
    %v3422 = vpop.permute.xlu0 %3421
    %3423 = vrot.lane.b32.xlu0 %v2877, 80
    %v3424 = vpop.permute.xlu0 %3423
    %3425 = vrot.lane.b32.xlu0 %v2878, 80
    %v3426 = vpop.permute.xlu0 %3425
    %v3428 = vsel %vm490, %v3420, 0
    %v3431 = vsel %vm490, %v3422, 0
    %v3434 = vsel %vm490, %v3424, 0
    %v3437 = vsel %vm490, %v3426, 0
    %3439 = vmatpush.bf16.xpose.msra.mxu0 0
    %3440 = vmatpush.bf16.xpose.msra.mxu0 0
    %3441 = vmatpush.bf16.xpose.msra.mxu0 0
    %3442 = vmatpush.bf16.xpose.msra.mxu0 0
    %3443 = vmatpush.bf16.xpose.msra.mxu0 0
    %3444 = vmatpush.bf16.xpose.msra.mxu0 0
    %3445 = vmatpush.bf16.xpose.msra.mxu0 %v3437
    %3446 = vmatpush.bf16.xpose.msra.mxu0 %v3434
    %3447 = vmatmul.bf16.gmra.mxu0 %v3428
    %v3448 = vpop.f32.mrf.mxu0
    %v3449 = vadd.f32 0.0, %v3448
    %v3450 = vpop.f32.mrf.mxu0
    %v3451 = vadd.f32 0.0, %v3450
    %3452 = vmatmul.bf16.gmra.mxu0 %v3431
    %v3453 = vpop.f32.mrf.mxu0
    %v3454 = vadd.f32 0.0, %v3453
    %v3455 = vpop.f32.mrf.mxu0
    %v3456 = vadd.f32 0.0, %v3455
    %3457 = vdwg.mxu0
    %v3458 = vmul.f32 %v3410, 0.35355338
    %v3459 = vmul.f32 %v3412, 0.35355338
    %v3460 = vmul.f32 %v3415, 0.35355338
    %v3461 = vmul.f32 %v3417, 0.35355338
    %v3462 = vmul.f32 %v3449, 0.35355338
    %v3463 = vmul.f32 %v3451, 0.35355338
    %v3464 = vmul.f32 %v3454, 0.35355338
    %v3465 = vmul.f32 %v3456, 0.35355338
    %v3466 = vadd.f32 %v3458, %v26
    %v3467 = vadd.f32 %v3459, %v26
    %v3468 = vadd.f32 %v3460, %v26
    %v3469 = vadd.f32 %v3461, %v26
    %v3470 = vadd.f32 %v3462, %v26
    %v3471 = vadd.f32 %v3463, %v26
    %v3472 = vadd.f32 %v3464, %v26
    %v3473 = vadd.f32 %v3465, %v26
    %v3474 = vsel %vm172, %v3466, -inf
    %3475 = vmax.xlane.f32.xlu0 %v3474
    %v3476 = vpop.xlane.xlu0 %3475
    %v3477 = vsel %vm172, %v3467, -inf
    %3478 = vmax.xlane.f32.xlu0 %v3477
    %v3479 = vpop.xlane.xlu0 %3478
    %v3480 = vsel %vm172, %v3468, -inf
    %3481 = vmax.xlane.f32.xlu0 %v3480
    %v3482 = vpop.xlane.xlu0 %3481
    %v3483 = vsel %vm172, %v3469, -inf
    %3484 = vmax.xlane.f32.xlu0 %v3483
    %v3485 = vpop.xlane.xlu0 %3484
    %v3486 = vsel %vm172, %v3470, -inf
    %3487 = vmax.xlane.f32.xlu0 %v3486
    %v3488 = vpop.xlane.xlu0 %3487
    %v3489 = vsel %vm172, %v3471, -inf
    %3490 = vmax.xlane.f32.xlu0 %v3489
    %v3491 = vpop.xlane.xlu0 %3490
    %v3492 = vsel %vm172, %v3472, -inf
    %3493 = vmax.xlane.f32.xlu0 %v3492
    %v3494 = vpop.xlane.xlu0 %3493
    %v3495 = vsel %vm172, %v3473, -inf
    %3496 = vmax.xlane.f32.xlu0 %v3495
    %v3497 = vpop.xlane.xlu0 %3496
    %v3498 = vsub.f32 %v3466, %v3476
    %v3499 = vsub.f32 %v3467, %v3479
    %v3500 = vsub.f32 %v3468, %v3482
    %v3501 = vsub.f32 %v3469, %v3485
    %v3502 = vsub.f32 %v3470, %v3488
    %v3503 = vsub.f32 %v3471, %v3491
    %v3504 = vsub.f32 %v3472, %v3494
    %v3505 = vsub.f32 %v3473, %v3497
    %v3506 = vmul.f32 %v3498, 1.442695
    %v3507 = vpow.pop %v3506
    %v3508 = vmul.f32 %v3499, 1.442695
    %v3509 = vpow.pop %v3508
    %v3510 = vmul.f32 %v3500, 1.442695
    %v3511 = vpow.pop %v3510
    %v3512 = vmul.f32 %v3501, 1.442695
    %v3513 = vpow.pop %v3512
    %v3514 = vmul.f32 %v3502, 1.442695
    %v3515 = vpow.pop %v3514
    %v3516 = vmul.f32 %v3503, 1.442695
    %v3517 = vpow.pop %v3516
    %v3518 = vmul.f32 %v3504, 1.442695
    %v3519 = vpow.pop %v3518
    %v3520 = vmul.f32 %v3505, 1.442695
    %v3521 = vpow.pop %v3520
    %v3522 = vsel %vm172, %v3507, 0.0
    %3523 = vadd.xlane.f32.xlu0 %v3522
    %v3524 = vpop.xlane.xlu0 %3523
    %v3525 = vsel %vm172, %v3509, 0.0
    %3526 = vadd.xlane.f32.xlu0 %v3525
    %v3527 = vpop.xlane.xlu0 %3526
    %v3528 = vsel %vm172, %v3511, 0.0
    %3529 = vadd.xlane.f32.xlu0 %v3528
    %v3530 = vpop.xlane.xlu0 %3529
    %v3531 = vsel %vm172, %v3513, 0.0
    %3532 = vadd.xlane.f32.xlu0 %v3531
    %v3533 = vpop.xlane.xlu0 %3532
    %v3534 = vsel %vm172, %v3515, 0.0
    %3535 = vadd.xlane.f32.xlu0 %v3534
    %v3536 = vpop.xlane.xlu0 %3535
    %v3537 = vsel %vm172, %v3517, 0.0
    %3538 = vadd.xlane.f32.xlu0 %v3537
    %v3539 = vpop.xlane.xlu0 %3538
    %v3540 = vsel %vm172, %v3519, 0.0
    %3541 = vadd.xlane.f32.xlu0 %v3540
    %v3542 = vpop.xlane.xlu0 %3541
    %v3543 = vsel %vm172, %v3521, 0.0
    %3544 = vadd.xlane.f32.xlu0 %v3543
    %v3545 = vpop.xlane.xlu0 %3544
    %v3546 = vrcp.pop %v3524
    %v3547 = vrcp.pop %v3527
    %v3548 = vrcp.pop %v3530
    %v3549 = vrcp.pop %v3533
    %v3550 = vrcp.pop %v3536
    %v3551 = vrcp.pop %v3539
    %v3552 = vrcp.pop %v3542
    %v3553 = vrcp.pop %v3545
    %v3554 = vmul.f32 %v3507, %v3546
    %v3555 = vmul.f32 %v3509, %v3547
    %v3556 = vmul.f32 %v3511, %v3548
    %v3557 = vmul.f32 %v3513, %v3549
    %v3558 = vmul.f32 %v3515, %v3550
    %v3559 = vmul.f32 %v3517, %v3551
    %v3560 = vmul.f32 %v3519, %v3552
    %v3561 = vmul.f32 %v3521, %v3553
    %v3562 = vpack.c.bf16 %v3554, %v3554
    %v3563 = vpack.c.bf16 %v3555, %v3555
    %v3564 = vpack.c.bf16 %v3556, %v3556
    %v3565 = vpack.c.bf16 %v3557, %v3557
    %v3566 = vpack.c.bf16 %v3558, %v3558
    %v3567 = vpack.c.bf16 %v3559, %v3559
    %v3568 = vpack.c.bf16 %v3560, %v3560
    %v3569 = vpack.c.bf16 %v3561, %v3561
    %v3574 = vunpack.c.l.b16 %v3562
    %v3575 = vunpack.c.l.b16 %v3563
    %v3576 = vunpack.c.l.b16 %v3564
    %v3577 = vunpack.c.l.b16 %v3565
    %v3578 = vpack.c.b16 %v3575, %v3574
    %v3579 = vpack.c.b16 %v3577, %v3576
    %3580 = vrot.lane.b32.xlu0 %v2832, 48
    %v3581 = vpop.permute.xlu0 %3580
    %3582 = vrot.lane.b32.xlu0 %v2833, 48
    %v3583 = vpop.permute.xlu0 %3582
    %v3587 = vsel %vm172, %v3578, 0
    %v3590 = vsel %vm172, %v3579, 0
    %3592 = vmatpush.bf16.msra.mxu0 0
    %3593 = vmatpush.bf16.msra.mxu0 0
    %3594 = vmatpush.bf16.msra.mxu0 0
    %3595 = vmatpush.bf16.msra.mxu0 0
    %3596 = vmatpush.bf16.msra.mxu0 0
    %3597 = vmatpush.bf16.msra.mxu0 0
    %3598 = vmatpush.bf16.msra.mxu0 %v3583
    %3599 = vmatpush.bf16.msra.mxu0 %v3581
    %3600 = vmatmul.bf16.gmra.mxu0 %v3587
    %v3601 = vpop.f32.mrf.mxu0
    %v3602 = vadd.f32 0.0, %v3601
    %v3603 = vpop.f32.mrf.mxu0
    %v3604 = vadd.f32 0.0, %v3603
    %3605 = vmatmul.bf16.gmra.mxu0 %v3590
    %v3606 = vpop.f32.mrf.mxu0
    %v3607 = vadd.f32 0.0, %v3606
    %v3608 = vpop.f32.mrf.mxu0
    %v3609 = vadd.f32 0.0, %v3608
    %3610 = vdwg.mxu0
    %v3615 = vunpack.c.l.b16 %v3566
    %v3616 = vunpack.c.l.b16 %v3567
    %v3617 = vunpack.c.l.b16 %v3568
    %v3618 = vunpack.c.l.b16 %v3569
    %v3619 = vpack.c.b16 %v3616, %v3615
    %v3620 = vpack.c.b16 %v3618, %v3617
    %3621 = vrot.lane.b32.xlu0 %v2877, 48
    %v3622 = vpop.permute.xlu0 %3621
    %3623 = vrot.lane.b32.xlu0 %v2878, 48
    %v3624 = vpop.permute.xlu0 %3623
    %v3628 = vsel %vm172, %v3619, 0
    %v3631 = vsel %vm172, %v3620, 0
    %3633 = vmatpush.bf16.msra.mxu0 0
    %3634 = vmatpush.bf16.msra.mxu0 0
    %3635 = vmatpush.bf16.msra.mxu0 0
    %3636 = vmatpush.bf16.msra.mxu0 0
    %3637 = vmatpush.bf16.msra.mxu0 0
    %3638 = vmatpush.bf16.msra.mxu0 0
    %3639 = vmatpush.bf16.msra.mxu0 %v3624
    %3640 = vmatpush.bf16.msra.mxu0 %v3622
    %3641 = vmatmul.bf16.gmra.mxu0 %v3628
    %v3642 = vpop.f32.mrf.mxu0
    %v3643 = vadd.f32 0.0, %v3642
    %v3644 = vpop.f32.mrf.mxu0
    %v3645 = vadd.f32 0.0, %v3644
    %3646 = vmatmul.bf16.gmra.mxu0 %v3631
    %v3647 = vpop.f32.mrf.mxu0
    %v3648 = vadd.f32 0.0, %v3647
    %v3649 = vpop.f32.mrf.mxu0
    %v3650 = vadd.f32 0.0, %v3649
    %3651 = vdwg.mxu0
    %3652 = vrot.lane.b32.xlu0 %v2832, 104
    %v3653 = vpop.permute.xlu0 %3652
    %3654 = vrot.lane.b32.xlu0 %v2833, 104
    %v3655 = vpop.permute.xlu0 %3654
    %3656 = vrot.lane.b32.xlu0 %v2832, 72
    %v3657 = vpop.permute.xlu0 %3656
    %3658 = vrot.lane.b32.xlu0 %v2833, 72
    %v3659 = vpop.permute.xlu0 %3658
    %v3661 = vsel %vm490, %v3653, 0
    %v3664 = vsel %vm490, %v3655, 0
    %v3667 = vsel %vm490, %v3657, 0
    %v3670 = vsel %vm490, %v3659, 0
    %3672 = vmatpush.bf16.xpose.msra.mxu0 0
    %3673 = vmatpush.bf16.xpose.msra.mxu0 0
    %3674 = vmatpush.bf16.xpose.msra.mxu0 0
    %3675 = vmatpush.bf16.xpose.msra.mxu0 0
    %3676 = vmatpush.bf16.xpose.msra.mxu0 0
    %3677 = vmatpush.bf16.xpose.msra.mxu0 0
    %3678 = vmatpush.bf16.xpose.msra.mxu0 %v3670
    %3679 = vmatpush.bf16.xpose.msra.mxu0 %v3667
    %3680 = vmatmul.bf16.gmra.mxu0 %v3661
    %v3681 = vpop.f32.mrf.mxu0
    %v3682 = vadd.f32 0.0, %v3681
    %v3683 = vpop.f32.mrf.mxu0
    %v3684 = vadd.f32 0.0, %v3683
    %3685 = vmatmul.bf16.gmra.mxu0 %v3664
    %v3686 = vpop.f32.mrf.mxu0
    %v3687 = vadd.f32 0.0, %v3686
    %v3688 = vpop.f32.mrf.mxu0
    %v3689 = vadd.f32 0.0, %v3688
    %3690 = vdwg.mxu0
    %3691 = vrot.lane.b32.xlu0 %v2877, 104
    %v3692 = vpop.permute.xlu0 %3691
    %3693 = vrot.lane.b32.xlu0 %v2878, 104
    %v3694 = vpop.permute.xlu0 %3693
    %3695 = vrot.lane.b32.xlu0 %v2877, 72
    %v3696 = vpop.permute.xlu0 %3695
    %3697 = vrot.lane.b32.xlu0 %v2878, 72
    %v3698 = vpop.permute.xlu0 %3697
    %v3700 = vsel %vm490, %v3692, 0
    %v3703 = vsel %vm490, %v3694, 0
    %v3706 = vsel %vm490, %v3696, 0
    %v3709 = vsel %vm490, %v3698, 0
    %3711 = vmatpush.bf16.xpose.msra.mxu0 0
    %3712 = vmatpush.bf16.xpose.msra.mxu0 0
    %3713 = vmatpush.bf16.xpose.msra.mxu0 0
    %3714 = vmatpush.bf16.xpose.msra.mxu0 0
    %3715 = vmatpush.bf16.xpose.msra.mxu0 0
    %3716 = vmatpush.bf16.xpose.msra.mxu0 0
    %3717 = vmatpush.bf16.xpose.msra.mxu0 %v3709
    %3718 = vmatpush.bf16.xpose.msra.mxu0 %v3706
    %3719 = vmatmul.bf16.gmra.mxu0 %v3700
    %v3720 = vpop.f32.mrf.mxu0
    %v3721 = vadd.f32 0.0, %v3720
    %v3722 = vpop.f32.mrf.mxu0
    %v3723 = vadd.f32 0.0, %v3722
    %3724 = vmatmul.bf16.gmra.mxu0 %v3703
    %v3725 = vpop.f32.mrf.mxu0
    %v3726 = vadd.f32 0.0, %v3725
    %v3727 = vpop.f32.mrf.mxu0
    %v3728 = vadd.f32 0.0, %v3727
    %3729 = vdwg.mxu0
    %v3730 = vmul.f32 %v3682, 0.35355338
    %v3731 = vmul.f32 %v3684, 0.35355338
    %v3732 = vmul.f32 %v3687, 0.35355338
    %v3733 = vmul.f32 %v3689, 0.35355338
    %v3734 = vmul.f32 %v3721, 0.35355338
    %v3735 = vmul.f32 %v3723, 0.35355338
    %v3736 = vmul.f32 %v3726, 0.35355338
    %v3737 = vmul.f32 %v3728, 0.35355338
    %v3738 = vadd.f32 %v3730, %v26
    %v3739 = vadd.f32 %v3731, %v26
    %v3740 = vadd.f32 %v3732, %v26
    %v3741 = vadd.f32 %v3733, %v26
    %v3742 = vadd.f32 %v3734, %v26
    %v3743 = vadd.f32 %v3735, %v26
    %v3744 = vadd.f32 %v3736, %v26
    %v3745 = vadd.f32 %v3737, %v26
    %v3746 = vsel %vm172, %v3738, -inf
    %3747 = vmax.xlane.f32.xlu0 %v3746
    %v3748 = vpop.xlane.xlu0 %3747
    %v3749 = vsel %vm172, %v3739, -inf
    %3750 = vmax.xlane.f32.xlu0 %v3749
    %v3751 = vpop.xlane.xlu0 %3750
    %v3752 = vsel %vm172, %v3740, -inf
    %3753 = vmax.xlane.f32.xlu0 %v3752
    %v3754 = vpop.xlane.xlu0 %3753
    %v3755 = vsel %vm172, %v3741, -inf
    %3756 = vmax.xlane.f32.xlu0 %v3755
    %v3757 = vpop.xlane.xlu0 %3756
    %v3758 = vsel %vm172, %v3742, -inf
    %3759 = vmax.xlane.f32.xlu0 %v3758
    %v3760 = vpop.xlane.xlu0 %3759
    %v3761 = vsel %vm172, %v3743, -inf
    %3762 = vmax.xlane.f32.xlu0 %v3761
    %v3763 = vpop.xlane.xlu0 %3762
    %v3764 = vsel %vm172, %v3744, -inf
    %3765 = vmax.xlane.f32.xlu0 %v3764
    %v3766 = vpop.xlane.xlu0 %3765
    %v3767 = vsel %vm172, %v3745, -inf
    %3768 = vmax.xlane.f32.xlu0 %v3767
    %v3769 = vpop.xlane.xlu0 %3768
    %v3770 = vsub.f32 %v3738, %v3748
    %v3771 = vsub.f32 %v3739, %v3751
    %v3772 = vsub.f32 %v3740, %v3754
    %v3773 = vsub.f32 %v3741, %v3757
    %v3774 = vsub.f32 %v3742, %v3760
    %v3775 = vsub.f32 %v3743, %v3763
    %v3776 = vsub.f32 %v3744, %v3766
    %v3777 = vsub.f32 %v3745, %v3769
    %v3778 = vmul.f32 %v3770, 1.442695
    %v3779 = vpow.pop %v3778
    %v3780 = vmul.f32 %v3771, 1.442695
    %v3781 = vpow.pop %v3780
    %v3782 = vmul.f32 %v3772, 1.442695
    %v3783 = vpow.pop %v3782
    %v3784 = vmul.f32 %v3773, 1.442695
    %v3785 = vpow.pop %v3784
    %v3786 = vmul.f32 %v3774, 1.442695
    %v3787 = vpow.pop %v3786
    %v3788 = vmul.f32 %v3775, 1.442695
    %v3789 = vpow.pop %v3788
    %v3790 = vmul.f32 %v3776, 1.442695
    %v3791 = vpow.pop %v3790
    %v3792 = vmul.f32 %v3777, 1.442695
    %v3793 = vpow.pop %v3792
    %v3794 = vsel %vm172, %v3779, 0.0
    %3795 = vadd.xlane.f32.xlu0 %v3794
    %v3796 = vpop.xlane.xlu0 %3795
    %v3797 = vsel %vm172, %v3781, 0.0
    %3798 = vadd.xlane.f32.xlu0 %v3797
    %v3799 = vpop.xlane.xlu0 %3798
    %v3800 = vsel %vm172, %v3783, 0.0
    %3801 = vadd.xlane.f32.xlu0 %v3800
    %v3802 = vpop.xlane.xlu0 %3801
    %v3803 = vsel %vm172, %v3785, 0.0
    %3804 = vadd.xlane.f32.xlu0 %v3803
    %v3805 = vpop.xlane.xlu0 %3804
    %v3806 = vsel %vm172, %v3787, 0.0
    %3807 = vadd.xlane.f32.xlu0 %v3806
    %v3808 = vpop.xlane.xlu0 %3807
    %v3809 = vsel %vm172, %v3789, 0.0
    %3810 = vadd.xlane.f32.xlu0 %v3809
    %v3811 = vpop.xlane.xlu0 %3810
    %v3812 = vsel %vm172, %v3791, 0.0
    %3813 = vadd.xlane.f32.xlu0 %v3812
    %v3814 = vpop.xlane.xlu0 %3813
    %v3815 = vsel %vm172, %v3793, 0.0
    %3816 = vadd.xlane.f32.xlu0 %v3815
    %v3817 = vpop.xlane.xlu0 %3816
    %v3818 = vrcp.pop %v3796
    %v3819 = vrcp.pop %v3799
    %v3820 = vrcp.pop %v3802
    %v3821 = vrcp.pop %v3805
    %v3822 = vrcp.pop %v3808
    %v3823 = vrcp.pop %v3811
    %v3824 = vrcp.pop %v3814
    %v3825 = vrcp.pop %v3817
    %v3826 = vmul.f32 %v3779, %v3818
    %v3827 = vmul.f32 %v3781, %v3819
    %v3828 = vmul.f32 %v3783, %v3820
    %v3829 = vmul.f32 %v3785, %v3821
    %v3830 = vmul.f32 %v3787, %v3822
    %v3831 = vmul.f32 %v3789, %v3823
    %v3832 = vmul.f32 %v3791, %v3824
    %v3833 = vmul.f32 %v3793, %v3825
    %v3834 = vpack.c.bf16 %v3826, %v3826
    %v3835 = vpack.c.bf16 %v3827, %v3827
    %v3836 = vpack.c.bf16 %v3828, %v3828
    %v3837 = vpack.c.bf16 %v3829, %v3829
    %v3838 = vpack.c.bf16 %v3830, %v3830
    %v3839 = vpack.c.bf16 %v3831, %v3831
    %v3840 = vpack.c.bf16 %v3832, %v3832
    %v3841 = vpack.c.bf16 %v3833, %v3833
    %v3846 = vunpack.c.l.b16 %v3834
    %v3847 = vunpack.c.l.b16 %v3835
    %v3848 = vunpack.c.l.b16 %v3836
    %v3849 = vunpack.c.l.b16 %v3837
    %v3850 = vpack.c.b16 %v3847, %v3846
    %v3851 = vpack.c.b16 %v3849, %v3848
    %3852 = vrot.lane.b32.xlu0 %v2832, 40
    %v3853 = vpop.permute.xlu0 %3852
    %3854 = vrot.lane.b32.xlu0 %v2833, 40
    %v3855 = vpop.permute.xlu0 %3854
    %v3859 = vsel %vm172, %v3850, 0
    %v3862 = vsel %vm172, %v3851, 0
    %3864 = vmatpush.bf16.msra.mxu0 0
    %3865 = vmatpush.bf16.msra.mxu0 0
    %3866 = vmatpush.bf16.msra.mxu0 0
    %3867 = vmatpush.bf16.msra.mxu0 0
    %3868 = vmatpush.bf16.msra.mxu0 0
    %3869 = vmatpush.bf16.msra.mxu0 0
    %3870 = vmatpush.bf16.msra.mxu0 %v3855
    %3871 = vmatpush.bf16.msra.mxu0 %v3853
    %3872 = vmatmul.bf16.gmra.mxu0 %v3859
    %v3873 = vpop.f32.mrf.mxu0
    %v3874 = vadd.f32 0.0, %v3873
    %v3875 = vpop.f32.mrf.mxu0
    %v3876 = vadd.f32 0.0, %v3875
    %3877 = vmatmul.bf16.gmra.mxu0 %v3862
    %v3878 = vpop.f32.mrf.mxu0
    %v3879 = vadd.f32 0.0, %v3878
    %v3880 = vpop.f32.mrf.mxu0
    %v3881 = vadd.f32 0.0, %v3880
    %3882 = vdwg.mxu0
    %v3887 = vunpack.c.l.b16 %v3838
    %v3888 = vunpack.c.l.b16 %v3839
    %v3889 = vunpack.c.l.b16 %v3840
    %v3890 = vunpack.c.l.b16 %v3841
    %v3891 = vpack.c.b16 %v3888, %v3887
    %v3892 = vpack.c.b16 %v3890, %v3889
    %3893 = vrot.lane.b32.xlu0 %v2877, 40
    %v3894 = vpop.permute.xlu0 %3893
    %3895 = vrot.lane.b32.xlu0 %v2878, 40
    %v3896 = vpop.permute.xlu0 %3895
    %v3900 = vsel %vm172, %v3891, 0
    %v3903 = vsel %vm172, %v3892, 0
    %3905 = vmatpush.bf16.msra.mxu0 0
    %3906 = vmatpush.bf16.msra.mxu0 0
    %3907 = vmatpush.bf16.msra.mxu0 0
    %3908 = vmatpush.bf16.msra.mxu0 0
    %3909 = vmatpush.bf16.msra.mxu0 0
    %3910 = vmatpush.bf16.msra.mxu0 0
    %3911 = vmatpush.bf16.msra.mxu0 %v3896
    %3912 = vmatpush.bf16.msra.mxu0 %v3894
    %3913 = vmatmul.bf16.gmra.mxu0 %v3900
    %v3914 = vpop.f32.mrf.mxu0
    %v3915 = vadd.f32 0.0, %v3914
    %v3916 = vpop.f32.mrf.mxu0
    %v3917 = vadd.f32 0.0, %v3916
    %3918 = vmatmul.bf16.gmra.mxu0 %v3903
    %v3919 = vpop.f32.mrf.mxu0
    %v3920 = vadd.f32 0.0, %v3919
    %v3921 = vpop.f32.mrf.mxu0
    %v3922 = vadd.f32 0.0, %v3921
    %3923 = vdwg.mxu0
    %3932 = vrot.lane.b32.xlu0 %v3330, 8
    %v3933 = vpop.permute.xlu0 %3932
    %3934 = vrot.lane.b32.xlu0 %v3332, 8
    %v3935 = vpop.permute.xlu0 %3934
    %3936 = vrot.lane.b32.xlu0 %v3335, 8
    %v3937 = vpop.permute.xlu0 %3936
    %3938 = vrot.lane.b32.xlu0 %v3337, 8
    %v3939 = vpop.permute.xlu0 %3938
    %3940 = vrot.lane.b32.xlu0 %v3371, 8
    %v3941 = vpop.permute.xlu0 %3940
    %3942 = vrot.lane.b32.xlu0 %v3373, 8
    %v3943 = vpop.permute.xlu0 %3942
    %3944 = vrot.lane.b32.xlu0 %v3376, 8
    %v3945 = vpop.permute.xlu0 %3944
    %3946 = vrot.lane.b32.xlu0 %v3378, 8
    %v3947 = vpop.permute.xlu0 %3946
    %3964 = vrot.lane.b32.xlu0 %v3602, 16
    %v3965 = vpop.permute.xlu0 %3964
    %3966 = vrot.lane.b32.xlu0 %v3604, 16
    %v3967 = vpop.permute.xlu0 %3966
    %3968 = vrot.lane.b32.xlu0 %v3607, 16
    %v3969 = vpop.permute.xlu0 %3968
    %3970 = vrot.lane.b32.xlu0 %v3609, 16
    %v3971 = vpop.permute.xlu0 %3970
    %3972 = vrot.lane.b32.xlu0 %v3643, 16
    %v3973 = vpop.permute.xlu0 %3972
    %3974 = vrot.lane.b32.xlu0 %v3645, 16
    %v3975 = vpop.permute.xlu0 %3974
    %3976 = vrot.lane.b32.xlu0 %v3648, 16
    %v3977 = vpop.permute.xlu0 %3976
    %3978 = vrot.lane.b32.xlu0 %v3650, 16
    %v3979 = vpop.permute.xlu0 %3978
    %3996 = vrot.lane.b32.xlu0 %v3874, 24
    %v3997 = vpop.permute.xlu0 %3996
    %3998 = vrot.lane.b32.xlu0 %v3876, 24
    %v3999 = vpop.permute.xlu0 %3998
    %4000 = vrot.lane.b32.xlu0 %v3879, 24
    %v4001 = vpop.permute.xlu0 %4000
    %4002 = vrot.lane.b32.xlu0 %v3881, 24
    %v4003 = vpop.permute.xlu0 %4002
    %4004 = vrot.lane.b32.xlu0 %v3915, 24
    %v4005 = vpop.permute.xlu0 %4004
    %4006 = vrot.lane.b32.xlu0 %v3917, 24
    %v4007 = vpop.permute.xlu0 %4006
    %4008 = vrot.lane.b32.xlu0 %v3920, 24
    %v4009 = vpop.permute.xlu0 %4008
    %4010 = vrot.lane.b32.xlu0 %v3922, 24
    %v4011 = vpop.permute.xlu0 %4010
    %v4020 = vsel %vm490, %v3058, %v3933
    %v4021 = vsel %vm490, %v3060, %v3935
    %v4022 = vsel %vm490, %v3063, %v3937
    %v4023 = vsel %vm490, %v3065, %v3939
    %v4024 = vsel %vm490, %v3099, %v3941
    %v4025 = vsel %vm490, %v3101, %v3943
    %v4026 = vsel %vm490, %v3104, %v3945
    %v4027 = vsel %vm490, %v3106, %v3947
    %v4028 = vsel %vm1681, %v4020, %v3965
    %v4029 = vsel %vm1681, %v4021, %v3967
    %v4030 = vsel %vm1681, %v4022, %v3969
    %v4031 = vsel %vm1681, %v4023, %v3971
    %v4032 = vsel %vm1681, %v4024, %v3973
    %v4033 = vsel %vm1681, %v4025, %v3975
    %v4034 = vsel %vm1681, %v4026, %v3977
    %v4035 = vsel %vm1681, %v4027, %v3979
    %v4036 = vsel %vm1690, %v4028, %v3997
    %v4037 = vsel %vm1690, %v4029, %v3999
    %v4038 = vsel %vm1690, %v4030, %v4001
    %v4039 = vsel %vm1690, %v4031, %v4003
    %v4040 = vsel %vm1690, %v4032, %v4005
    %v4041 = vsel %vm1690, %v4033, %v4007
    %v4042 = vsel %vm1690, %v4034, %v4009
    %v4043 = vsel %vm1690, %v4035, %v4011
    %v4044 = vld [vmem:[%s1 + $0x78] sm:$0xf]
    %v4045 = vld [vmem:[%s1 + $0x7c] sm:$0xf]
    %v4046 = vld [vmem:[%s1 + $0x80] sm:$0xf]
    %v4047 = vld [vmem:[%s1 + $0x84] sm:$0xf]
    %v4048 = vpack.c.bf16 %v4036, %v4036
    %v4049 = vpack.c.bf16 %v4037, %v4037
    %v4050 = vpack.c.bf16 %v4038, %v4038
    %v4051 = vpack.c.bf16 %v4039, %v4039
    %v4052 = vpack.c.bf16 %v4040, %v4040
    %v4053 = vpack.c.bf16 %v4041, %v4041
    %v4054 = vpack.c.bf16 %v4042, %v4042
    %v4055 = vpack.c.bf16 %v4043, %v4043
    %v4064 = vunpack.c.l.b16 %v4048
    %v4065 = vunpack.c.l.b16 %v4049
    %v4066 = vunpack.c.l.b16 %v4050
    %v4067 = vunpack.c.l.b16 %v4051
    %v4068 = vunpack.c.l.b16 %v4052
    %v4069 = vunpack.c.l.b16 %v4053
    %v4070 = vunpack.c.l.b16 %v4054
    %v4071 = vunpack.c.l.b16 %v4055
    %v4072 = vpack.c.b16 %v4065, %v4064
    %v4073 = vpack.c.b16 %v4067, %v4066
    %v4074 = vpack.c.b16 %v4069, %v4068
    %v4075 = vpack.c.b16 %v4071, %v4070
    %v4080 = vunpack.c.l.b16 %v4044
    %v4081 = vunpack.c.l.b16 %v4045
    %v4082 = vunpack.c.l.b16 %v4046
    %v4083 = vunpack.c.l.b16 %v4047
    %v4084 = vpack.c.b16 %v4081, %v4080
    %v4085 = vpack.c.b16 %v4083, %v4082
    %v4089 = vsel %vm172, %v4072, 0
    %v4092 = vsel %vm172, %v4073, 0
    %v4095 = vsel %vm172, %v4074, 0
    %v4098 = vsel %vm172, %v4075, 0
    %4100 = vmatpush.bf16.msra.mxu0 0
    %4101 = vmatpush.bf16.msra.mxu0 0
    %4102 = vmatpush.bf16.msra.mxu0 0
    %4103 = vmatpush.bf16.msra.mxu0 0
    %4104 = vmatpush.bf16.msra.mxu0 0
    %4105 = vmatpush.bf16.msra.mxu0 0
    %4106 = vmatpush.bf16.msra.mxu0 %v4085
    %4107 = vmatpush.bf16.msra.mxu0 %v4084
    %4108 = vmatmul.bf16.gmra.mxu0 %v4089
    %v4109 = vpop.f32.mrf.mxu0
    %v4110 = vadd.f32 0.0, %v4109
    %v4111 = vpop.f32.mrf.mxu0
    %v4112 = vadd.f32 0.0, %v4111
    %4113 = vmatmul.bf16.gmra.mxu0 %v4092
    %v4114 = vpop.f32.mrf.mxu0
    %v4115 = vadd.f32 0.0, %v4114
    %v4116 = vpop.f32.mrf.mxu0
    %v4117 = vadd.f32 0.0, %v4116
    %4118 = vmatmul.bf16.gmra.mxu0 %v4095
    %v4119 = vpop.f32.mrf.mxu0
    %v4120 = vadd.f32 0.0, %v4119
    %v4121 = vpop.f32.mrf.mxu0
    %v4122 = vadd.f32 0.0, %v4121
    %4123 = vmatmul.bf16.gmra.mxu0 %v4098
    %v4124 = vpop.f32.mrf.mxu0
    %v4125 = vadd.f32 0.0, %v4124
    %v4126 = vpop.f32.mrf.mxu0
    %v4127 = vadd.f32 0.0, %v4126
    %4128 = vdwg.mxu0
    %v4129 = vperm.slane %v22, 3
    %v4130 = vadd.f32 %v4110, %v4129
    %v4131 = vadd.f32 %v4112, %v4129
    %v4132 = vadd.f32 %v4115, %v4129
    %v4133 = vadd.f32 %v4117, %v4129
    %v4134 = vadd.f32 %v4120, %v4129
    %v4135 = vadd.f32 %v4122, %v4129
    %v4136 = vadd.f32 %v4125, %v4129
    %v4137 = vadd.f32 %v4127, %v4129
    %v4138 = vadd.f32 %v2520, %v4130
    %v4139 = vadd.f32 %v2521, %v4131
    %v4140 = vadd.f32 %v2522, %v4132
    %v4141 = vadd.f32 %v2523, %v4133
    %v4142 = vadd.f32 %v2524, %v4134
    %v4143 = vadd.f32 %v2525, %v4135
    %v4144 = vadd.f32 %v2526, %v4136
    %v4145 = vadd.f32 %v2527, %v4137
    %v4146 = vsel %vm172, %v4138, 0.0
    %4147 = vadd.xlane.f32.xlu0 %v4146
    %v4148 = vpop.xlane.xlu0 %4147
    %v4149 = vsel %vm172, %v4139, 0.0
    %4150 = vadd.xlane.f32.xlu0 %v4149
    %v4151 = vpop.xlane.xlu0 %4150
    %v4152 = vsel %vm172, %v4140, 0.0
    %4153 = vadd.xlane.f32.xlu0 %v4152
    %v4154 = vpop.xlane.xlu0 %4153
    %v4155 = vsel %vm172, %v4141, 0.0
    %4156 = vadd.xlane.f32.xlu0 %v4155
    %v4157 = vpop.xlane.xlu0 %4156
    %v4158 = vsel %vm172, %v4142, 0.0
    %4159 = vadd.xlane.f32.xlu0 %v4158
    %v4160 = vpop.xlane.xlu0 %4159
    %v4161 = vsel %vm172, %v4143, 0.0
    %4162 = vadd.xlane.f32.xlu0 %v4161
    %v4163 = vpop.xlane.xlu0 %4162
    %v4164 = vsel %vm172, %v4144, 0.0
    %4165 = vadd.xlane.f32.xlu0 %v4164
    %v4166 = vpop.xlane.xlu0 %4165
    %v4167 = vsel %vm172, %v4145, 0.0
    %4168 = vadd.xlane.f32.xlu0 %v4167
    %v4169 = vpop.xlane.xlu0 %4168
    %v4170 = vmul.f32 %v4148, %v203
    %v4171 = vmul.f32 %v4151, %v203
    %v4172 = vmul.f32 %v4154, %v203
    %v4173 = vmul.f32 %v4157, %v203
    %v4174 = vmul.f32 %v4160, %v203
    %v4175 = vmul.f32 %v4163, %v203
    %v4176 = vmul.f32 %v4166, %v203
    %v4177 = vmul.f32 %v4169, %v203
    %v4178 = vsub.f32 %v4138, %v4170
    %v4179 = vsub.f32 %v4139, %v4171
    %v4180 = vsub.f32 %v4140, %v4172
    %v4181 = vsub.f32 %v4141, %v4173
    %v4182 = vsub.f32 %v4142, %v4174
    %v4183 = vsub.f32 %v4143, %v4175
    %v4184 = vsub.f32 %v4144, %v4176
    %v4185 = vsub.f32 %v4145, %v4177
    %v4186 = vmul.f32 %v4178, %v4178
    %v4187 = vmul.f32 %v4179, %v4179
    %v4188 = vmul.f32 %v4180, %v4180
    %v4189 = vmul.f32 %v4181, %v4181
    %v4190 = vmul.f32 %v4182, %v4182
    %v4191 = vmul.f32 %v4183, %v4183
    %v4192 = vmul.f32 %v4184, %v4184
    %v4193 = vmul.f32 %v4185, %v4185
    %v4194 = vsel %vm172, %v4186, 0.0
    %4195 = vadd.xlane.f32.xlu0 %v4194
    %v4196 = vpop.xlane.xlu0 %4195
    %v4197 = vsel %vm172, %v4187, 0.0
    %4198 = vadd.xlane.f32.xlu0 %v4197
    %v4199 = vpop.xlane.xlu0 %4198
    %v4200 = vsel %vm172, %v4188, 0.0
    %4201 = vadd.xlane.f32.xlu0 %v4200
    %v4202 = vpop.xlane.xlu0 %4201
    %v4203 = vsel %vm172, %v4189, 0.0
    %4204 = vadd.xlane.f32.xlu0 %v4203
    %v4205 = vpop.xlane.xlu0 %4204
    %v4206 = vsel %vm172, %v4190, 0.0
    %4207 = vadd.xlane.f32.xlu0 %v4206
    %v4208 = vpop.xlane.xlu0 %4207
    %v4209 = vsel %vm172, %v4191, 0.0
    %4210 = vadd.xlane.f32.xlu0 %v4209
    %v4211 = vpop.xlane.xlu0 %4210
    %v4212 = vsel %vm172, %v4192, 0.0
    %4213 = vadd.xlane.f32.xlu0 %v4212
    %v4214 = vpop.xlane.xlu0 %4213
    %v4215 = vsel %vm172, %v4193, 0.0
    %4216 = vadd.xlane.f32.xlu0 %v4215
    %v4217 = vpop.xlane.xlu0 %4216
    %v4218 = vmul.f32 %v4196, %v203
    %v4219 = vmul.f32 %v4199, %v203
    %v4220 = vmul.f32 %v4202, %v203
    %v4221 = vmul.f32 %v4205, %v203
    %v4222 = vmul.f32 %v4208, %v203
    %v4223 = vmul.f32 %v4211, %v203
    %v4224 = vmul.f32 %v4214, %v203
    %v4225 = vmul.f32 %v4217, %v203
    %v4226 = vadd.f32 %v4218, 1e-05
    %v4227 = vadd.f32 %v4219, 1e-05
    %v4228 = vadd.f32 %v4220, 1e-05
    %v4229 = vadd.f32 %v4221, 1e-05
    %v4230 = vadd.f32 %v4222, 1e-05
    %v4231 = vadd.f32 %v4223, 1e-05
    %v4232 = vadd.f32 %v4224, 1e-05
    %v4233 = vadd.f32 %v4225, 1e-05
    %v4234 = vrsqrt.pop %v4226
    %v4235 = vmul.f32 %v4234, %v4226
    %v4236 = vmul.f32 %v4235, %v4234
    %v4237 = vmul.f32 0.5, %v4236
    %v4238 = vsub.f32 1.5, %v4237
    %v4239 = vmul.f32 %v4234, %v4238
    %vm4240 = vweird.f32 %v4226
    %vm4241 = vweird.f32 %v4234
    %vm4242 = vmor %vm4240, %vm4241
    %v4243 = vsel %vm4242, %v4234, %v4239
    %v4244 = vrsqrt.pop %v4227
    %v4245 = vmul.f32 %v4244, %v4227
    %v4246 = vmul.f32 %v4245, %v4244
    %v4247 = vmul.f32 0.5, %v4246
    %v4248 = vsub.f32 1.5, %v4247
    %v4249 = vmul.f32 %v4244, %v4248
    %vm4250 = vweird.f32 %v4227
    %vm4251 = vweird.f32 %v4244
    %vm4252 = vmor %vm4250, %vm4251
    %v4253 = vsel %vm4252, %v4244, %v4249
    %v4254 = vrsqrt.pop %v4228
    %v4255 = vmul.f32 %v4254, %v4228
    %v4256 = vmul.f32 %v4255, %v4254
    %v4257 = vmul.f32 0.5, %v4256
    %v4258 = vsub.f32 1.5, %v4257
    %v4259 = vmul.f32 %v4254, %v4258
    %vm4260 = vweird.f32 %v4228
    %vm4261 = vweird.f32 %v4254
    %vm4262 = vmor %vm4260, %vm4261
    %v4263 = vsel %vm4262, %v4254, %v4259
    %v4264 = vrsqrt.pop %v4229
    %v4265 = vmul.f32 %v4264, %v4229
    %v4266 = vmul.f32 %v4265, %v4264
    %v4267 = vmul.f32 0.5, %v4266
    %v4268 = vsub.f32 1.5, %v4267
    %v4269 = vmul.f32 %v4264, %v4268
    %vm4270 = vweird.f32 %v4229
    %vm4271 = vweird.f32 %v4264
    %vm4272 = vmor %vm4270, %vm4271
    %v4273 = vsel %vm4272, %v4264, %v4269
    %v4274 = vrsqrt.pop %v4230
    %v4275 = vmul.f32 %v4274, %v4230
    %v4276 = vmul.f32 %v4275, %v4274
    %v4277 = vmul.f32 0.5, %v4276
    %v4278 = vsub.f32 1.5, %v4277
    %v4279 = vmul.f32 %v4274, %v4278
    %vm4280 = vweird.f32 %v4230
    %vm4281 = vweird.f32 %v4274
    %vm4282 = vmor %vm4280, %vm4281
    %v4283 = vsel %vm4282, %v4274, %v4279
    %v4284 = vrsqrt.pop %v4231
    %v4285 = vmul.f32 %v4284, %v4231
    %v4286 = vmul.f32 %v4285, %v4284
    %v4287 = vmul.f32 0.5, %v4286
    %v4288 = vsub.f32 1.5, %v4287
    %v4289 = vmul.f32 %v4284, %v4288
    %vm4290 = vweird.f32 %v4231
    %vm4291 = vweird.f32 %v4284
    %vm4292 = vmor %vm4290, %vm4291
    %v4293 = vsel %vm4292, %v4284, %v4289
    %v4294 = vrsqrt.pop %v4232
    %v4295 = vmul.f32 %v4294, %v4232
    %v4296 = vmul.f32 %v4295, %v4294
    %v4297 = vmul.f32 0.5, %v4296
    %v4298 = vsub.f32 1.5, %v4297
    %v4299 = vmul.f32 %v4294, %v4298
    %vm4300 = vweird.f32 %v4232
    %vm4301 = vweird.f32 %v4294
    %vm4302 = vmor %vm4300, %vm4301
    %v4303 = vsel %vm4302, %v4294, %v4299
    %v4304 = vrsqrt.pop %v4233
    %v4305 = vmul.f32 %v4304, %v4233
    %v4306 = vmul.f32 %v4305, %v4304
    %v4307 = vmul.f32 0.5, %v4306
    %v4308 = vsub.f32 1.5, %v4307
    %v4309 = vmul.f32 %v4304, %v4308
    %vm4310 = vweird.f32 %v4233
    %vm4311 = vweird.f32 %v4304
    %vm4312 = vmor %vm4310, %vm4311
    %v4313 = vsel %vm4312, %v4304, %v4309
    %v4314 = vmul.f32 %v4178, %v4243
    %v4315 = vmul.f32 %v4179, %v4253
    %v4316 = vmul.f32 %v4180, %v4263
    %v4317 = vmul.f32 %v4181, %v4273
    %v4318 = vmul.f32 %v4182, %v4283
    %v4319 = vmul.f32 %v4183, %v4293
    %v4320 = vmul.f32 %v4184, %v4303
    %v4321 = vmul.f32 %v4185, %v4313
    %v4322 = vperm.slane %v22, 4
    %v4323 = vmul.f32 %v4314, %v4322
    %v4324 = vmul.f32 %v4315, %v4322
    %v4325 = vmul.f32 %v4316, %v4322
    %v4326 = vmul.f32 %v4317, %v4322
    %v4327 = vmul.f32 %v4318, %v4322
    %v4328 = vmul.f32 %v4319, %v4322
    %v4329 = vmul.f32 %v4320, %v4322
    %v4330 = vmul.f32 %v4321, %v4322
    %v4331 = vperm.slane %v22, 5
    %v4332 = vadd.f32 %v4323, %v4331
    %v4333 = vadd.f32 %v4324, %v4331
    %v4334 = vadd.f32 %v4325, %v4331
    %v4335 = vadd.f32 %v4326, %v4331
    %v4336 = vadd.f32 %v4327, %v4331
    %v4337 = vadd.f32 %v4328, %v4331
    %v4338 = vadd.f32 %v4329, %v4331
    %v4339 = vadd.f32 %v4330, %v4331
    %v4340 = vld [vmem:[%s1 + $0x88] sm:$0xf]
    %v4341 = vld [vmem:[%s1 + $0x8c] sm:$0xf]
    %v4342 = vld [vmem:[%s1 + $0x90] sm:$0xf]
    %v4343 = vld [vmem:[%s1 + $0x94] sm:$0xf]
    %v4344 = vpack.c.bf16 %v4332, %v4332
    %v4345 = vpack.c.bf16 %v4333, %v4333
    %v4346 = vpack.c.bf16 %v4334, %v4334
    %v4347 = vpack.c.bf16 %v4335, %v4335
    %v4348 = vpack.c.bf16 %v4336, %v4336
    %v4349 = vpack.c.bf16 %v4337, %v4337
    %v4350 = vpack.c.bf16 %v4338, %v4338
    %v4351 = vpack.c.bf16 %v4339, %v4339
    %v4360 = vunpack.c.l.b16 %v4344
    %v4361 = vunpack.c.l.b16 %v4345
    %v4362 = vunpack.c.l.b16 %v4346
    %v4363 = vunpack.c.l.b16 %v4347
    %v4364 = vunpack.c.l.b16 %v4348
    %v4365 = vunpack.c.l.b16 %v4349
    %v4366 = vunpack.c.l.b16 %v4350
    %v4367 = vunpack.c.l.b16 %v4351
    %v4368 = vpack.c.b16 %v4361, %v4360
    %v4369 = vpack.c.b16 %v4363, %v4362
    %v4370 = vpack.c.b16 %v4365, %v4364
    %v4371 = vpack.c.b16 %v4367, %v4366
    %v4376 = vunpack.c.l.b16 %v4340
    %v4377 = vunpack.c.l.b16 %v4341
    %v4378 = vunpack.c.l.b16 %v4342
    %v4379 = vunpack.c.l.b16 %v4343
    %v4380 = vpack.c.b16 %v4377, %v4376
    %v4381 = vpack.c.b16 %v4379, %v4378
    %v4385 = vsel %vm172, %v4368, 0
    %v4388 = vsel %vm172, %v4369, 0
    %v4391 = vsel %vm172, %v4370, 0
    %v4394 = vsel %vm172, %v4371, 0
    %4396 = vmatpush.bf16.msra.mxu0 0
    %4397 = vmatpush.bf16.msra.mxu0 0
    %4398 = vmatpush.bf16.msra.mxu0 0
    %4399 = vmatpush.bf16.msra.mxu0 0
    %4400 = vmatpush.bf16.msra.mxu0 0
    %4401 = vmatpush.bf16.msra.mxu0 0
    %4402 = vmatpush.bf16.msra.mxu0 %v4381
    %4403 = vmatpush.bf16.msra.mxu0 %v4380
    %4404 = vmatmul.bf16.gmra.mxu0 %v4385
    %v4405 = vpop.f32.mrf.mxu0
    %v4406 = vadd.f32 0.0, %v4405
    %v4407 = vpop.f32.mrf.mxu0
    %v4408 = vadd.f32 0.0, %v4407
    %4409 = vmatmul.bf16.gmra.mxu0 %v4388
    %v4410 = vpop.f32.mrf.mxu0
    %v4411 = vadd.f32 0.0, %v4410
    %v4412 = vpop.f32.mrf.mxu0
    %v4413 = vadd.f32 0.0, %v4412
    %4414 = vmatmul.bf16.gmra.mxu0 %v4391
    %v4415 = vpop.f32.mrf.mxu0
    %v4416 = vadd.f32 0.0, %v4415
    %v4417 = vpop.f32.mrf.mxu0
    %v4418 = vadd.f32 0.0, %v4417
    %4419 = vmatmul.bf16.gmra.mxu0 %v4394
    %v4420 = vpop.f32.mrf.mxu0
    %v4421 = vadd.f32 0.0, %v4420
    %v4422 = vpop.f32.mrf.mxu0
    %v4423 = vadd.f32 0.0, %v4422
    %4424 = vdwg.mxu0
    %v4425 = vperm.slane %v22, 6
    %v4426 = vadd.f32 %v4406, %v4425
    %v4427 = vadd.f32 %v4408, %v4425
    %v4428 = vadd.f32 %v4411, %v4425
    %v4429 = vadd.f32 %v4413, %v4425
    %v4430 = vadd.f32 %v4416, %v4425
    %v4431 = vadd.f32 %v4418, %v4425
    %v4432 = vadd.f32 %v4421, %v4425
    %v4433 = vadd.f32 %v4423, %v4425
    %v4434 = vmul.f32 %v4426, 0.5
    %v4435 = vmul.f32 %v4427, 0.5
    %v4436 = vmul.f32 %v4428, 0.5
    %v4437 = vmul.f32 %v4429, 0.5
    %v4438 = vmul.f32 %v4430, 0.5
    %v4439 = vmul.f32 %v4431, 0.5
    %v4440 = vmul.f32 %v4432, 0.5
    %v4441 = vmul.f32 %v4433, 0.5
    %v4442 = vmul.f32 %v4426, 0.70710677
    %v4443 = vmul.f32 %v4427, 0.70710677
    %v4444 = vmul.f32 %v4428, 0.70710677
    %v4445 = vmul.f32 %v4429, 0.70710677
    %v4446 = vmul.f32 %v4430, 0.70710677
    %v4447 = vmul.f32 %v4431, 0.70710677
    %v4448 = vmul.f32 %v4432, 0.70710677
    %v4449 = vmul.f32 %v4433, 0.70710677
    %v4450 = vand.u32 2147483647, %v4442
    %v4451 = vand.u32 2147483647, %v4443
    %v4452 = vand.u32 2147483647, %v4444
    %v4453 = vand.u32 2147483647, %v4445
    %v4454 = vand.u32 2147483647, %v4446
    %v4455 = vand.u32 2147483647, %v4447
    %v4456 = vand.u32 2147483647, %v4448
    %v4457 = vand.u32 2147483647, %v4449
    %v4458 = vmul.f32 %v4450, 0.3275911
    %v4459 = vmul.f32 %v4451, 0.3275911
    %v4460 = vmul.f32 %v4452, 0.3275911
    %v4461 = vmul.f32 %v4453, 0.3275911
    %v4462 = vmul.f32 %v4454, 0.3275911
    %v4463 = vmul.f32 %v4455, 0.3275911
    %v4464 = vmul.f32 %v4456, 0.3275911
    %v4465 = vmul.f32 %v4457, 0.3275911
    %v4466 = vadd.f32 %v4458, 1.0
    %v4467 = vadd.f32 %v4459, 1.0
    %v4468 = vadd.f32 %v4460, 1.0
    %v4469 = vadd.f32 %v4461, 1.0
    %v4470 = vadd.f32 %v4462, 1.0
    %v4471 = vadd.f32 %v4463, 1.0
    %v4472 = vadd.f32 %v4464, 1.0
    %v4473 = vadd.f32 %v4465, 1.0
    %v4474 = vrcp.pop %v4466
    %v4475 = vmul.f32 %v4466, %v4474
    %v4476 = vsub.f32 1.0, %v4475
    %v4477 = vmul.f32 %v4474, %v4476
    %v4478 = vadd.f32 %v4474, %v4477
    %vm4479 = vweird.f32 %v4466
    %vm4480 = vweird.f32 %v4474
    %vm4481 = vmor %vm4479, %vm4480
    %v4482 = vsel %vm4481, %v4474, %v4478
    %v4483 = vand.u32 2147483647, %v4466
    %vm4484 = vcmp.eq.f32.partialorder %v4483, 8.507059e+37
    %v4485 = vand.u32 %v4466, 2147483648
    %v4486 = vor.u32 1.1754944e-38, %v4485
    %v4487 = vsel %vm4484, %v4486, %v4482
    %v4488 = vmul.f32 1.0, %v4487
    %v4489 = vrcp.pop %v4467
    %v4490 = vmul.f32 %v4467, %v4489
    %v4491 = vsub.f32 1.0, %v4490
    %v4492 = vmul.f32 %v4489, %v4491
    %v4493 = vadd.f32 %v4489, %v4492
    %vm4494 = vweird.f32 %v4467
    %vm4495 = vweird.f32 %v4489
    %vm4496 = vmor %vm4494, %vm4495
    %v4497 = vsel %vm4496, %v4489, %v4493
    %v4498 = vand.u32 2147483647, %v4467
    %vm4499 = vcmp.eq.f32.partialorder %v4498, 8.507059e+37
    %v4500 = vand.u32 %v4467, 2147483648
    %v4501 = vor.u32 1.1754944e-38, %v4500
    %v4502 = vsel %vm4499, %v4501, %v4497
    %v4503 = vmul.f32 1.0, %v4502
    %v4504 = vrcp.pop %v4468
    %v4505 = vmul.f32 %v4468, %v4504
    %v4506 = vsub.f32 1.0, %v4505
    %v4507 = vmul.f32 %v4504, %v4506
    %v4508 = vadd.f32 %v4504, %v4507
    %vm4509 = vweird.f32 %v4468
    %vm4510 = vweird.f32 %v4504
    %vm4511 = vmor %vm4509, %vm4510
    %v4512 = vsel %vm4511, %v4504, %v4508
    %v4513 = vand.u32 2147483647, %v4468
    %vm4514 = vcmp.eq.f32.partialorder %v4513, 8.507059e+37
    %v4515 = vand.u32 %v4468, 2147483648
    %v4516 = vor.u32 1.1754944e-38, %v4515
    %v4517 = vsel %vm4514, %v4516, %v4512
    %v4518 = vmul.f32 1.0, %v4517
    %v4519 = vrcp.pop %v4469
    %v4520 = vmul.f32 %v4469, %v4519
    %v4521 = vsub.f32 1.0, %v4520
    %v4522 = vmul.f32 %v4519, %v4521
    %v4523 = vadd.f32 %v4519, %v4522
    %vm4524 = vweird.f32 %v4469
    %vm4525 = vweird.f32 %v4519
    %vm4526 = vmor %vm4524, %vm4525
    %v4527 = vsel %vm4526, %v4519, %v4523
    %v4528 = vand.u32 2147483647, %v4469
    %vm4529 = vcmp.eq.f32.partialorder %v4528, 8.507059e+37
    %v4530 = vand.u32 %v4469, 2147483648
    %v4531 = vor.u32 1.1754944e-38, %v4530
    %v4532 = vsel %vm4529, %v4531, %v4527
    %v4533 = vmul.f32 1.0, %v4532
    %v4534 = vrcp.pop %v4470
    %v4535 = vmul.f32 %v4470, %v4534
    %v4536 = vsub.f32 1.0, %v4535
    %v4537 = vmul.f32 %v4534, %v4536
    %v4538 = vadd.f32 %v4534, %v4537
    %vm4539 = vweird.f32 %v4470
    %vm4540 = vweird.f32 %v4534
    %vm4541 = vmor %vm4539, %vm4540
    %v4542 = vsel %vm4541, %v4534, %v4538
    %v4543 = vand.u32 2147483647, %v4470
    %vm4544 = vcmp.eq.f32.partialorder %v4543, 8.507059e+37
    %v4545 = vand.u32 %v4470, 2147483648
    %v4546 = vor.u32 1.1754944e-38, %v4545
    %v4547 = vsel %vm4544, %v4546, %v4542
    %v4548 = vmul.f32 1.0, %v4547
    %v4549 = vrcp.pop %v4471
    %v4550 = vmul.f32 %v4471, %v4549
    %v4551 = vsub.f32 1.0, %v4550
    %v4552 = vmul.f32 %v4549, %v4551
    %v4553 = vadd.f32 %v4549, %v4552
    %vm4554 = vweird.f32 %v4471
    %vm4555 = vweird.f32 %v4549
    %vm4556 = vmor %vm4554, %vm4555
    %v4557 = vsel %vm4556, %v4549, %v4553
    %v4558 = vand.u32 2147483647, %v4471
    %vm4559 = vcmp.eq.f32.partialorder %v4558, 8.507059e+37
    %v4560 = vand.u32 %v4471, 2147483648
    %v4561 = vor.u32 1.1754944e-38, %v4560
    %v4562 = vsel %vm4559, %v4561, %v4557
    %v4563 = vmul.f32 1.0, %v4562
    %v4564 = vrcp.pop %v4472
    %v4565 = vmul.f32 %v4472, %v4564
    %v4566 = vsub.f32 1.0, %v4565
    %v4567 = vmul.f32 %v4564, %v4566
    %v4568 = vadd.f32 %v4564, %v4567
    %vm4569 = vweird.f32 %v4472
    %vm4570 = vweird.f32 %v4564
    %vm4571 = vmor %vm4569, %vm4570
    %v4572 = vsel %vm4571, %v4564, %v4568
    %v4573 = vand.u32 2147483647, %v4472
    %vm4574 = vcmp.eq.f32.partialorder %v4573, 8.507059e+37
    %v4575 = vand.u32 %v4472, 2147483648
    %v4576 = vor.u32 1.1754944e-38, %v4575
    %v4577 = vsel %vm4574, %v4576, %v4572
    %v4578 = vmul.f32 1.0, %v4577
    %v4579 = vrcp.pop %v4473
    %v4580 = vmul.f32 %v4473, %v4579
    %v4581 = vsub.f32 1.0, %v4580
    %v4582 = vmul.f32 %v4579, %v4581
    %v4583 = vadd.f32 %v4579, %v4582
    %vm4584 = vweird.f32 %v4473
    %vm4585 = vweird.f32 %v4579
    %vm4586 = vmor %vm4584, %vm4585
    %v4587 = vsel %vm4586, %v4579, %v4583
    %v4588 = vand.u32 2147483647, %v4473
    %vm4589 = vcmp.eq.f32.partialorder %v4588, 8.507059e+37
    %v4590 = vand.u32 %v4473, 2147483648
    %v4591 = vor.u32 1.1754944e-38, %v4590
    %v4592 = vsel %vm4589, %v4591, %v4587
    %v4593 = vmul.f32 1.0, %v4592
    %v4594 = vmul.f32 %v4488, 1.0614054
    %v4595 = vmul.f32 %v4503, 1.0614054
    %v4596 = vmul.f32 %v4518, 1.0614054
    %v4597 = vmul.f32 %v4533, 1.0614054
    %v4598 = vmul.f32 %v4548, 1.0614054
    %v4599 = vmul.f32 %v4563, 1.0614054
    %v4600 = vmul.f32 %v4578, 1.0614054
    %v4601 = vmul.f32 %v4593, 1.0614054
    %v4602 = vadd.f32 %v4594, -1.4531521
    %v4603 = vadd.f32 %v4595, -1.4531521
    %v4604 = vadd.f32 %v4596, -1.4531521
    %v4605 = vadd.f32 %v4597, -1.4531521
    %v4606 = vadd.f32 %v4598, -1.4531521
    %v4607 = vadd.f32 %v4599, -1.4531521
    %v4608 = vadd.f32 %v4600, -1.4531521
    %v4609 = vadd.f32 %v4601, -1.4531521
    %v4610 = vmul.f32 %v4602, %v4488
    %v4611 = vmul.f32 %v4603, %v4503
    %v4612 = vmul.f32 %v4604, %v4518
    %v4613 = vmul.f32 %v4605, %v4533
    %v4614 = vmul.f32 %v4606, %v4548
    %v4615 = vmul.f32 %v4607, %v4563
    %v4616 = vmul.f32 %v4608, %v4578
    %v4617 = vmul.f32 %v4609, %v4593
    %v4618 = vadd.f32 %v4610, 1.4214138
    %v4619 = vadd.f32 %v4611, 1.4214138
    %v4620 = vadd.f32 %v4612, 1.4214138
    %v4621 = vadd.f32 %v4613, 1.4214138
    %v4622 = vadd.f32 %v4614, 1.4214138
    %v4623 = vadd.f32 %v4615, 1.4214138
    %v4624 = vadd.f32 %v4616, 1.4214138
    %v4625 = vadd.f32 %v4617, 1.4214138
    %v4626 = vmul.f32 %v4618, %v4488
    %v4627 = vmul.f32 %v4619, %v4503
    %v4628 = vmul.f32 %v4620, %v4518
    %v4629 = vmul.f32 %v4621, %v4533
    %v4630 = vmul.f32 %v4622, %v4548
    %v4631 = vmul.f32 %v4623, %v4563
    %v4632 = vmul.f32 %v4624, %v4578
    %v4633 = vmul.f32 %v4625, %v4593
    %v4634 = vadd.f32 %v4626, -0.28449672
    %v4635 = vadd.f32 %v4627, -0.28449672
    %v4636 = vadd.f32 %v4628, -0.28449672
    %v4637 = vadd.f32 %v4629, -0.28449672
    %v4638 = vadd.f32 %v4630, -0.28449672
    %v4639 = vadd.f32 %v4631, -0.28449672
    %v4640 = vadd.f32 %v4632, -0.28449672
    %v4641 = vadd.f32 %v4633, -0.28449672
    %v4642 = vmul.f32 %v4634, %v4488
    %v4643 = vmul.f32 %v4635, %v4503
    %v4644 = vmul.f32 %v4636, %v4518
    %v4645 = vmul.f32 %v4637, %v4533
    %v4646 = vmul.f32 %v4638, %v4548
    %v4647 = vmul.f32 %v4639, %v4563
    %v4648 = vmul.f32 %v4640, %v4578
    %v4649 = vmul.f32 %v4641, %v4593
    %v4650 = vadd.f32 %v4642, 0.2548296
    %v4651 = vadd.f32 %v4643, 0.2548296
    %v4652 = vadd.f32 %v4644, 0.2548296
    %v4653 = vadd.f32 %v4645, 0.2548296
    %v4654 = vadd.f32 %v4646, 0.2548296
    %v4655 = vadd.f32 %v4647, 0.2548296
    %v4656 = vadd.f32 %v4648, 0.2548296
    %v4657 = vadd.f32 %v4649, 0.2548296
    %v4658 = vmul.f32 %v4650, %v4488
    %v4659 = vmul.f32 %v4651, %v4503
    %v4660 = vmul.f32 %v4652, %v4518
    %v4661 = vmul.f32 %v4653, %v4533
    %v4662 = vmul.f32 %v4654, %v4548
    %v4663 = vmul.f32 %v4655, %v4563
    %v4664 = vmul.f32 %v4656, %v4578
    %v4665 = vmul.f32 %v4657, %v4593
    %v4666 = vmul.f32 %v4450, %v4450
    %v4667 = vmul.f32 %v4451, %v4451
    %v4668 = vmul.f32 %v4452, %v4452
    %v4669 = vmul.f32 %v4453, %v4453
    %v4670 = vmul.f32 %v4454, %v4454
    %v4671 = vmul.f32 %v4455, %v4455
    %v4672 = vmul.f32 %v4456, %v4456
    %v4673 = vmul.f32 %v4457, %v4457
    %v4674 = vsub.f32 0.0, %v4666
    %v4675 = vsub.f32 0.0, %v4667
    %v4676 = vsub.f32 0.0, %v4668
    %v4677 = vsub.f32 0.0, %v4669
    %v4678 = vsub.f32 0.0, %v4670
    %v4679 = vsub.f32 0.0, %v4671
    %v4680 = vsub.f32 0.0, %v4672
    %v4681 = vsub.f32 0.0, %v4673
    %v4682 = vmul.f32 %v4674, 1.442695
    %v4683 = vpow.pop %v4682
    %v4684 = vmul.f32 %v4675, 1.442695
    %v4685 = vpow.pop %v4684
    %v4686 = vmul.f32 %v4676, 1.442695
    %v4687 = vpow.pop %v4686
    %v4688 = vmul.f32 %v4677, 1.442695
    %v4689 = vpow.pop %v4688
    %v4690 = vmul.f32 %v4678, 1.442695
    %v4691 = vpow.pop %v4690
    %v4692 = vmul.f32 %v4679, 1.442695
    %v4693 = vpow.pop %v4692
    %v4694 = vmul.f32 %v4680, 1.442695
    %v4695 = vpow.pop %v4694
    %v4696 = vmul.f32 %v4681, 1.442695
    %v4697 = vpow.pop %v4696
    %v4698 = vmul.f32 %v4658, %v4683
    %v4699 = vmul.f32 %v4659, %v4685
    %v4700 = vmul.f32 %v4660, %v4687
    %v4701 = vmul.f32 %v4661, %v4689
    %v4702 = vmul.f32 %v4662, %v4691
    %v4703 = vmul.f32 %v4663, %v4693
    %v4704 = vmul.f32 %v4664, %v4695
    %v4705 = vmul.f32 %v4665, %v4697
    %v4706 = vsub.f32 1.0, %v4698
    %v4707 = vsub.f32 1.0, %v4699
    %v4708 = vsub.f32 1.0, %v4700
    %v4709 = vsub.f32 1.0, %v4701
    %v4710 = vsub.f32 1.0, %v4702
    %v4711 = vsub.f32 1.0, %v4703
    %v4712 = vsub.f32 1.0, %v4704
    %v4713 = vsub.f32 1.0, %v4705
    %vm4714 = vcmp.lt.f32.partialorder %v4442, 0.0
    %vm4715 = vcmp.lt.f32.partialorder %v4443, 0.0
    %vm4716 = vcmp.lt.f32.partialorder %v4444, 0.0
    %vm4717 = vcmp.lt.f32.partialorder %v4445, 0.0
    %vm4718 = vcmp.lt.f32.partialorder %v4446, 0.0
    %vm4719 = vcmp.lt.f32.partialorder %v4447, 0.0
    %vm4720 = vcmp.lt.f32.partialorder %v4448, 0.0
    %vm4721 = vcmp.lt.f32.partialorder %v4449, 0.0
    %v4722 = vsub.f32 0.0, %v4706
    %v4723 = vsub.f32 0.0, %v4707
    %v4724 = vsub.f32 0.0, %v4708
    %v4725 = vsub.f32 0.0, %v4709
    %v4726 = vsub.f32 0.0, %v4710
    %v4727 = vsub.f32 0.0, %v4711
    %v4728 = vsub.f32 0.0, %v4712
    %v4729 = vsub.f32 0.0, %v4713
    %v4730 = vsel %vm4714, %v4722, %v4706
    %v4731 = vsel %vm4715, %v4723, %v4707
    %v4732 = vsel %vm4716, %v4724, %v4708
    %v4733 = vsel %vm4717, %v4725, %v4709
    %v4734 = vsel %vm4718, %v4726, %v4710
    %v4735 = vsel %vm4719, %v4727, %v4711
    %v4736 = vsel %vm4720, %v4728, %v4712
    %v4737 = vsel %vm4721, %v4729, %v4713
    %v4738 = vadd.f32 %v4730, 1.0
    %v4739 = vadd.f32 %v4731, 1.0
    %v4740 = vadd.f32 %v4732, 1.0
    %v4741 = vadd.f32 %v4733, 1.0
    %v4742 = vadd.f32 %v4734, 1.0
    %v4743 = vadd.f32 %v4735, 1.0
    %v4744 = vadd.f32 %v4736, 1.0
    %v4745 = vadd.f32 %v4737, 1.0
    %v4746 = vmul.f32 %v4434, %v4738
    %v4747 = vmul.f32 %v4435, %v4739
    %v4748 = vmul.f32 %v4436, %v4740
    %v4749 = vmul.f32 %v4437, %v4741
    %v4750 = vmul.f32 %v4438, %v4742
    %v4751 = vmul.f32 %v4439, %v4743
    %v4752 = vmul.f32 %v4440, %v4744
    %v4753 = vmul.f32 %v4441, %v4745
    %v4754 = vld [vmem:[%s1 + $0x98] sm:$0xf]
    %v4755 = vld [vmem:[%s1 + $0x9c] sm:$0xf]
    %v4756 = vld [vmem:[%s1 + $0xa0] sm:$0xf]
    %v4757 = vld [vmem:[%s1 + $0xa4] sm:$0xf]
    %v4758 = vld [vmem:[%s1 + $0xa8] sm:$0xf]
    %v4759 = vld [vmem:[%s1 + $0xac] sm:$0xf]
    %v4760 = vld [vmem:[%s1 + $0xb0] sm:$0xf]
    %v4761 = vld [vmem:[%s1 + $0xb4] sm:$0xf]
    %v4762 = vpack.c.bf16 %v4746, %v4746
    %v4763 = vpack.c.bf16 %v4747, %v4747
    %v4764 = vpack.c.bf16 %v4748, %v4748
    %v4765 = vpack.c.bf16 %v4749, %v4749
    %v4766 = vpack.c.bf16 %v4750, %v4750
    %v4767 = vpack.c.bf16 %v4751, %v4751
    %v4768 = vpack.c.bf16 %v4752, %v4752
    %v4769 = vpack.c.bf16 %v4753, %v4753
    %v4778 = vunpack.c.l.b16 %v4762
    %v4779 = vunpack.c.l.b16 %v4763
    %v4780 = vunpack.c.l.b16 %v4764
    %v4781 = vunpack.c.l.b16 %v4765
    %v4782 = vunpack.c.l.b16 %v4766
    %v4783 = vunpack.c.l.b16 %v4767
    %v4784 = vunpack.c.l.b16 %v4768
    %v4785 = vunpack.c.l.b16 %v4769
    %v4786 = vpack.c.b16 %v4779, %v4778
    %v4787 = vpack.c.b16 %v4781, %v4780
    %v4788 = vpack.c.b16 %v4783, %v4782
    %v4789 = vpack.c.b16 %v4785, %v4784
    %v4798 = vunpack.c.l.b16 %v4754
    %v4799 = vunpack.c.l.b16 %v4755
    %v4800 = vunpack.c.l.b16 %v4756
    %v4801 = vunpack.c.l.b16 %v4757
    %v4802 = vunpack.c.l.b16 %v4758
    %v4803 = vunpack.c.l.b16 %v4759
    %v4804 = vunpack.c.l.b16 %v4760
    %v4805 = vunpack.c.l.b16 %v4761
    %v4806 = vpack.c.b16 %v4799, %v4798
    %v4807 = vpack.c.b16 %v4801, %v4800
    %v4808 = vpack.c.b16 %v4803, %v4802
    %v4809 = vpack.c.b16 %v4805, %v4804
    %v4815 = vsel %vm2469, %v4786, 0
    %v4818 = vsel %vm2469, %v4787, 0
    %v4821 = vsel %vm2469, %v4788, 0
    %v4824 = vsel %vm2469, %v4789, 0
    %4826 = vmatpush.bf16.msra.mxu0 0
    %4827 = vmatpush.bf16.msra.mxu0 0
    %4828 = vmatpush.bf16.msra.mxu0 0
    %4829 = vmatpush.bf16.msra.mxu0 0
    %4830 = vmatpush.bf16.msra.mxu0 %v4809
    %4831 = vmatpush.bf16.msra.mxu0 %v4808
    %4832 = vmatpush.bf16.msra.mxu0 %v4807
    %4833 = vmatpush.bf16.msra.mxu0 %v4806
    %4834 = vmatmul.bf16.gmra.mxu0 %v4815
    %v4835 = vpop.f32.mrf.mxu0
    %v4836 = vadd.f32 0.0, %v4835
    %v4837 = vpop.f32.mrf.mxu0
    %4838 = vmatmul.bf16.gmra.mxu0 %v4818
    %v4839 = vpop.f32.mrf.mxu0
    %v4840 = vpop.f32.mrf.mxu0
    %4841 = vmatmul.bf16.gmra.mxu0 %v4821
    %v4842 = vpop.f32.mrf.mxu0
    %v4843 = vadd.f32 0.0, %v4842
    %v4844 = vpop.f32.mrf.mxu0
    %4845 = vmatmul.bf16.gmra.mxu0 %v4824
    %v4846 = vpop.f32.mrf.mxu0
    %v4847 = vpop.f32.mrf.mxu0
    %4848 = vdwg.mxu0
    %v4849 = vperm.slane %v22, 7
    %v4850 = vadd.f32 %v4836, %v4849
    %v4851 = vadd.f32 %v4843, %v4849
    %v4852 = vadd.f32 %v4138, %v4850
    %v4853 = vadd.f32 %v4142, %v4851
    %v4856 = vrot.slane %v4853, 7
    %vm4857 = vcmask 1041409
    %v4858 = vsel %vm4857, %v4856, %v4852
    %vm4860 = vcmask 254976
    %v4861 = vsel %vm4860, %v4858, 0.0
    %4862 = vadd.xlane.f32.xlu0 %v4861
    %v4863 = vpop.xlane.xlu0 %4862
    %v4864 = vmul.f32 %v4863, %v203
    %v4866 = vrot.slane %v4864, 1
    %v4869 = vsub.f32 %v4852, %v4864
    %v4870 = vsub.f32 %v4853, %v4866
    %v4871 = vmul.f32 %v4869, %v4869
    %v4872 = vmul.f32 %v4870, %v4870
    %v4875 = vrot.slane %v4872, 7
    %v4876 = vsel %vm4857, %v4875, %v4871
    %v4878 = vsel %vm4860, %v4876, 0.0
    %4879 = vadd.xlane.f32.xlu0 %v4878
    %v4880 = vpop.xlane.xlu0 %4879
    %v4881 = vmul.f32 %v4880, %v203
    %v4882 = vadd.f32 %v4881, 1e-05
    %v4883 = vrsqrt.pop %v4882
    %v4884 = vmul.f32 %v4883, %v4882
    %v4885 = vmul.f32 %v4884, %v4883
    %v4886 = vmul.f32 0.5, %v4885
    %v4887 = vsub.f32 1.5, %v4886
    %v4888 = vmul.f32 %v4883, %v4887
    %vm4889 = vweird.f32 %v4882
    %vm4890 = vweird.f32 %v4883
    %vm4891 = vmor %vm4889, %vm4890
    %v4892 = vsel %vm4891, %v4883, %v4888
    %v4894 = vrot.slane %v4892, 1
    %v4897 = vmul.f32 %v4869, %v4892
    %v4898 = vmul.f32 %v4870, %v4894
    %v4899 = vperm.slane %v16, 2
    %v4900 = vmul.f32 %v4897, %v4899
    %v4901 = vmul.f32 %v4898, %v4899
    %v4902 = vperm.slane %v16, 3
    %v4903 = vadd.f32 %v4900, %v4902
    %v4904 = vadd.f32 %v4901, %v4902
    %v4905 = vld [vmem:[%s1 + $0xb8] sm:$0xf]
    %v4906 = vld [vmem:[%s1 + $0xbc] sm:$0xf]
    %v4907 = vld [vmem:[%s1 + $0xc0] sm:$0xf]
    %v4908 = vld [vmem:[%s1 + $0xc4] sm:$0xf]
    %v4909 = vpack.c.bf16 %v4903, %v4903
    %v4910 = vpack.c.bf16 %v4904, %v4904
    %v4911 = vperm.slane %v16, 4
    %v4914 = vunpack.c.l.b16 %v4909
    %v4915 = vunpack.c.l.b16 %v4910
    %v4916 = vrot.slane %v4915, 7
    %v4917 = vsel %vm4857, %v4916, %v4914
    %v4918 = vpack.c.b16 %v4917, %v4917
    %v4923 = vunpack.c.l.b16 %v4905
    %v4924 = vunpack.c.l.b16 %v4906
    %v4925 = vunpack.c.l.b16 %v4907
    %v4926 = vunpack.c.l.b16 %v4908
    %v4927 = vpack.c.b16 %v4924, %v4923
    %v4928 = vpack.c.b16 %v4926, %v4925
    %v4932 = vsel %vm172, %v4918, 0
    %4934 = vmatpush.bf16.msra.mxu0 0
    %4935 = vmatpush.bf16.msra.mxu0 0
    %4936 = vmatpush.bf16.msra.mxu0 0
    %4937 = vmatpush.bf16.msra.mxu0 0
    %4938 = vmatpush.bf16.msra.mxu0 0
    %4939 = vmatpush.bf16.msra.mxu0 0
    %4940 = vmatpush.bf16.msra.mxu0 %v4928
    %4941 = vmatpush.bf16.msra.mxu0 %v4927
    %4942 = vmatmul.bf16.gmra.mxu0 %v4932
    %v4943 = vpop.f32.mrf.mxu0
    %v4944 = vadd.f32 %v4911, %v4943
    %v4945 = vpop.f32.mrf.mxu0
    %4946 = vdwg.mxu0
    %vm4947 = vcmask 74752
    %4948 = vst.msk [vmem:[#allocation2] sm:$0x3] %vm4947, %v4944
    // Predicated region
    $region14: #{vit_forward.1} parent=1 // pred_check
      _
    $region15: #{vit_forward.1} parent=1 // pred_check_branch
      %4950 = sbr.rel (0) target = $region17
    $region16: #{vit_forward.1} parent=1 // pred_region
      %4952 = vsyncadd [#allocation3], 0
      %s4954 = sshll.u32 [#allocation2], 4
      %s4955 = int_to_ptr.vmem [resolvable:$true] %s4954
      %s4956 = sshll.u32 %s3, 4
      %s4957 = int_to_ptr.hbm [resolvable:$true] %s4956
      %4959 = dma.vmem_to_hbm [thread:$0]  %s4955, 32, %s4957, [#allocation3]
    $region17: #{vit_forward.1} parent=1 // pred_fallthru
      _
    // Predicated region
    $region18: #{vit_forward.1} parent=1 // pred_check
      _
    $region19: #{vit_forward.1} parent=1 // pred_check_branch
      %4961 = sbr.rel (0) target = $region21
    $region20: #{vit_forward.1} parent=1 // pred_region
      %4963 = dma.done [#allocation3], 32
    $region21: #{vit_forward.1} parent=1 // pred_fallthru
      _
    %4964 = vsyncpa [#allocation3], 1

</llo_original>
